<compile_context>
chip_gen: v7x
topology: tpu7x:2x2x1
jax: 0.10.0
libtpu: 0.0.40
codegen_flags: <defaults>
</compile_context>

<pallas_src>
import jax
import jax.numpy as jnp
from jax.experimental import pallas as pl
from jax.experimental.pallas import tpu as pltpu

_VMEM = pl.BlockSpec(memory_space=pltpu.MemorySpace.VMEM)


def _round_up(x, m):
    return (x + m - 1) // m * m


def _select_hw():
    """Per-generation matmul tile preferences and VMEM budget."""
    try:
        kind = jax.devices()[0].device_kind.lower()
    except Exception:
        kind = ""
    if "v5" in kind:                 # v5e/v5p: 4x128^2 MXU -> 128-wide N, long K panels
        return 128, 128, 512, 96 << 20, False
    if "v6" in kind:                 # v6e: 2x256^2 MXU, 128 MiB VMEM
        return 256, 256, 256, 96 << 20, False
    if "v7" in kind or "7x" in kind:  # v7x: 2x256^2 MXU, 64 MiB VMEM, 2 TCs
        return 256, 256, 256, 48 << 20, True
    return 256, 256, 256, None, False


_TM_P, _TN_P, _TK_P, _VMEM_LIMIT, _IS_V7X = _select_hw()


# ------------------------ fused (BN/ReLU) conv matmul ------------------------

def fused_matmul(a, b_p, in_vecs=None, out_vecs=None):
    """o = epi( pro(a) @ b_p ) with
         pro(a) = relu(a * in_scale + in_shift)   (iff in_vecs is not None)
         epi(r) = relu(r * out_scale + out_shift) (iff out_vecs is not None)
    a: (m, k) activations, b_p: (kp, np_) bf16 pre-padded weight matrix.
    Returns (m, np_) f32; accumulation is f32 directly in the output block."""
    m, k = a.shape
    kp, np_ = b_p.shape

    a = a.astype(jnp.bfloat16)                       # halve A-stream HBM bytes
    if kp != k:
        a = jnp.pad(a, ((0, 0), (0, kp - k)))

    # M tiling: single full block if it fits the preferred tile, else tile+pad.
    if m <= _TM_P:
        tm, mp = m, m
        if _IS_V7X and m >= 16 and m % 16 == 0:
            tm = m // 2                              # give v7x's 2nd TC a tile
    else:
        tm = _TM_P
        mp = _round_up(m, tm)
        if mp != m:
            a = jnp.pad(a, ((0, mp - m), (0, 0)))
    tn = min(_TN_P, np_)
    tk = min(_TK_P, kp)

    prologue = in_vecs is not None
    epilogue = out_vecs is not None

    grid = (mp // tm, np_ // tn, kp // tk)

    def kernel(*refs):
        idx = 0
        a_ref = refs[idx]; idx += 1
        b_ref = refs[idx]; idx += 1
        if prologue:
            is_ref, it_ref = refs[idx], refs[idx + 1]; idx += 2
        if epilogue:
            os_ref, ot_ref = refs[idx], refs[idx + 1]; idx += 2
        o_ref = refs[idx]

        kk = pl.program_id(2)
        a_blk = a_ref[...]
        if prologue:                       # fused pre-activation BN+ReLU (f32)
            a_blk = jnp.maximum(
                a_blk.astype(jnp.float32) * is_ref[...] + it_ref[...],
                0.0).astype(jnp.bfloat16)
        part = jnp.dot(a_blk, b_ref[...], preferred_element_type=jnp.float32)

        @pl.when(kk == 0)
        def _():
            o_ref[...] = part

        @pl.when(kk > 0)
        def _():
            o_ref[...] += part

        if epilogue:                       # fused post-conv BN+ReLU
            @pl.when(kk == pl.num_programs(2) - 1)
            def _():
                o_ref[...] = jnp.maximum(
                    o_ref[...] * os_ref[...] + ot_ref[...], 0.0)

    in_specs = [
        pl.BlockSpec((tm, tk), lambda i, j, kk: (i, kk)),
        pl.BlockSpec((tk, tn), lambda i, j, kk: (kk, j)),
    ]
    args = [a, b_p]
    if prologue:
        in_specs += [pl.BlockSpec((1, tk), lambda i, j, kk: (0, kk))] * 2
        args += [in_vecs[0], in_vecs[1]]
    if epilogue:
        in_specs += [pl.BlockSpec((1, tn), lambda i, j, kk: (0, j))] * 2
        args += [out_vecs[0], out_vecs[1]]

    cp_kwargs = dict(dimension_semantics=("parallel", "parallel", "arbitrary"))
    if _VMEM_LIMIT is not None:
        cp_kwargs["vmem_limit_bytes"] = _VMEM_LIMIT

    out = pl.pallas_call(
        kernel,
        out_shape=jax.ShapeDtypeStruct((mp, np_), jnp.float32),
        grid_spec=pltpu.PrefetchScalarGridSpec(
            num_scalar_prefetch=0,
            grid=grid,
            in_specs=in_specs,
            out_specs=pl.BlockSpec((tm, tn), lambda i, j, kk: (i, j)),
        ),
        compiler_params=pltpu.CompilerParams(**cp_kwargs),
    )(*args)
    return out[:m] if mp != m else out


# ------------------------------ conv glue ------------------------------------

def conv2d(x, w_mat, k, s, p, cout, in_vecs=None, out_vecs=None):
    """NHWC conv (bias=False) as im2col + fused matmul.
    in_vecs : fused BN+ReLU on the conv *input* (pre-activation, per K column).
    out_vecs: fused BN+ReLU on the conv *output* (per N column)."""
    n, h, w, _ = x.shape
    x = x.astype(jnp.bfloat16)
    if k == 1 and p == 0:
        ho, wo = (h - 1) // s + 1, (w - 1) // s + 1
        xs = x if s == 1 else x[:, ::s, ::s, :]
        patches = xs.reshape(n * ho * wo, -1)
    else:
        # TODO(synk): replace this XLA im2col (k*k shifted views) with in-kernel
        # shifted-window taps to avoid the k^2 HBM expansion at large sizes.
        xp = jnp.pad(x, ((0, 0), (p, p), (p, p), (0, 0)))
        ho = (h + 2 * p - k) // s + 1
        wo = (w + 2 * p - k) // s + 1
        cols = [xp[:, dy:dy + s * ho:s, dx:dx + s * wo:s, :]
                for dy in range(k) for dx in range(k)]
        patches = jnp.concatenate(cols, axis=-1).reshape(n * ho * wo, -1)
    y = fused_matmul(patches, w_mat, in_vecs, out_vecs)
    return y[:, :cout].reshape(n, ho, wo, cout)


# ------------------------------- pooling --------------------------------------

def _pool_reduce(slabs, use_max):
    """Reduce (max or mean) a list of equal-shape (n,ho,wo,c) slabs in one
    gridded Pallas call, using a lane-dense (multiple-of-128 last dim) layout."""
    kk = len(slabs)
    n, ho, wo, c = slabs[0].shape
    stacked = jnp.stack(slabs, 0)
    if (wo * c) % 128 == 0:
        shaped = stacked.reshape(kk, n * ho, wo * c)
    elif (ho * wo * c) % 128 == 0:
        shaped = stacked.reshape(kk, n, ho * wo * c)
    else:
        shaped = stacked.reshape(kk, n * ho * wo, c)
    rows, lanes = shaped.shape[1], shaped.shape[2]
    rb = rows if rows <= 256 else 256
    rows_p = _round_up(rows, rb)
    if rows_p != rows:
        pad_val = -jnp.inf if use_max else 0.0
        shaped = jnp.pad(shaped, ((0, 0), (0, rows_p - rows), (0, 0)),
                         constant_values=pad_val)

    def kernel(x_ref, o_ref):
        v = x_ref[...]
        o_ref[...] = jnp.max(v, axis=0) if use_max else jnp.mean(v, axis=0)

    out = pl.pallas_call(
        kernel,
        out_shape=jax.ShapeDtypeStruct((rows_p, lanes), jnp.float32),
        grid_spec=pltpu.PrefetchScalarGridSpec(
            num_scalar_prefetch=0,
            grid=(rows_p // rb,),
            in_specs=[pl.BlockSpec((kk, rb, lanes), lambda i: (0, i, 0))],
            out_specs=pl.BlockSpec((rb, lanes), lambda i: (i, 0)),
        ),
        compiler_params=pltpu.CompilerParams(dimension_semantics=("parallel",)),
    )(shaped)
    if rows_p != rows:
        out = out[:rows]
    return out.reshape(n, ho, wo, c)


def maxpool_3x3_s2_p1(x):
    n, h, w, c = x.shape
    xp = jnp.pad(x, ((0, 0), (1, 1), (1, 1), (0, 0)),
                 constant_values=-jnp.inf)
    ho = (h + 2 - 3) // 2 + 1
    wo = (w + 2 - 3) // 2 + 1
    slabs = [xp[:, dy:dy + 2 * ho:2, dx:dx + 2 * wo:2, :]
             for dy in range(3) for dx in range(3)]
    return _pool_reduce(slabs, use_max=True)


def avgpool_2x2_s2(x):
    n, h, w, c = x.shape
    ho, wo = h // 2, w // 2
    slabs = [x[:, dy:dy + 2 * ho:2, dx:dx + 2 * wo:2, :]
             for dy in range(2) for dx in range(2)]
    return _pool_reduce(slabs, use_max=False)


# ------------------- fused norm5 + relu + GAP + classifier --------------------

def classifier_head(x, head):
    """F.relu(BN(x)) -> adaptive_avg_pool2d(1) -> Linear, in one kernel.
    FC weight/bias are pre-transposed / pre-padded (classes -> 128 lanes)."""
    n, h, w, c = x.shape
    x3 = jnp.transpose(x.reshape(n, h * w, c), (1, 0, 2))      # (HW, N, C)
    inv_hw = 1.0 / float(h * w)
    w_p, b_p = head["fc_w"], head["fc_b"]
    s5, t5 = head["scale"], head["shift"]
    ncls_p = w_p.shape[1]
    # TODO(synk): grid over HW rows for large feature maps; single block here.

    def kernel(x_ref, s_ref, t_ref, w_ref, b_ref, out_ref, temp_ref):
        y = jnp.maximum(x_ref[...].astype(jnp.float32) * s_ref[...] + t_ref[...],
                        0.0)
        temp = jnp.sum(y, axis=0) * inv_hw                     # (N, C) global avg
        temp_ref[...] = temp
        out_ref[...] = (jnp.dot(temp.astype(jnp.bfloat16), w_ref[...],
                                preferred_element_type=jnp.float32)
                        + b_ref[...])

    out, temp = pl.pallas_call(
        kernel,
        out_shape=(jax.ShapeDtypeStruct((n, ncls_p), jnp.float32),
                   jax.ShapeDtypeStruct((n, c), jnp.float32)),
        in_specs=[_VMEM] * 5,
        out_specs=(_VMEM, _VMEM),
    )(x3.astype(jnp.bfloat16), s5, t5, w_p, b_p)
    return out, temp


# --------------------------- parameter construction ---------------------------

def init_params(key, growth_rate=8, block_config=(2, 2), num_init_features=16,
                bn_size=2, num_classes=10):
    keys = iter(jax.random.split(key, 128))

    def conv_w(cout, cin, k):
        std = (2.0 / (cin * k * k)) ** 0.5            # kaiming_normal_, fan_in
        return jax.random.normal(next(keys), (cout, cin, k, k),
                                 jnp.float32) * std

    def bn(c):
        return dict(gamma=jnp.ones((c,), jnp.float32),
                    beta=jnp.zeros((c,), jnp.float32),
                    mean=jnp.zeros((c,), jnp.float32),
                    var=jnp.ones((c,), jnp.float32))

    params = {"conv0": conv_w(num_init_features, 3, 7),
              "norm0": bn(num_init_features)}
    num_features = num_init_features
    blocks = []
    for i, num_layers in enumerate(block_config):
        layers = []
        for j in range(num_layers):
            cin = num_features + j * growth_rate
            layers.append(dict(
                norm1=bn(cin),
                conv1=conv_w(bn_size * growth_rate, cin, 1),
                norm2=bn(bn_size * growth_rate),
                conv2=conv_w(growth_rate, bn_size * growth_rate, 3),
            ))
        block = dict(layers=layers, transition=None)
        num_features += num_layers * growth_rate
        if i != len(block_config) - 1:
            block["transition"] = dict(
                norm=bn(num_features),
                conv=conv_w(num_features // 2, num_features, 1))
            num_features //= 2
        blocks.append(block)
    params["blocks"] = blocks
    params["norm5"] = bn(num_features)
    lim = 1.0 / (num_features ** 0.5)
    # fc weight stored pre-transposed: (in_features, num_classes)
    params["fc_w_t"] = jax.random.uniform(next(keys),
                                          (num_features, num_classes),
                                          jnp.float32, -lim, lim)
    params["fc_b"] = jnp.zeros((num_classes,), jnp.float32)
    return params


# ------------------- packing (one-time, outside the jitted fwd) ---------------

def _bn_scale_shift(bn, eps=1e-5):
    scale = bn["gamma"] / jnp.sqrt(bn["var"] + eps)
    shift = bn["beta"] - bn["mean"] * scale
    return scale, shift


def _pad_k(dim):
    return dim if dim <= _TK_P else _round_up(dim, _TK_P)


def _pad_n(dim):
    d128 = _round_up(dim, 128)
    return d128 if d128 <= _TN_P else _round_up(dim, _TN_P)


def _pack_conv(w_oihw):
    """OIHW f32 -> bf16 matmul matrix ((k*k*cin) tile-padded, cout 128-padded),
    rows ordered (dy, dx, cin) to match the im2col patch layout."""
    cout, cin, k, _ = w_oihw.shape
    w2 = jnp.transpose(w_oihw, (2, 3, 1, 0)).reshape(k * k * cin, cout)
    kp, np_ = _pad_k(k * k * cin), _pad_n(cout)
    return jnp.pad(w2.astype(jnp.bfloat16),
                   ((0, kp - k * k * cin), (0, np_ - cout)))


def _pack_bn(bn, padded_len, eps=1e-5):
    """BN -> (scale, shift) row vectors zero-padded to the matmul dim."""
    scale, shift = _bn_scale_shift(bn, eps)
    pad = padded_len - scale.shape[0]
    return (jnp.pad(scale, (0, pad)).reshape(1, -1).astype(jnp.float32),
            jnp.pad(shift, (0, pad)).reshape(1, -1).astype(jnp.float32))


def preprocess_params(raw, eps=1e-5):
    """Pack raw PyTorch-style params into kernel-ready arrays (packed) plus a
    static meta description (Python ints only, captured by closure)."""
    packed = {"conv0_w": _pack_conv(raw["conv0"])}
    packed["conv0_out"] = _pack_bn(raw["norm0"], packed["conv0_w"].shape[1], eps)
    meta = {"conv0": dict(k=7, s=2, p=3, cout=int(raw["conv0"].shape[0])),
            "blocks": [], "num_classes": int(raw["fc_b"].shape[0])}

    pblocks = []
    for blk in raw["blocks"]:
        players, mlayers = [], []
        for lp in blk["layers"]:
            w1, w2 = _pack_conv(lp["conv1"]), _pack_conv(lp["conv2"])
            players.append(dict(
                w1=w1,
                in1=_pack_bn(lp["norm1"], w1.shape[0], eps),
                out1=_pack_bn(lp["norm2"], w1.shape[1], eps),
                w2=w2))
            mlayers.append(dict(c1=int(lp["conv1"].shape[0]),
                                c2=int(lp["conv2"].shape[0])))
        ptrans, mtrans = None, None
        if blk["transition"] is not None:
            tw = _pack_conv(blk["transition"]["conv"])
            ptrans = dict(w=tw,
                          inp=_pack_bn(blk["transition"]["norm"],
                                       tw.shape[0], eps))
            mtrans = int(blk["transition"]["conv"].shape[0])
        pblocks.append(dict(layers=players, trans=ptrans))
        meta["blocks"].append(dict(layers=mlayers, trans_cout=mtrans))
    packed["blocks"] = pblocks

    s5, t5 = _bn_scale_shift(raw["norm5"], eps)
    c = int(s5.shape[0])
    ncls = int(raw["fc_b"].shape[0])
    ncls_p = _round_up(ncls, 128)
    packed["head"] = dict(
        scale=s5.reshape(1, 1, c).astype(jnp.float32),
        shift=t5.reshape(1, 1, c).astype(jnp.float32),
        fc_w=jnp.pad(raw["fc_w_t"].astype(jnp.bfloat16),
                     ((0, 0), (0, ncls_p - ncls))),
        fc_b=jnp.pad(raw["fc_b"].astype(jnp.float32),
                     (0, ncls_p - ncls)).reshape(1, -1))
    return packed, meta


# ---------------------------------- forward -----------------------------------

def make_forward(meta):
    def forward(packed, x_nchw):
        x = jnp.transpose(x_nchw, (0, 2, 3, 1)).astype(jnp.float32)  # NCHW->NHWC

        # stem: conv0 7x7/s2/p3 (+ fused norm0/relu0 epilogue) -> maxpool 3x3/s2/p1
        m0 = meta["conv0"]
        x = conv2d(x, packed["conv0_w"], k=m0["k"], s=m0["s"], p=m0["p"],
                   cout=m0["cout"], out_vecs=packed["conv0_out"])
        x = maxpool_3x3_s2_p1(x)

        for pblk, mblk in zip(packed["blocks"], meta["blocks"]):
            for lp, lm in zip(pblk["layers"], mblk["layers"]):
                # norm1+relu1 fused as conv1 prologue, norm2+relu2 fused as
                # conv1 epilogue; the 3x3 conv then sees already-activated
                # inputs and plain zero padding (exact PyTorch semantics).
                y = conv2d(x, lp["w1"], k=1, s=1, p=0, cout=lm["c1"],
                           in_vecs=lp["in1"], out_vecs=lp["out1"])
                y = conv2d(y, lp["w2"], k=3, s=1, p=1, cout=lm["c2"])
                # drop_rate == 0 -> F.dropout is a no-op.
                # TODO(synk): replace the O(L^2) torch.cat-style concat with a
                # preallocated channel slab + input_output_aliases writes.
                x = jnp.concatenate([x, y], axis=-1)
            if pblk["trans"] is not None:
                x = conv2d(x, pblk["trans"]["w"], k=1, s=1, p=0,
                           cout=mblk["trans_cout"],
                           in_vecs=pblk["trans"]["inp"])
                x = avgpool_2x2_s2(x)

        # norm5 + relu + global avg pool + classifier fused in one kernel
        out_p, temp = classifier_head(x, packed["head"])
        return out_p[:, :meta["num_classes"]], temp

    return forward


# ----------------------------------- main --------------------------------------

if __name__ == "__main__":
    key = jax.random.PRNGKey(0)
    kx, kparam = jax.random.split(key)

    # small DenseNet-BC config: growth=8, blocks=(2,2), init feats=16, bn_size=2
    raw = init_params(kparam, growth_rate=8, block_config=(2, 2),
                      num_init_features=16, bn_size=2, num_classes=10)
    packed, meta = preprocess_params(raw)

    x = jax.random.normal(kx, (2, 3, 32, 32), jnp.float32)   # NCHW like PyTorch

    fwd = jax.jit(make_forward(meta))
    out, temp = fwd(packed, x)
    out = jax.block_until_ready(out)
    temp = jax.block_until_ready(temp)

    assert out.shape == (2, 10), out.shape
    assert temp.shape == (2, 32), temp.shape
    assert bool(jnp.all(jnp.isfinite(out))) and bool(jnp.all(jnp.isfinite(temp)))
    assert bool(jnp.all(temp >= 0.0))   # post-ReLU global average pool
    print("KERNEL_OK")
</pallas_src>

<mosaic_0001>
module attributes {stable_mosaic.version = 11 : i64} {
  func.func @kernel(%arg0: i32, %arg1: i32, %arg2: i32, %arg3: memref<256x147xbf16, #tpu.memory_space<vmem>>, %arg4: memref<147x128xbf16, #tpu.memory_space<vmem>>, %arg5: memref<1x128xf32, #tpu.memory_space<vmem>>, %arg6: memref<1x128xf32, #tpu.memory_space<vmem>>, %arg7: memref<256x128xf32, #tpu.memory_space<vmem>>) attributes {dimension_semantics = [#tpu.dimension_semantics<parallel>, #tpu.dimension_semantics<parallel>, #tpu.dimension_semantics<arbitrary>], iteration_bounds = array<i64: 2, 1, 1>, scalar_prefetch = 0 : i64, scratch_operands = 0 : i64, tpu.core_type = #tpu.core_type<tc>, window_params = [{transform_indices = @transform_0, window_bounds = array<i64: 256, 147>}, {transform_indices = @transform_1, window_bounds = array<i64: 147, 128>}, {transform_indices = @transform_2, window_bounds = array<i64: 1, 128>}, {transform_indices = @transform_3, window_bounds = array<i64: 1, 128>}, {transform_indices = @transform_4, window_bounds = array<i64: 256, 128>}]} {
    %c0 = arith.constant 0 : index
    %c0_0 = arith.constant 0 : index
    %0 = vector.load %arg3[%c0, %c0_0] : memref<256x147xbf16, #tpu.memory_space<vmem>>, vector<256x147xbf16>
    %c0_1 = arith.constant 0 : index
    %c0_2 = arith.constant 0 : index
    %1 = vector.load %arg4[%c0_1, %c0_2] : memref<147x128xbf16, #tpu.memory_space<vmem>>, vector<147x128xbf16>
    %cst = arith.constant dense<0.000000e+00> : vector<256x128xf32>
    %2 = tpu.matmul %0, %1, %cst {dimension_numbers = #tpu.dot_dimension_numbers<[1], [0], [0], [1], [0, 0, 1, 1], [], []>} : vector<256x147xbf16>, vector<147x128xbf16>, vector<256x128xf32> -> vector<256x128xf32>
    %c0_i32 = arith.constant 0 : i32
    %3 = arith.cmpi eq, %arg2, %c0_i32 : i32
    %4 = arith.extui %3 : i1 to i32
    %c0_i32_3 = arith.constant 0 : i32
    %5 = arith.cmpi ne, %4, %c0_i32_3 : i32
    scf.if %5 {
      %c0_8 = arith.constant 0 : index
      %c0_9 = arith.constant 0 : index
      %12 = vector.load %arg7[%c0_8, %c0_9] : memref<256x128xf32, #tpu.memory_space<vmem>>, vector<256x128xf32>
      tpu.vector_store %arg7[%c0_8, %c0_9], %2 {strides = array<i32>} : memref<256x128xf32, #tpu.memory_space<vmem>>, vector<256x128xf32>,
    } else {
    }
    %c0_i32_4 = arith.constant 0 : i32
    %6 = arith.cmpi sgt, %arg2, %c0_i32_4 : i32
    %7 = arith.extui %6 : i1 to i32
    %c0_i32_5 = arith.constant 0 : i32
    %8 = arith.cmpi ne, %7, %c0_i32_5 : i32
    scf.if %8 {
      %c0_8 = arith.constant 0 : index
      %c0_9 = arith.constant 0 : index
      %12 = vector.load %arg7[%c0_8, %c0_9] : memref<256x128xf32, #tpu.memory_space<vmem>>, vector<256x128xf32>
      %13 = arith.addf %12, %2 : vector<256x128xf32>
      %c0_10 = arith.constant 0 : index
      %c0_11 = arith.constant 0 : index
      %14 = vector.load %arg7[%c0_10, %c0_11] : memref<256x128xf32, #tpu.memory_space<vmem>>, vector<256x128xf32>
      tpu.vector_store %arg7[%c0_10, %c0_11], %13 {strides = array<i32>} : memref<256x128xf32, #tpu.memory_space<vmem>>, vector<256x128xf32>,
    } else {
    }
    %c0_i32_6 = arith.constant 0 : i32
    %9 = arith.cmpi eq, %arg2, %c0_i32_6 : i32
    %10 = arith.extui %9 : i1 to i32
    %c0_i32_7 = arith.constant 0 : i32
    %11 = arith.cmpi ne, %10, %c0_i32_7 : i32
    scf.if %11 {
      %c0_8 = arith.constant 0 : index
      %c0_9 = arith.constant 0 : index
      %12 = vector.load %arg7[%c0_8, %c0_9] : memref<256x128xf32, #tpu.memory_space<vmem>>, vector<256x128xf32>
      %c0_10 = arith.constant 0 : index
      %c0_11 = arith.constant 0 : index
      %13 = vector.load %arg5[%c0_10, %c0_11] : memref<1x128xf32, #tpu.memory_space<vmem>>, vector<1x128xf32>
      %14 = vector.broadcast %13 : vector<1x128xf32> to vector<256x128xf32>
      %15 = arith.mulf %12, %14 : vector<256x128xf32>
      %c0_12 = arith.constant 0 : index
      %c0_13 = arith.constant 0 : index
      %16 = vector.load %arg6[%c0_12, %c0_13] : memref<1x128xf32, #tpu.memory_space<vmem>>, vector<1x128xf32>
      %17 = vector.broadcast %16 : vector<1x128xf32> to vector<256x128xf32>
      %18 = arith.addf %15, %17 : vector<256x128xf32>
      %cst_14 = arith.constant 0.000000e+00 : f32
      %19 = vector.broadcast %cst_14 : f32 to vector<256x128xf32>
      %20 = arith.maximumf %18, %19 : vector<256x128xf32>
      %c0_15 = arith.constant 0 : index
      %c0_16 = arith.constant 0 : index
      %21 = vector.load %arg7[%c0_15, %c0_16] : memref<256x128xf32, #tpu.memory_space<vmem>>, vector<256x128xf32>
      tpu.vector_store %arg7[%c0_15, %c0_16], %20 {strides = array<i32>} : memref<256x128xf32, #tpu.memory_space<vmem>>, vector<256x128xf32>,
    } else {
    }
    return
  }
  func.func @transform_0(%arg0: i32, %arg1: i32, %arg2: i32) -> (i32, i32) {
    %c0_i32 = arith.constant 0 : i32
    return %arg0, %arg2 : i32, i32
  }
  func.func @transform_1(%arg0: i32, %arg1: i32, %arg2: i32) -> (i32, i32) {
    %c0_i32 = arith.constant 0 : i32
    return %arg2, %arg1 : i32, i32
  }
  func.func @transform_2(%arg0: i32, %arg1: i32, %arg2: i32) -> (i32, i32) {
    %c0_i32 = arith.constant 0 : i32
    %c0_i32_0 = arith.constant 0 : i32
    return %c0_i32, %arg1 : i32, i32
  }
  func.func @transform_3(%arg0: i32, %arg1: i32, %arg2: i32) -> (i32, i32) {
    %c0_i32 = arith.constant 0 : i32
    %c0_i32_0 = arith.constant 0 : i32
    return %c0_i32, %arg1 : i32, i32
  }
  func.func @transform_4(%arg0: i32, %arg1: i32, %arg2: i32) -> (i32, i32) {
    %c0_i32 = arith.constant 0 : i32
    return %arg0, %arg1 : i32, i32
  }
}

module attributes {stable_mosaic.version = 11 : i64} {
  func.func @kernel(%arg0: i32, %arg1: i32, %arg2: i32, %arg3: memref<128x16xbf16, #tpu.memory_space<vmem>>, %arg4: memref<16x128xbf16, #tpu.memory_space<vmem>>, %arg5: memref<1x16xf32, #tpu.memory_space<vmem>>, %arg6: memref<1x16xf32, #tpu.memory_space<vmem>>, %arg7: memref<1x128xf32, #tpu.memory_space<vmem>>, %arg8: memref<1x128xf32, #tpu.memory_space<vmem>>, %arg9: memref<128x128xf32, #tpu.memory_space<vmem>>) attributes {dimension_semantics = [#tpu.dimension_semantics<parallel>, #tpu.dimension_semantics<parallel>, #tpu.dimension_semantics<arbitrary>], iteration_bounds = array<i64: 1, 1, 1>, scalar_prefetch = 0 : i64, scratch_operands = 0 : i64, tpu.core_type = #tpu.core_type<tc>, window_params = [{transform_indices = @transform_0, window_bounds = array<i64: 128, 16>}, {transform_indices = @transform_1, window_bounds = array<i64: 16, 128>}, {transform_indices = @transform_2, window_bounds = array<i64: 1, 16>}, {transform_indices = @transform_3, window_bounds = array<i64: 1, 16>}, {transform_indices = @transform_4, window_bounds = array<i64: 1, 128>}, {transform_indices = @transform_5, window_bounds = array<i64: 1, 128>}, {transform_indices = @transform_6, window_bounds = array<i64: 128, 128>}]} {
    %c0 = arith.constant 0 : index
    %c0_0 = arith.constant 0 : index
    %0 = vector.load %arg3[%c0, %c0_0] : memref<128x16xbf16, #tpu.memory_space<vmem>>, vector<128x16xbf16>
    %1 = arith.extf %0 : vector<128x16xbf16> to vector<128x16xf32>
    %c0_1 = arith.constant 0 : index
    %c0_2 = arith.constant 0 : index
    %2 = vector.load %arg5[%c0_1, %c0_2] : memref<1x16xf32, #tpu.memory_space<vmem>>, vector<1x16xf32>
    %3 = vector.broadcast %2 : vector<1x16xf32> to vector<128x16xf32>
    %4 = arith.mulf %1, %3 : vector<128x16xf32>
    %c0_3 = arith.constant 0 : index
    %c0_4 = arith.constant 0 : index
    %5 = vector.load %arg6[%c0_3, %c0_4] : memref<1x16xf32, #tpu.memory_space<vmem>>, vector<1x16xf32>
    %6 = vector.broadcast %5 : vector<1x16xf32> to vector<128x16xf32>
    %7 = arith.addf %4, %6 : vector<128x16xf32>
    %cst = arith.constant 0.000000e+00 : f32
    %8 = vector.broadcast %cst : f32 to vector<128x16xf32>
    %9 = arith.maximumf %7, %8 : vector<128x16xf32>
    %10 = arith.truncf %9 : vector<128x16xf32> to vector<128x16xbf16>
    %c0_5 = arith.constant 0 : index
    %c0_6 = arith.constant 0 : index
    %11 = vector.load %arg4[%c0_5, %c0_6] : memref<16x128xbf16, #tpu.memory_space<vmem>>, vector<16x128xbf16>
    %cst_7 = arith.constant dense<0.000000e+00> : vector<128x128xf32>
    %12 = tpu.matmul %10, %11, %cst_7 {dimension_numbers = #tpu.dot_dimension_numbers<[1], [0], [0], [1], [0, 0, 1, 1], [], []>} : vector<128x16xbf16>, vector<16x128xbf16>, vector<128x128xf32> -> vector<128x128xf32>
    %c0_i32 = arith.constant 0 : i32
    %13 = arith.cmpi eq, %arg2, %c0_i32 : i32
    %14 = arith.extui %13 : i1 to i32
    %c0_i32_8 = arith.constant 0 : i32
    %15 = arith.cmpi ne, %14, %c0_i32_8 : i32
    scf.if %15 {
      %c0_13 = arith.constant 0 : index
      %c0_14 = arith.constant 0 : index
      %22 = vector.load %arg9[%c0_13, %c0_14] : memref<128x128xf32, #tpu.memory_space<vmem>>, vector<128x128xf32>
      tpu.vector_store %arg9[%c0_13, %c0_14], %12 {strides = array<i32>} : memref<128x128xf32, #tpu.memory_space<vmem>>, vector<128x128xf32>,
    } else {
    }
    %c0_i32_9 = arith.constant 0 : i32
    %16 = arith.cmpi sgt, %arg2, %c0_i32_9 : i32
    %17 = arith.extui %16 : i1 to i32
    %c0_i32_10 = arith.constant 0 : i32
    %18 = arith.cmpi ne, %17, %c0_i32_10 : i32
    scf.if %18 {
      %c0_13 = arith.constant 0 : index
      %c0_14 = arith.constant 0 : index
      %22 = vector.load %arg9[%c0_13, %c0_14] : memref<128x128xf32, #tpu.memory_space<vmem>>, vector<128x128xf32>
      %23 = arith.addf %22, %12 : vector<128x128xf32>
      %c0_15 = arith.constant 0 : index
      %c0_16 = arith.constant 0 : index
      %24 = vector.load %arg9[%c0_15, %c0_16] : memref<128x128xf32, #tpu.memory_space<vmem>>, vector<128x128xf32>
      tpu.vector_store %arg9[%c0_15, %c0_16], %23 {strides = array<i32>} : memref<128x128xf32, #tpu.memory_space<vmem>>, vector<128x128xf32>,
    } else {
    }
    %c0_i32_11 = arith.constant 0 : i32
    %19 = arith.cmpi eq, %arg2, %c0_i32_11 : i32
    %20 = arith.extui %19 : i1 to i32
    %c0_i32_12 = arith.constant 0 : i32
    %21 = arith.cmpi ne, %20, %c0_i32_12 : i32
    scf.if %21 {
      %c0_13 = arith.constant 0 : index
      %c0_14 = arith.constant 0 : index
      %22 = vector.load %arg9[%c0_13, %c0_14] : memref<128x128xf32, #tpu.memory_space<vmem>>, vector<128x128xf32>
      %c0_15 = arith.constant 0 : index
      %c0_16 = arith.constant 0 : index
      %23 = vector.load %arg7[%c0_15, %c0_16] : memref<1x128xf32, #tpu.memory_space<vmem>>, vector<1x128xf32>
      %24 = vector.broadcast %23 : vector<1x128xf32> to vector<128x128xf32>
      %25 = arith.mulf %22, %24 : vector<128x128xf32>
      %c0_17 = arith.constant 0 : index
      %c0_18 = arith.constant 0 : index
      %26 = vector.load %arg8[%c0_17, %c0_18] : memref<1x128xf32, #tpu.memory_space<vmem>>, vector<1x128xf32>
      %27 = vector.broadcast %26 : vector<1x128xf32> to vector<128x128xf32>
      %28 = arith.addf %25, %27 : vector<128x128xf32>
      %cst_19 = arith.constant 0.000000e+00 : f32
      %29 = vector.broadcast %cst_19 : f32 to vector<128x128xf32>
      %30 = arith.maximumf %28, %29 : vector<128x128xf32>
      %c0_20 = arith.constant 0 : index
      %c0_21 = arith.constant 0 : index
      %31 = vector.load %arg9[%c0_20, %c0_21] : memref<128x128xf32, #tpu.memory_space<vmem>>, vector<128x128xf32>
      tpu.vector_store %arg9[%c0_20, %c0_21], %30 {strides = array<i32>} : memref<128x128xf32, #tpu.memory_space<vmem>>, vector<128x128xf32>,
    } else {
    }
    return
  }
  func.func @transform_0(%arg0: i32, %arg1: i32, %arg2: i32) -> (i32, i32) {
    %c0_i32 = arith.constant 0 : i32
    return %arg0, %arg2 : i32, i32
  }
  func.func @transform_1(%arg0: i32, %arg1: i32, %arg2: i32) -> (i32, i32) {
    %c0_i32 = arith.constant 0 : i32
    return %arg2, %arg1 : i32, i32
  }
  func.func @transform_2(%arg0: i32, %arg1: i32, %arg2: i32) -> (i32, i32) {
    %c0_i32 = arith.constant 0 : i32
    %c0_i32_0 = arith.constant 0 : i32
    return %c0_i32, %arg2 : i32, i32
  }
  func.func @transform_3(%arg0: i32, %arg1: i32, %arg2: i32) -> (i32, i32) {
    %c0_i32 = arith.constant 0 : i32
    %c0_i32_0 = arith.constant 0 : i32
    return %c0_i32, %arg2 : i32, i32
  }
  func.func @transform_4(%arg0: i32, %arg1: i32, %arg2: i32) -> (i32, i32) {
    %c0_i32 = arith.constant 0 : i32
    %c0_i32_0 = arith.constant 0 : i32
    return %c0_i32, %arg1 : i32, i32
  }
  func.func @transform_5(%arg0: i32, %arg1: i32, %arg2: i32) -> (i32, i32) {
    %c0_i32 = arith.constant 0 : i32
    %c0_i32_0 = arith.constant 0 : i32
    return %c0_i32, %arg1 : i32, i32
  }
  func.func @transform_6(%arg0: i32, %arg1: i32, %arg2: i32) -> (i32, i32) {
    %c0_i32 = arith.constant 0 : i32
    return %arg0, %arg1 : i32, i32
  }
}

module attributes {stable_mosaic.version = 11 : i64} {
  func.func @kernel(%arg0: i32, %arg1: memref<9x16x128xf32, #tpu.memory_space<vmem>>, %arg2: memref<16x128xf32, #tpu.memory_space<vmem>>) attributes {dimension_semantics = [#tpu.dimension_semantics<parallel>], iteration_bounds = array<i64: 1>, scalar_prefetch = 0 : i64, scratch_operands = 0 : i64, tpu.core_type = #tpu.core_type<tc>, window_params = [{transform_indices = @transform_0, window_bounds = array<i64: 9, 16, 128>}, {transform_indices = @transform_1, window_bounds = array<i64: 16, 128>}]} {
    %c0 = arith.constant 0 : index
    %c0_0 = arith.constant 0 : index
    %c0_1 = arith.constant 0 : index
    %0 = vector.load %arg1[%c0, %c0_0, %c0_1] : memref<9x16x128xf32, #tpu.memory_space<vmem>>, vector<9x16x128xf32>
    %cst = arith.constant dense<0xFF800000> : vector<16x128xf32>
    %1 = vector.multi_reduction <maximumf>, %0, %cst [0] : vector<9x16x128xf32> to vector<16x128xf32>
    %c0_2 = arith.constant 0 : index
    %c0_3 = arith.constant 0 : index
    %2 = vector.load %arg2[%c0_2, %c0_3] : memref<16x128xf32, #tpu.memory_space<vmem>>, vector<16x128xf32>
    tpu.vector_store %arg2[%c0_2, %c0_3], %1 {strides = array<i32>} : memref<16x128xf32, #tpu.memory_space<vmem>>, vector<16x128xf32>,
    return
  }
  func.func @transform_0(%arg0: i32) -> (i32, i32, i32) {
    %c0_i32 = arith.constant 0 : i32
    %c0_i32_0 = arith.constant 0 : i32
    %c0_i32_1 = arith.constant 0 : i32
    return %c0_i32, %arg0, %c0_i32_0 : i32, i32, i32
  }
  func.func @transform_1(%arg0: i32) -> (i32, i32) {
    %c0_i32 = arith.constant 0 : i32
    %c0_i32_0 = arith.constant 0 : i32
    return %arg0, %c0_i32 : i32, i32
  }
}

module attributes {stable_mosaic.version = 11 : i64} {
  func.func @kernel(%arg0: i32, %arg1: i32, %arg2: i32, %arg3: memref<128x144xbf16, #tpu.memory_space<vmem>>, %arg4: memref<144x128xbf16, #tpu.memory_space<vmem>>, %arg5: memref<128x128xf32, #tpu.memory_space<vmem>>) attributes {dimension_semantics = [#tpu.dimension_semantics<parallel>, #tpu.dimension_semantics<parallel>, #tpu.dimension_semantics<arbitrary>], iteration_bounds = array<i64: 1, 1, 1>, scalar_prefetch = 0 : i64, scratch_operands = 0 : i64, tpu.core_type = #tpu.core_type<tc>, window_params = [{transform_indices = @transform_0, window_bounds = array<i64: 128, 144>}, {transform_indices = @transform_1, window_bounds = array<i64: 144, 128>}, {transform_indices = @transform_2, window_bounds = array<i64: 128, 128>}]} {
    %c0 = arith.constant 0 : index
    %c0_0 = arith.constant 0 : index
    %0 = vector.load %arg3[%c0, %c0_0] : memref<128x144xbf16, #tpu.memory_space<vmem>>, vector<128x144xbf16>
    %c0_1 = arith.constant 0 : index
    %c0_2 = arith.constant 0 : index
    %1 = vector.load %arg4[%c0_1, %c0_2] : memref<144x128xbf16, #tpu.memory_space<vmem>>, vector<144x128xbf16>
    %cst = arith.constant dense<0.000000e+00> : vector<128x128xf32>
    %2 = tpu.matmul %0, %1, %cst {dimension_numbers = #tpu.dot_dimension_numbers<[1], [0], [0], [1], [0, 0, 1, 1], [], []>} : vector<128x144xbf16>, vector<144x128xbf16>, vector<128x128xf32> -> vector<128x128xf32>
    %c0_i32 = arith.constant 0 : i32
    %3 = arith.cmpi eq, %arg2, %c0_i32 : i32
    %4 = arith.extui %3 : i1 to i32
    %c0_i32_3 = arith.constant 0 : i32
    %5 = arith.cmpi ne, %4, %c0_i32_3 : i32
    scf.if %5 {
      %c0_6 = arith.constant 0 : index
      %c0_7 = arith.constant 0 : index
      %9 = vector.load %arg5[%c0_6, %c0_7] : memref<128x128xf32, #tpu.memory_space<vmem>>, vector<128x128xf32>
      tpu.vector_store %arg5[%c0_6, %c0_7], %2 {strides = array<i32>} : memref<128x128xf32, #tpu.memory_space<vmem>>, vector<128x128xf32>,
    } else {
    }
    %c0_i32_4 = arith.constant 0 : i32
    %6 = arith.cmpi sgt, %arg2, %c0_i32_4 : i32
    %7 = arith.extui %6 : i1 to i32
    %c0_i32_5 = arith.constant 0 : i32
    %8 = arith.cmpi ne, %7, %c0_i32_5 : i32
    scf.if %8 {
      %c0_6 = arith.constant 0 : index
      %c0_7 = arith.constant 0 : index
      %9 = vector.load %arg5[%c0_6, %c0_7] : memref<128x128xf32, #tpu.memory_space<vmem>>, vector<128x128xf32>
      %10 = arith.addf %9, %2 : vector<128x128xf32>
      %c0_8 = arith.constant 0 : index
      %c0_9 = arith.constant 0 : index
      %11 = vector.load %arg5[%c0_8, %c0_9] : memref<128x128xf32, #tpu.memory_space<vmem>>, vector<128x128xf32>
      tpu.vector_store %arg5[%c0_8, %c0_9], %10 {strides = array<i32>} : memref<128x128xf32, #tpu.memory_space<vmem>>, vector<128x128xf32>,
    } else {
    }
    return
  }
  func.func @transform_0(%arg0: i32, %arg1: i32, %arg2: i32) -> (i32, i32) {
    %c0_i32 = arith.constant 0 : i32
    return %arg0, %arg2 : i32, i32
  }
  func.func @transform_1(%arg0: i32, %arg1: i32, %arg2: i32) -> (i32, i32) {
    %c0_i32 = arith.constant 0 : i32
    return %arg2, %arg1 : i32, i32
  }
  func.func @transform_2(%arg0: i32, %arg1: i32, %arg2: i32) -> (i32, i32) {
    %c0_i32 = arith.constant 0 : i32
    return %arg0, %arg1 : i32, i32
  }
}

module attributes {stable_mosaic.version = 11 : i64} {
  func.func @kernel(%arg0: i32, %arg1: i32, %arg2: i32, %arg3: memref<128x24xbf16, #tpu.memory_space<vmem>>, %arg4: memref<24x128xbf16, #tpu.memory_space<vmem>>, %arg5: memref<1x24xf32, #tpu.memory_space<vmem>>, %arg6: memref<1x24xf32, #tpu.memory_space<vmem>>, %arg7: memref<1x128xf32, #tpu.memory_space<vmem>>, %arg8: memref<1x128xf32, #tpu.memory_space<vmem>>, %arg9: memref<128x128xf32, #tpu.memory_space<vmem>>) attributes {dimension_semantics = [#tpu.dimension_semantics<parallel>, #tpu.dimension_semantics<parallel>, #tpu.dimension_semantics<arbitrary>], iteration_bounds = array<i64: 1, 1, 1>, scalar_prefetch = 0 : i64, scratch_operands = 0 : i64, tpu.core_type = #tpu.core_type<tc>, window_params = [{transform_indices = @transform_0, window_bounds = array<i64: 128, 24>}, {transform_indices = @transform_1, window_bounds = array<i64: 24, 128>}, {transform_indices = @transform_2, window_bounds = array<i64: 1, 24>}, {transform_indices = @transform_3, window_bounds = array<i64: 1, 24>}, {transform_indices = @transform_4, window_bounds = array<i64: 1, 128>}, {transform_indices = @transform_5, window_bounds = array<i64: 1, 128>}, {transform_indices = @transform_6, window_bounds = array<i64: 128, 128>}]} {
    %c0 = arith.constant 0 : index
    %c0_0 = arith.constant 0 : index
    %0 = vector.load %arg3[%c0, %c0_0] : memref<128x24xbf16, #tpu.memory_space<vmem>>, vector<128x24xbf16>
    %1 = arith.extf %0 : vector<128x24xbf16> to vector<128x24xf32>
    %c0_1 = arith.constant 0 : index
    %c0_2 = arith.constant 0 : index
    %2 = vector.load %arg5[%c0_1, %c0_2] : memref<1x24xf32, #tpu.memory_space<vmem>>, vector<1x24xf32>
    %3 = vector.broadcast %2 : vector<1x24xf32> to vector<128x24xf32>
    %4 = arith.mulf %1, %3 : vector<128x24xf32>
    %c0_3 = arith.constant 0 : index
    %c0_4 = arith.constant 0 : index
    %5 = vector.load %arg6[%c0_3, %c0_4] : memref<1x24xf32, #tpu.memory_space<vmem>>, vector<1x24xf32>
    %6 = vector.broadcast %5 : vector<1x24xf32> to vector<128x24xf32>
    %7 = arith.addf %4, %6 : vector<128x24xf32>
    %cst = arith.constant 0.000000e+00 : f32
    %8 = vector.broadcast %cst : f32 to vector<128x24xf32>
    %9 = arith.maximumf %7, %8 : vector<128x24xf32>
    %10 = arith.truncf %9 : vector<128x24xf32> to vector<128x24xbf16>
    %c0_5 = arith.constant 0 : index
    %c0_6 = arith.constant 0 : index
    %11 = vector.load %arg4[%c0_5, %c0_6] : memref<24x128xbf16, #tpu.memory_space<vmem>>, vector<24x128xbf16>
    %cst_7 = arith.constant dense<0.000000e+00> : vector<128x128xf32>
    %12 = tpu.matmul %10, %11, %cst_7 {dimension_numbers = #tpu.dot_dimension_numbers<[1], [0], [0], [1], [0, 0, 1, 1], [], []>} : vector<128x24xbf16>, vector<24x128xbf16>, vector<128x128xf32> -> vector<128x128xf32>
    %c0_i32 = arith.constant 0 : i32
    %13 = arith.cmpi eq, %arg2, %c0_i32 : i32
    %14 = arith.extui %13 : i1 to i32
    %c0_i32_8 = arith.constant 0 : i32
    %15 = arith.cmpi ne, %14, %c0_i32_8 : i32
    scf.if %15 {
      %c0_13 = arith.constant 0 : index
      %c0_14 = arith.constant 0 : index
      %22 = vector.load %arg9[%c0_13, %c0_14] : memref<128x128xf32, #tpu.memory_space<vmem>>, vector<128x128xf32>
      tpu.vector_store %arg9[%c0_13, %c0_14], %12 {strides = array<i32>} : memref<128x128xf32, #tpu.memory_space<vmem>>, vector<128x128xf32>,
    } else {
    }
    %c0_i32_9 = arith.constant 0 : i32
    %16 = arith.cmpi sgt, %arg2, %c0_i32_9 : i32
    %17 = arith.extui %16 : i1 to i32
    %c0_i32_10 = arith.constant 0 : i32
    %18 = arith.cmpi ne, %17, %c0_i32_10 : i32
    scf.if %18 {
      %c0_13 = arith.constant 0 : index
      %c0_14 = arith.constant 0 : index
      %22 = vector.load %arg9[%c0_13, %c0_14] : memref<128x128xf32, #tpu.memory_space<vmem>>, vector<128x128xf32>
      %23 = arith.addf %22, %12 : vector<128x128xf32>
      %c0_15 = arith.constant 0 : index
      %c0_16 = arith.constant 0 : index
      %24 = vector.load %arg9[%c0_15, %c0_16] : memref<128x128xf32, #tpu.memory_space<vmem>>, vector<128x128xf32>
      tpu.vector_store %arg9[%c0_15, %c0_16], %23 {strides = array<i32>} : memref<128x128xf32, #tpu.memory_space<vmem>>, vector<128x128xf32>,
    } else {
    }
    %c0_i32_11 = arith.constant 0 : i32
    %19 = arith.cmpi eq, %arg2, %c0_i32_11 : i32
    %20 = arith.extui %19 : i1 to i32
    %c0_i32_12 = arith.constant 0 : i32
    %21 = arith.cmpi ne, %20, %c0_i32_12 : i32
    scf.if %21 {
      %c0_13 = arith.constant 0 : index
      %c0_14 = arith.constant 0 : index
      %22 = vector.load %arg9[%c0_13, %c0_14] : memref<128x128xf32, #tpu.memory_space<vmem>>, vector<128x128xf32>
      %c0_15 = arith.constant 0 : index
      %c0_16 = arith.constant 0 : index
      %23 = vector.load %arg7[%c0_15, %c0_16] : memref<1x128xf32, #tpu.memory_space<vmem>>, vector<1x128xf32>
      %24 = vector.broadcast %23 : vector<1x128xf32> to vector<128x128xf32>
      %25 = arith.mulf %22, %24 : vector<128x128xf32>
      %c0_17 = arith.constant 0 : index
      %c0_18 = arith.constant 0 : index
      %26 = vector.load %arg8[%c0_17, %c0_18] : memref<1x128xf32, #tpu.memory_space<vmem>>, vector<1x128xf32>
      %27 = vector.broadcast %26 : vector<1x128xf32> to vector<128x128xf32>
      %28 = arith.addf %25, %27 : vector<128x128xf32>
      %cst_19 = arith.constant 0.000000e+00 : f32
      %29 = vector.broadcast %cst_19 : f32 to vector<128x128xf32>
      %30 = arith.maximumf %28, %29 : vector<128x128xf32>
      %c0_20 = arith.constant 0 : index
      %c0_21 = arith.constant 0 : index
      %31 = vector.load %arg9[%c0_20, %c0_21] : memref<128x128xf32, #tpu.memory_space<vmem>>, vector<128x128xf32>
      tpu.vector_store %arg9[%c0_20, %c0_21], %30 {strides = array<i32>} : memref<128x128xf32, #tpu.memory_space<vmem>>, vector<128x128xf32>,
    } else {
    }
    return
  }
  func.func @transform_0(%arg0: i32, %arg1: i32, %arg2: i32) -> (i32, i32) {
    %c0_i32 = arith.constant 0 : i32
    return %arg0, %arg2 : i32, i32
  }
  func.func @transform_1(%arg0: i32, %arg1: i32, %arg2: i32) -> (i32, i32) {
    %c0_i32 = arith.constant 0 : i32
    return %arg2, %arg1 : i32, i32
  }
  func.func @transform_2(%arg0: i32, %arg1: i32, %arg2: i32) -> (i32, i32) {
    %c0_i32 = arith.constant 0 : i32
    %c0_i32_0 = arith.constant 0 : i32
    return %c0_i32, %arg2 : i32, i32
  }
  func.func @transform_3(%arg0: i32, %arg1: i32, %arg2: i32) -> (i32, i32) {
    %c0_i32 = arith.constant 0 : i32
    %c0_i32_0 = arith.constant 0 : i32
    return %c0_i32, %arg2 : i32, i32
  }
  func.func @transform_4(%arg0: i32, %arg1: i32, %arg2: i32) -> (i32, i32) {
    %c0_i32 = arith.constant 0 : i32
    %c0_i32_0 = arith.constant 0 : i32
    return %c0_i32, %arg1 : i32, i32
  }
  func.func @transform_5(%arg0: i32, %arg1: i32, %arg2: i32) -> (i32, i32) {
    %c0_i32 = arith.constant 0 : i32
    %c0_i32_0 = arith.constant 0 : i32
    return %c0_i32, %arg1 : i32, i32
  }
  func.func @transform_6(%arg0: i32, %arg1: i32, %arg2: i32) -> (i32, i32) {
    %c0_i32 = arith.constant 0 : i32
    return %arg0, %arg1 : i32, i32
  }
}

module attributes {stable_mosaic.version = 11 : i64} {
  func.func @kernel(%arg0: i32, %arg1: i32, %arg2: i32, %arg3: memref<128x32xbf16, #tpu.memory_space<vmem>>, %arg4: memref<32x128xbf16, #tpu.memory_space<vmem>>, %arg5: memref<1x32xf32, #tpu.memory_space<vmem>>, %arg6: memref<1x32xf32, #tpu.memory_space<vmem>>, %arg7: memref<128x128xf32, #tpu.memory_space<vmem>>) attributes {dimension_semantics = [#tpu.dimension_semantics<parallel>, #tpu.dimension_semantics<parallel>, #tpu.dimension_semantics<arbitrary>], iteration_bounds = array<i64: 1, 1, 1>, scalar_prefetch = 0 : i64, scratch_operands = 0 : i64, tpu.core_type = #tpu.core_type<tc>, window_params = [{transform_indices = @transform_0, window_bounds = array<i64: 128, 32>}, {transform_indices = @transform_1, window_bounds = array<i64: 32, 128>}, {transform_indices = @transform_2, window_bounds = array<i64: 1, 32>}, {transform_indices = @transform_3, window_bounds = array<i64: 1, 32>}, {transform_indices = @transform_4, window_bounds = array<i64: 128, 128>}]} {
    %c0 = arith.constant 0 : index
    %c0_0 = arith.constant 0 : index
    %0 = vector.load %arg3[%c0, %c0_0] : memref<128x32xbf16, #tpu.memory_space<vmem>>, vector<128x32xbf16>
    %1 = arith.extf %0 : vector<128x32xbf16> to vector<128x32xf32>
    %c0_1 = arith.constant 0 : index
    %c0_2 = arith.constant 0 : index
    %2 = vector.load %arg5[%c0_1, %c0_2] : memref<1x32xf32, #tpu.memory_space<vmem>>, vector<1x32xf32>
    %3 = vector.broadcast %2 : vector<1x32xf32> to vector<128x32xf32>
    %4 = arith.mulf %1, %3 : vector<128x32xf32>
    %c0_3 = arith.constant 0 : index
    %c0_4 = arith.constant 0 : index
    %5 = vector.load %arg6[%c0_3, %c0_4] : memref<1x32xf32, #tpu.memory_space<vmem>>, vector<1x32xf32>
    %6 = vector.broadcast %5 : vector<1x32xf32> to vector<128x32xf32>
    %7 = arith.addf %4, %6 : vector<128x32xf32>
    %cst = arith.constant 0.000000e+00 : f32
    %8 = vector.broadcast %cst : f32 to vector<128x32xf32>
    %9 = arith.maximumf %7, %8 : vector<128x32xf32>
    %10 = arith.truncf %9 : vector<128x32xf32> to vector<128x32xbf16>
    %c0_5 = arith.constant 0 : index
    %c0_6 = arith.constant 0 : index
    %11 = vector.load %arg4[%c0_5, %c0_6] : memref<32x128xbf16, #tpu.memory_space<vmem>>, vector<32x128xbf16>
    %cst_7 = arith.constant dense<0.000000e+00> : vector<128x128xf32>
    %12 = tpu.matmul %10, %11, %cst_7 {dimension_numbers = #tpu.dot_dimension_numbers<[1], [0], [0], [1], [0, 0, 1, 1], [], []>} : vector<128x32xbf16>, vector<32x128xbf16>, vector<128x128xf32> -> vector<128x128xf32>
    %c0_i32 = arith.constant 0 : i32
    %13 = arith.cmpi eq, %arg2, %c0_i32 : i32
    %14 = arith.extui %13 : i1 to i32
    %c0_i32_8 = arith.constant 0 : i32
    %15 = arith.cmpi ne, %14, %c0_i32_8 : i32
    scf.if %15 {
      %c0_11 = arith.constant 0 : index
      %c0_12 = arith.constant 0 : index
      %19 = vector.load %arg7[%c0_11, %c0_12] : memref<128x128xf32, #tpu.memory_space<vmem>>, vector<128x128xf32>
      tpu.vector_store %arg7[%c0_11, %c0_12], %12 {strides = array<i32>} : memref<128x128xf32, #tpu.memory_space<vmem>>, vector<128x128xf32>,
    } else {
    }
    %c0_i32_9 = arith.constant 0 : i32
    %16 = arith.cmpi sgt, %arg2, %c0_i32_9 : i32
    %17 = arith.extui %16 : i1 to i32
    %c0_i32_10 = arith.constant 0 : i32
    %18 = arith.cmpi ne, %17, %c0_i32_10 : i32
    scf.if %18 {
      %c0_11 = arith.constant 0 : index
      %c0_12 = arith.constant 0 : index
      %19 = vector.load %arg7[%c0_11, %c0_12] : memref<128x128xf32, #tpu.memory_space<vmem>>, vector<128x128xf32>
      %20 = arith.addf %19, %12 : vector<128x128xf32>
      %c0_13 = arith.constant 0 : index
      %c0_14 = arith.constant 0 : index
      %21 = vector.load %arg7[%c0_13, %c0_14] : memref<128x128xf32, #tpu.memory_space<vmem>>, vector<128x128xf32>
      tpu.vector_store %arg7[%c0_13, %c0_14], %20 {strides = array<i32>} : memref<128x128xf32, #tpu.memory_space<vmem>>, vector<128x128xf32>,
    } else {
    }
    return
  }
  func.func @transform_0(%arg0: i32, %arg1: i32, %arg2: i32) -> (i32, i32) {
    %c0_i32 = arith.constant 0 : i32
    return %arg0, %arg2 : i32, i32
  }
  func.func @transform_1(%arg0: i32, %arg1: i32, %arg2: i32) -> (i32, i32) {
    %c0_i32 = arith.constant 0 : i32
    return %arg2, %arg1 : i32, i32
  }
  func.func @transform_2(%arg0: i32, %arg1: i32, %arg2: i32) -> (i32, i32) {
    %c0_i32 = arith.constant 0 : i32
    %c0_i32_0 = arith.constant 0 : i32
    return %c0_i32, %arg2 : i32, i32
  }
  func.func @transform_3(%arg0: i32, %arg1: i32, %arg2: i32) -> (i32, i32) {
    %c0_i32 = arith.constant 0 : i32
    %c0_i32_0 = arith.constant 0 : i32
    return %c0_i32, %arg2 : i32, i32
  }
  func.func @transform_4(%arg0: i32, %arg1: i32, %arg2: i32) -> (i32, i32) {
    %c0_i32 = arith.constant 0 : i32
    return %arg0, %arg1 : i32, i32
  }
}

module attributes {stable_mosaic.version = 11 : i64} {
  func.func @kernel(%arg0: i32, %arg1: memref<4x2x256xf32, #tpu.memory_space<vmem>>, %arg2: memref<2x256xf32, #tpu.memory_space<vmem>>) attributes {dimension_semantics = [#tpu.dimension_semantics<parallel>], iteration_bounds = array<i64: 1>, scalar_prefetch = 0 : i64, scratch_operands = 0 : i64, tpu.core_type = #tpu.core_type<tc>, window_params = [{transform_indices = @transform_0, window_bounds = array<i64: 4, 2, 256>}, {transform_indices = @transform_1, window_bounds = array<i64: 2, 256>}]} {
    %c0 = arith.constant 0 : index
    %c0_0 = arith.constant 0 : index
    %c0_1 = arith.constant 0 : index
    %0 = vector.load %arg1[%c0, %c0_0, %c0_1] : memref<4x2x256xf32, #tpu.memory_space<vmem>>, vector<4x2x256xf32>
    %cst = arith.constant dense<0.000000e+00> : vector<2x256xf32>
    %1 = vector.multi_reduction <add>, %0, %cst [0] : vector<4x2x256xf32> to vector<2x256xf32>
    %cst_2 = arith.constant 4.000000e+00 : f32
    %2 = vector.broadcast %cst_2 : f32 to vector<2x256xf32>
    %3 = arith.divf %1, %2 : vector<2x256xf32>
    %c0_3 = arith.constant 0 : index
    %c0_4 = arith.constant 0 : index
    %4 = vector.load %arg2[%c0_3, %c0_4] : memref<2x256xf32, #tpu.memory_space<vmem>>, vector<2x256xf32>
    tpu.vector_store %arg2[%c0_3, %c0_4], %3 {strides = array<i32>} : memref<2x256xf32, #tpu.memory_space<vmem>>, vector<2x256xf32>,
    return
  }
  func.func @transform_0(%arg0: i32) -> (i32, i32, i32) {
    %c0_i32 = arith.constant 0 : i32
    %c0_i32_0 = arith.constant 0 : i32
    %c0_i32_1 = arith.constant 0 : i32
    return %c0_i32, %arg0, %c0_i32_0 : i32, i32, i32
  }
  func.func @transform_1(%arg0: i32) -> (i32, i32) {
    %c0_i32 = arith.constant 0 : i32
    %c0_i32_0 = arith.constant 0 : i32
    return %arg0, %c0_i32 : i32, i32
  }
}

module attributes {stable_mosaic.version = 11 : i64} {
  func.func @kernel(%arg0: i32, %arg1: i32, %arg2: i32, %arg3: memref<32x16xbf16, #tpu.memory_space<vmem>>, %arg4: memref<16x128xbf16, #tpu.memory_space<vmem>>, %arg5: memref<1x16xf32, #tpu.memory_space<vmem>>, %arg6: memref<1x16xf32, #tpu.memory_space<vmem>>, %arg7: memref<1x128xf32, #tpu.memory_space<vmem>>, %arg8: memref<1x128xf32, #tpu.memory_space<vmem>>, %arg9: memref<32x128xf32, #tpu.memory_space<vmem>>) attributes {dimension_semantics = [#tpu.dimension_semantics<parallel>, #tpu.dimension_semantics<parallel>, #tpu.dimension_semantics<arbitrary>], iteration_bounds = array<i64: 1, 1, 1>, scalar_prefetch = 0 : i64, scratch_operands = 0 : i64, tpu.core_type = #tpu.core_type<tc>, window_params = [{transform_indices = @transform_0, window_bounds = array<i64: 32, 16>}, {transform_indices = @transform_1, window_bounds = array<i64: 16, 128>}, {transform_indices = @transform_2, window_bounds = array<i64: 1, 16>}, {transform_indices = @transform_3, window_bounds = array<i64: 1, 16>}, {transform_indices = @transform_4, window_bounds = array<i64: 1, 128>}, {transform_indices = @transform_5, window_bounds = array<i64: 1, 128>}, {transform_indices = @transform_6, window_bounds = array<i64: 32, 128>}]} {
    %c0 = arith.constant 0 : index
    %c0_0 = arith.constant 0 : index
    %0 = vector.load %arg3[%c0, %c0_0] : memref<32x16xbf16, #tpu.memory_space<vmem>>, vector<32x16xbf16>
    %1 = arith.extf %0 : vector<32x16xbf16> to vector<32x16xf32>
    %c0_1 = arith.constant 0 : index
    %c0_2 = arith.constant 0 : index
    %2 = vector.load %arg5[%c0_1, %c0_2] : memref<1x16xf32, #tpu.memory_space<vmem>>, vector<1x16xf32>
    %3 = vector.broadcast %2 : vector<1x16xf32> to vector<32x16xf32>
    %4 = arith.mulf %1, %3 : vector<32x16xf32>
    %c0_3 = arith.constant 0 : index
    %c0_4 = arith.constant 0 : index
    %5 = vector.load %arg6[%c0_3, %c0_4] : memref<1x16xf32, #tpu.memory_space<vmem>>, vector<1x16xf32>
    %6 = vector.broadcast %5 : vector<1x16xf32> to vector<32x16xf32>
    %7 = arith.addf %4, %6 : vector<32x16xf32>
    %cst = arith.constant 0.000000e+00 : f32
    %8 = vector.broadcast %cst : f32 to vector<32x16xf32>
    %9 = arith.maximumf %7, %8 : vector<32x16xf32>
    %10 = arith.truncf %9 : vector<32x16xf32> to vector<32x16xbf16>
    %c0_5 = arith.constant 0 : index
    %c0_6 = arith.constant 0 : index
    %11 = vector.load %arg4[%c0_5, %c0_6] : memref<16x128xbf16, #tpu.memory_space<vmem>>, vector<16x128xbf16>
    %cst_7 = arith.constant dense<0.000000e+00> : vector<32x128xf32>
    %12 = tpu.matmul %10, %11, %cst_7 {dimension_numbers = #tpu.dot_dimension_numbers<[1], [0], [0], [1], [0, 0, 1, 1], [], []>} : vector<32x16xbf16>, vector<16x128xbf16>, vector<32x128xf32> -> vector<32x128xf32>
    %c0_i32 = arith.constant 0 : i32
    %13 = arith.cmpi eq, %arg2, %c0_i32 : i32
    %14 = arith.extui %13 : i1 to i32
    %c0_i32_8 = arith.constant 0 : i32
    %15 = arith.cmpi ne, %14, %c0_i32_8 : i32
    scf.if %15 {
      %c0_13 = arith.constant 0 : index
      %c0_14 = arith.constant 0 : index
      %22 = vector.load %arg9[%c0_13, %c0_14] : memref<32x128xf32, #tpu.memory_space<vmem>>, vector<32x128xf32>
      tpu.vector_store %arg9[%c0_13, %c0_14], %12 {strides = array<i32>} : memref<32x128xf32, #tpu.memory_space<vmem>>, vector<32x128xf32>,
    } else {
    }
    %c0_i32_9 = arith.constant 0 : i32
    %16 = arith.cmpi sgt, %arg2, %c0_i32_9 : i32
    %17 = arith.extui %16 : i1 to i32
    %c0_i32_10 = arith.constant 0 : i32
    %18 = arith.cmpi ne, %17, %c0_i32_10 : i32
    scf.if %18 {
      %c0_13 = arith.constant 0 : index
      %c0_14 = arith.constant 0 : index
      %22 = vector.load %arg9[%c0_13, %c0_14] : memref<32x128xf32, #tpu.memory_space<vmem>>, vector<32x128xf32>
      %23 = arith.addf %22, %12 : vector<32x128xf32>
      %c0_15 = arith.constant 0 : index
      %c0_16 = arith.constant 0 : index
      %24 = vector.load %arg9[%c0_15, %c0_16] : memref<32x128xf32, #tpu.memory_space<vmem>>, vector<32x128xf32>
      tpu.vector_store %arg9[%c0_15, %c0_16], %23 {strides = array<i32>} : memref<32x128xf32, #tpu.memory_space<vmem>>, vector<32x128xf32>,
    } else {
    }
    %c0_i32_11 = arith.constant 0 : i32
    %19 = arith.cmpi eq, %arg2, %c0_i32_11 : i32
    %20 = arith.extui %19 : i1 to i32
    %c0_i32_12 = arith.constant 0 : i32
    %21 = arith.cmpi ne, %20, %c0_i32_12 : i32
    scf.if %21 {
      %c0_13 = arith.constant 0 : index
      %c0_14 = arith.constant 0 : index
      %22 = vector.load %arg9[%c0_13, %c0_14] : memref<32x128xf32, #tpu.memory_space<vmem>>, vector<32x128xf32>
      %c0_15 = arith.constant 0 : index
      %c0_16 = arith.constant 0 : index
      %23 = vector.load %arg7[%c0_15, %c0_16] : memref<1x128xf32, #tpu.memory_space<vmem>>, vector<1x128xf32>
      %24 = vector.broadcast %23 : vector<1x128xf32> to vector<32x128xf32>
      %25 = arith.mulf %22, %24 : vector<32x128xf32>
      %c0_17 = arith.constant 0 : index
      %c0_18 = arith.constant 0 : index
      %26 = vector.load %arg8[%c0_17, %c0_18] : memref<1x128xf32, #tpu.memory_space<vmem>>, vector<1x128xf32>
      %27 = vector.broadcast %26 : vector<1x128xf32> to vector<32x128xf32>
      %28 = arith.addf %25, %27 : vector<32x128xf32>
      %cst_19 = arith.constant 0.000000e+00 : f32
      %29 = vector.broadcast %cst_19 : f32 to vector<32x128xf32>
      %30 = arith.maximumf %28, %29 : vector<32x128xf32>
      %c0_20 = arith.constant 0 : index
      %c0_21 = arith.constant 0 : index
      %31 = vector.load %arg9[%c0_20, %c0_21] : memref<32x128xf32, #tpu.memory_space<vmem>>, vector<32x128xf32>
      tpu.vector_store %arg9[%c0_20, %c0_21], %30 {strides = array<i32>} : memref<32x128xf32, #tpu.memory_space<vmem>>, vector<32x128xf32>,
    } else {
    }
    return
  }
  func.func @transform_0(%arg0: i32, %arg1: i32, %arg2: i32) -> (i32, i32) {
    %c0_i32 = arith.constant 0 : i32
    return %arg0, %arg2 : i32, i32
  }
  func.func @transform_1(%arg0: i32, %arg1: i32, %arg2: i32) -> (i32, i32) {
    %c0_i32 = arith.constant 0 : i32
    return %arg2, %arg1 : i32, i32
  }
  func.func @transform_2(%arg0: i32, %arg1: i32, %arg2: i32) -> (i32, i32) {
    %c0_i32 = arith.constant 0 : i32
    %c0_i32_0 = arith.constant 0 : i32
    return %c0_i32, %arg2 : i32, i32
  }
  func.func @transform_3(%arg0: i32, %arg1: i32, %arg2: i32) -> (i32, i32) {
    %c0_i32 = arith.constant 0 : i32
    %c0_i32_0 = arith.constant 0 : i32
    return %c0_i32, %arg2 : i32, i32
  }
  func.func @transform_4(%arg0: i32, %arg1: i32, %arg2: i32) -> (i32, i32) {
    %c0_i32 = arith.constant 0 : i32
    %c0_i32_0 = arith.constant 0 : i32
    return %c0_i32, %arg1 : i32, i32
  }
  func.func @transform_5(%arg0: i32, %arg1: i32, %arg2: i32) -> (i32, i32) {
    %c0_i32 = arith.constant 0 : i32
    %c0_i32_0 = arith.constant 0 : i32
    return %c0_i32, %arg1 : i32, i32
  }
  func.func @transform_6(%arg0: i32, %arg1: i32, %arg2: i32) -> (i32, i32) {
    %c0_i32 = arith.constant 0 : i32
    return %arg0, %arg1 : i32, i32
  }
}

module attributes {stable_mosaic.version = 11 : i64} {
  func.func @kernel(%arg0: i32, %arg1: i32, %arg2: i32, %arg3: memref<32x144xbf16, #tpu.memory_space<vmem>>, %arg4: memref<144x128xbf16, #tpu.memory_space<vmem>>, %arg5: memref<32x128xf32, #tpu.memory_space<vmem>>) attributes {dimension_semantics = [#tpu.dimension_semantics<parallel>, #tpu.dimension_semantics<parallel>, #tpu.dimension_semantics<arbitrary>], iteration_bounds = array<i64: 1, 1, 1>, scalar_prefetch = 0 : i64, scratch_operands = 0 : i64, tpu.core_type = #tpu.core_type<tc>, window_params = [{transform_indices = @transform_0, window_bounds = array<i64: 32, 144>}, {transform_indices = @transform_1, window_bounds = array<i64: 144, 128>}, {transform_indices = @transform_2, window_bounds = array<i64: 32, 128>}]} {
    %c0 = arith.constant 0 : index
    %c0_0 = arith.constant 0 : index
    %0 = vector.load %arg3[%c0, %c0_0] : memref<32x144xbf16, #tpu.memory_space<vmem>>, vector<32x144xbf16>
    %c0_1 = arith.constant 0 : index
    %c0_2 = arith.constant 0 : index
    %1 = vector.load %arg4[%c0_1, %c0_2] : memref<144x128xbf16, #tpu.memory_space<vmem>>, vector<144x128xbf16>
    %cst = arith.constant dense<0.000000e+00> : vector<32x128xf32>
    %2 = tpu.matmul %0, %1, %cst {dimension_numbers = #tpu.dot_dimension_numbers<[1], [0], [0], [1], [0, 0, 1, 1], [], []>} : vector<32x144xbf16>, vector<144x128xbf16>, vector<32x128xf32> -> vector<32x128xf32>
    %c0_i32 = arith.constant 0 : i32
    %3 = arith.cmpi eq, %arg2, %c0_i32 : i32
    %4 = arith.extui %3 : i1 to i32
    %c0_i32_3 = arith.constant 0 : i32
    %5 = arith.cmpi ne, %4, %c0_i32_3 : i32
    scf.if %5 {
      %c0_6 = arith.constant 0 : index
      %c0_7 = arith.constant 0 : index
      %9 = vector.load %arg5[%c0_6, %c0_7] : memref<32x128xf32, #tpu.memory_space<vmem>>, vector<32x128xf32>
      tpu.vector_store %arg5[%c0_6, %c0_7], %2 {strides = array<i32>} : memref<32x128xf32, #tpu.memory_space<vmem>>, vector<32x128xf32>,
    } else {
    }
    %c0_i32_4 = arith.constant 0 : i32
    %6 = arith.cmpi sgt, %arg2, %c0_i32_4 : i32
    %7 = arith.extui %6 : i1 to i32
    %c0_i32_5 = arith.constant 0 : i32
    %8 = arith.cmpi ne, %7, %c0_i32_5 : i32
    scf.if %8 {
      %c0_6 = arith.constant 0 : index
      %c0_7 = arith.constant 0 : index
      %9 = vector.load %arg5[%c0_6, %c0_7] : memref<32x128xf32, #tpu.memory_space<vmem>>, vector<32x128xf32>
      %10 = arith.addf %9, %2 : vector<32x128xf32>
      %c0_8 = arith.constant 0 : index
      %c0_9 = arith.constant 0 : index
      %11 = vector.load %arg5[%c0_8, %c0_9] : memref<32x128xf32, #tpu.memory_space<vmem>>, vector<32x128xf32>
      tpu.vector_store %arg5[%c0_8, %c0_9], %10 {strides = array<i32>} : memref<32x128xf32, #tpu.memory_space<vmem>>, vector<32x128xf32>,
    } else {
    }
    return
  }
  func.func @transform_0(%arg0: i32, %arg1: i32, %arg2: i32) -> (i32, i32) {
    %c0_i32 = arith.constant 0 : i32
    return %arg0, %arg2 : i32, i32
  }
  func.func @transform_1(%arg0: i32, %arg1: i32, %arg2: i32) -> (i32, i32) {
    %c0_i32 = arith.constant 0 : i32
    return %arg2, %arg1 : i32, i32
  }
  func.func @transform_2(%arg0: i32, %arg1: i32, %arg2: i32) -> (i32, i32) {
    %c0_i32 = arith.constant 0 : i32
    return %arg0, %arg1 : i32, i32
  }
}

module attributes {stable_mosaic.version = 11 : i64} {
  func.func @kernel(%arg0: i32, %arg1: i32, %arg2: i32, %arg3: memref<32x24xbf16, #tpu.memory_space<vmem>>, %arg4: memref<24x128xbf16, #tpu.memory_space<vmem>>, %arg5: memref<1x24xf32, #tpu.memory_space<vmem>>, %arg6: memref<1x24xf32, #tpu.memory_space<vmem>>, %arg7: memref<1x128xf32, #tpu.memory_space<vmem>>, %arg8: memref<1x128xf32, #tpu.memory_space<vmem>>, %arg9: memref<32x128xf32, #tpu.memory_space<vmem>>) attributes {dimension_semantics = [#tpu.dimension_semantics<parallel>, #tpu.dimension_semantics<parallel>, #tpu.dimension_semantics<arbitrary>], iteration_bounds = array<i64: 1, 1, 1>, scalar_prefetch = 0 : i64, scratch_operands = 0 : i64, tpu.core_type = #tpu.core_type<tc>, window_params = [{transform_indices = @transform_0, window_bounds = array<i64: 32, 24>}, {transform_indices = @transform_1, window_bounds = array<i64: 24, 128>}, {transform_indices = @transform_2, window_bounds = array<i64: 1, 24>}, {transform_indices = @transform_3, window_bounds = array<i64: 1, 24>}, {transform_indices = @transform_4, window_bounds = array<i64: 1, 128>}, {transform_indices = @transform_5, window_bounds = array<i64: 1, 128>}, {transform_indices = @transform_6, window_bounds = array<i64: 32, 128>}]} {
    %c0 = arith.constant 0 : index
    %c0_0 = arith.constant 0 : index
    %0 = vector.load %arg3[%c0, %c0_0] : memref<32x24xbf16, #tpu.memory_space<vmem>>, vector<32x24xbf16>
    %1 = arith.extf %0 : vector<32x24xbf16> to vector<32x24xf32>
    %c0_1 = arith.constant 0 : index
    %c0_2 = arith.constant 0 : index
    %2 = vector.load %arg5[%c0_1, %c0_2] : memref<1x24xf32, #tpu.memory_space<vmem>>, vector<1x24xf32>
    %3 = vector.broadcast %2 : vector<1x24xf32> to vector<32x24xf32>
    %4 = arith.mulf %1, %3 : vector<32x24xf32>
    %c0_3 = arith.constant 0 : index
    %c0_4 = arith.constant 0 : index
    %5 = vector.load %arg6[%c0_3, %c0_4] : memref<1x24xf32, #tpu.memory_space<vmem>>, vector<1x24xf32>
    %6 = vector.broadcast %5 : vector<1x24xf32> to vector<32x24xf32>
    %7 = arith.addf %4, %6 : vector<32x24xf32>
    %cst = arith.constant 0.000000e+00 : f32
    %8 = vector.broadcast %cst : f32 to vector<32x24xf32>
    %9 = arith.maximumf %7, %8 : vector<32x24xf32>
    %10 = arith.truncf %9 : vector<32x24xf32> to vector<32x24xbf16>
    %c0_5 = arith.constant 0 : index
    %c0_6 = arith.constant 0 : index
    %11 = vector.load %arg4[%c0_5, %c0_6] : memref<24x128xbf16, #tpu.memory_space<vmem>>, vector<24x128xbf16>
    %cst_7 = arith.constant dense<0.000000e+00> : vector<32x128xf32>
    %12 = tpu.matmul %10, %11, %cst_7 {dimension_numbers = #tpu.dot_dimension_numbers<[1], [0], [0], [1], [0, 0, 1, 1], [], []>} : vector<32x24xbf16>, vector<24x128xbf16>, vector<32x128xf32> -> vector<32x128xf32>
    %c0_i32 = arith.constant 0 : i32
    %13 = arith.cmpi eq, %arg2, %c0_i32 : i32
    %14 = arith.extui %13 : i1 to i32
    %c0_i32_8 = arith.constant 0 : i32
    %15 = arith.cmpi ne, %14, %c0_i32_8 : i32
    scf.if %15 {
      %c0_13 = arith.constant 0 : index
      %c0_14 = arith.constant 0 : index
      %22 = vector.load %arg9[%c0_13, %c0_14] : memref<32x128xf32, #tpu.memory_space<vmem>>, vector<32x128xf32>
      tpu.vector_store %arg9[%c0_13, %c0_14], %12 {strides = array<i32>} : memref<32x128xf32, #tpu.memory_space<vmem>>, vector<32x128xf32>,
    } else {
    }
    %c0_i32_9 = arith.constant 0 : i32
    %16 = arith.cmpi sgt, %arg2, %c0_i32_9 : i32
    %17 = arith.extui %16 : i1 to i32
    %c0_i32_10 = arith.constant 0 : i32
    %18 = arith.cmpi ne, %17, %c0_i32_10 : i32
    scf.if %18 {
      %c0_13 = arith.constant 0 : index
      %c0_14 = arith.constant 0 : index
      %22 = vector.load %arg9[%c0_13, %c0_14] : memref<32x128xf32, #tpu.memory_space<vmem>>, vector<32x128xf32>
      %23 = arith.addf %22, %12 : vector<32x128xf32>
      %c0_15 = arith.constant 0 : index
      %c0_16 = arith.constant 0 : index
      %24 = vector.load %arg9[%c0_15, %c0_16] : memref<32x128xf32, #tpu.memory_space<vmem>>, vector<32x128xf32>
      tpu.vector_store %arg9[%c0_15, %c0_16], %23 {strides = array<i32>} : memref<32x128xf32, #tpu.memory_space<vmem>>, vector<32x128xf32>,
    } else {
    }
    %c0_i32_11 = arith.constant 0 : i32
    %19 = arith.cmpi eq, %arg2, %c0_i32_11 : i32
    %20 = arith.extui %19 : i1 to i32
    %c0_i32_12 = arith.constant 0 : i32
    %21 = arith.cmpi ne, %20, %c0_i32_12 : i32
    scf.if %21 {
      %c0_13 = arith.constant 0 : index
      %c0_14 = arith.constant 0 : index
      %22 = vector.load %arg9[%c0_13, %c0_14] : memref<32x128xf32, #tpu.memory_space<vmem>>, vector<32x128xf32>
      %c0_15 = arith.constant 0 : index
      %c0_16 = arith.constant 0 : index
      %23 = vector.load %arg7[%c0_15, %c0_16] : memref<1x128xf32, #tpu.memory_space<vmem>>, vector<1x128xf32>
      %24 = vector.broadcast %23 : vector<1x128xf32> to vector<32x128xf32>
      %25 = arith.mulf %22, %24 : vector<32x128xf32>
      %c0_17 = arith.constant 0 : index
      %c0_18 = arith.constant 0 : index
      %26 = vector.load %arg8[%c0_17, %c0_18] : memref<1x128xf32, #tpu.memory_space<vmem>>, vector<1x128xf32>
      %27 = vector.broadcast %26 : vector<1x128xf32> to vector<32x128xf32>
      %28 = arith.addf %25, %27 : vector<32x128xf32>
      %cst_19 = arith.constant 0.000000e+00 : f32
      %29 = vector.broadcast %cst_19 : f32 to vector<32x128xf32>
      %30 = arith.maximumf %28, %29 : vector<32x128xf32>
      %c0_20 = arith.constant 0 : index
      %c0_21 = arith.constant 0 : index
      %31 = vector.load %arg9[%c0_20, %c0_21] : memref<32x128xf32, #tpu.memory_space<vmem>>, vector<32x128xf32>
      tpu.vector_store %arg9[%c0_20, %c0_21], %30 {strides = array<i32>} : memref<32x128xf32, #tpu.memory_space<vmem>>, vector<32x128xf32>,
    } else {
    }
    return
  }
  func.func @transform_0(%arg0: i32, %arg1: i32, %arg2: i32) -> (i32, i32) {
    %c0_i32 = arith.constant 0 : i32
    return %arg0, %arg2 : i32, i32
  }
  func.func @transform_1(%arg0: i32, %arg1: i32, %arg2: i32) -> (i32, i32) {
    %c0_i32 = arith.constant 0 : i32
    return %arg2, %arg1 : i32, i32
  }
  func.func @transform_2(%arg0: i32, %arg1: i32, %arg2: i32) -> (i32, i32) {
    %c0_i32 = arith.constant 0 : i32
    %c0_i32_0 = arith.constant 0 : i32
    return %c0_i32, %arg2 : i32, i32
  }
  func.func @transform_3(%arg0: i32, %arg1: i32, %arg2: i32) -> (i32, i32) {
    %c0_i32 = arith.constant 0 : i32
    %c0_i32_0 = arith.constant 0 : i32
    return %c0_i32, %arg2 : i32, i32
  }
  func.func @transform_4(%arg0: i32, %arg1: i32, %arg2: i32) -> (i32, i32) {
    %c0_i32 = arith.constant 0 : i32
    %c0_i32_0 = arith.constant 0 : i32
    return %c0_i32, %arg1 : i32, i32
  }
  func.func @transform_5(%arg0: i32, %arg1: i32, %arg2: i32) -> (i32, i32) {
    %c0_i32 = arith.constant 0 : i32
    %c0_i32_0 = arith.constant 0 : i32
    return %c0_i32, %arg1 : i32, i32
  }
  func.func @transform_6(%arg0: i32, %arg1: i32, %arg2: i32) -> (i32, i32) {
    %c0_i32 = arith.constant 0 : i32
    return %arg0, %arg1 : i32, i32
  }
}

module attributes {stable_mosaic.version = 11 : i64} {
  func.func @kernel(%arg0: memref<16x2x32xbf16, #tpu.memory_space<vmem>>, %arg1: memref<1x1x32xf32, #tpu.memory_space<vmem>>, %arg2: memref<1x1x32xf32, #tpu.memory_space<vmem>>, %arg3: memref<32x128xbf16, #tpu.memory_space<vmem>>, %arg4: memref<1x128xf32, #tpu.memory_space<vmem>>, %arg5: memref<2x128xf32, #tpu.memory_space<vmem>>, %arg6: memref<2x32xf32, #tpu.memory_space<vmem>>) attributes {dimension_semantics = [], scalar_prefetch = 0 : i64, scratch_operands = 0 : i64, tpu.core_type = #tpu.core_type<tc>} {
    %c0 = arith.constant 0 : index
    %c0_0 = arith.constant 0 : index
    %c0_1 = arith.constant 0 : index
    %0 = vector.load %arg0[%c0, %c0_0, %c0_1] : memref<16x2x32xbf16, #tpu.memory_space<vmem>>, vector<16x2x32xbf16>
    %1 = arith.extf %0 : vector<16x2x32xbf16> to vector<16x2x32xf32>
    %c0_2 = arith.constant 0 : index
    %c0_3 = arith.constant 0 : index
    %c0_4 = arith.constant 0 : index
    %2 = vector.load %arg1[%c0_2, %c0_3, %c0_4] : memref<1x1x32xf32, #tpu.memory_space<vmem>>, vector<1x1x32xf32>
    %3 = vector.broadcast %2 : vector<1x1x32xf32> to vector<16x2x32xf32>
    %4 = arith.mulf %1, %3 : vector<16x2x32xf32>
    %c0_5 = arith.constant 0 : index
    %c0_6 = arith.constant 0 : index
    %c0_7 = arith.constant 0 : index
    %5 = vector.load %arg2[%c0_5, %c0_6, %c0_7] : memref<1x1x32xf32, #tpu.memory_space<vmem>>, vector<1x1x32xf32>
    %6 = vector.broadcast %5 : vector<1x1x32xf32> to vector<16x2x32xf32>
    %7 = arith.addf %4, %6 : vector<16x2x32xf32>
    %cst = arith.constant 0.000000e+00 : f32
    %8 = vector.broadcast %cst : f32 to vector<16x2x32xf32>
    %9 = arith.maximumf %7, %8 : vector<16x2x32xf32>
    %cst_8 = arith.constant dense<0.000000e+00> : vector<2x32xf32>
    %10 = vector.multi_reduction <add>, %9, %cst_8 [0] : vector<16x2x32xf32> to vector<2x32xf32>
    %cst_9 = arith.constant 6.250000e-02 : f32
    %11 = vector.broadcast %cst_9 : f32 to vector<2x32xf32>
    %12 = arith.mulf %10, %11 : vector<2x32xf32>
    %c0_10 = arith.constant 0 : index
    %c0_11 = arith.constant 0 : index
    %13 = vector.load %arg6[%c0_10, %c0_11] : memref<2x32xf32, #tpu.memory_space<vmem>>, vector<2x32xf32>
    tpu.vector_store %arg6[%c0_10, %c0_11], %12 {strides = array<i32>} : memref<2x32xf32, #tpu.memory_space<vmem>>, vector<2x32xf32>,
    %14 = arith.truncf %12 : vector<2x32xf32> to vector<2x32xbf16>
    %c0_12 = arith.constant 0 : index
    %c0_13 = arith.constant 0 : index
    %15 = vector.load %arg3[%c0_12, %c0_13] : memref<32x128xbf16, #tpu.memory_space<vmem>>, vector<32x128xbf16>
    %cst_14 = arith.constant dense<0.000000e+00> : vector<2x128xf32>
    %16 = tpu.matmul %14, %15, %cst_14 {dimension_numbers = #tpu.dot_dimension_numbers<[1], [0], [0], [1], [0, 0, 1, 1], [], []>} : vector<2x32xbf16>, vector<32x128xbf16>, vector<2x128xf32> -> vector<2x128xf32>
    %c0_15 = arith.constant 0 : index
    %c0_16 = arith.constant 0 : index
    %17 = vector.load %arg4[%c0_15, %c0_16] : memref<1x128xf32, #tpu.memory_space<vmem>>, vector<1x128xf32>
    %18 = vector.broadcast %17 : vector<1x128xf32> to vector<2x128xf32>
    %19 = arith.addf %16, %18 : vector<2x128xf32>
    %c0_17 = arith.constant 0 : index
    %c0_18 = arith.constant 0 : index
    %20 = vector.load %arg5[%c0_17, %c0_18] : memref<2x128xf32, #tpu.memory_space<vmem>>, vector<2x128xf32>
    tpu.vector_store %arg5[%c0_17, %c0_18], %19 {strides = array<i32>} : memref<2x128xf32, #tpu.memory_space<vmem>>, vector<2x128xf32>,
    return
  }
}

</mosaic_0001>

<llo_original>
// kernel: forward.13
$region0: #{forward.13}
  #allocation0 [shape = 'u32[]', space=smem, size = 0x4, offset = 0x4, fixed_abs, tag = 'smem constant byte address 0x4 - core index']
  #allocation1 [shape = 'u32[144,128]{1,0:T(1,128)}', space=vmem, size = 0x12000, scoped, tag = 'internal scratch']
  %s0 = inlined_call_operand.vmem [shape: bf16[512,147], index: 0, kind: input, shape index: {}]
  %s1 = inlined_call_operand.vmem [shape: bf16[147,128], index: 1, kind: input, shape index: {}]
  %s2 = inlined_call_operand.vmem [shape: f32[1,128], index: 2, kind: input, shape index: {}]
  %s3 = inlined_call_operand.vmem [shape: f32[1,128], index: 3, kind: input, shape index: {}]
  %s4 = inlined_call_operand.vmem [shape: f32[512,128], index: 4, kind: output, shape index: {}]
  %s5 = sld [smem:[#allocation0]]
  $region61: #{forward.13} parent=0
    _
  %s7 = ssub.s32 1, %s5
  %s8 = scalar_select 0, %s7, %s5
  loop: start=0, step=1, limit=4
  $region2: #{forward.13} parent=0 // loop_pre_header
    _
  $region3: #{forward.13} parent=0 // loop_header
    %s10 = sphi 0, %s14
    %p11 = scmp.ge.s32.totalorder %s10, 4
    %s17 = sphi 0, %s36
    %s18 = sphi 0, %s32
    %s19 = sphi 0, %s28
    %s20 = sphi 0, %s17
    %s21 = sphi 0, %s18
    %s22 = sphi 0, %s19
    %s23 = sphi 0, %s20
    %s24 = sphi 0, %s21
    %s25 = sphi 0, %s22
    %s41 = sphi 0, %s43
    %s44 = sphi 0, %s41
    %s45 = sphi 0, %s44
    %s61 = sphi 0, %s45
    %s69 = sphi 0, %s71
    %s72 = sphi 0, %s69
    %s73 = sphi 0, %s72
    %s89 = sphi 0, %s73
    %s95 = sphi 0, %s97
    %s98 = sphi 0, %s95
    %s99 = sphi 0, %s98
    %s115 = sphi 0, %s99
    %s121 = sphi 0, %s123
    %s124 = sphi 0, %s121
    %s125 = sphi 0, %s124
    %s141 = sphi 0, %s125
    %s149 = sphi 0, %s151
    %s152 = sphi 0, %s149
    %s153 = sphi 0, %s152
    %s169 = sphi 0, %s153
  $region4: #{forward.13} parent=0 // loop_header_branch
    %13 = sbr.rel (%p11) target = $region8
  $region5: #{forward.13} parent=0 // loop_body
    %s15 = ssub.s32 %s10, 1
    %s16 = ssub.s32 %s10, 2
    %s26 = sadd.s32 1, %s19
    %p27 = scmp.ge.s32.totalorder %s26, 1
    %s28 = scalar_select %p27, 0, %s26
    %s29 = sadd.s32 1, %s18
    %s30 = scalar_select %p27, %s29, %s18
    %p31 = scmp.ge.s32.totalorder %s30, 1
    %s32 = scalar_select %p31, 0, %s30
    %s33 = sadd.s32 1, %s17
    %s34 = scalar_select %p31, %s33, %s17
    %p35 = scmp.ge.s32.totalorder %s34, 2
    %s36 = scalar_select %p35, 0, %s34
    %s37 = ssub.s32 %s17, %s36
    %s38 = ssub.s32 %s19, %s28
    %s39 = sor.u32 %s37, %s38
    %p40 = scmp.eq.s32.totalorder %s39, 0
    %s42 = sadd.s32 %s41, 1
    %s43 = scalar_select %p40, %s41, %s42
    %p46 = pneg %p40
    %p47 = scmp.eq.s32.totalorder %s10, 1
    %p48 = por %p46, %p47
    %p49 = scmp.ne.s32.totalorder %s41, %s44
    %p50 = scmp.eq.s32.totalorder %s10, 0
    %p51 = por %p49, %p50
    %p52 = scmp.ne.s32.totalorder %s41, %s44
    %p53 = scmp.eq.s32.totalorder %s15, 1
    %p54 = por %p52, %p53
    %p55 = scmp.ne.s32.totalorder %s44, %s45
    %p56 = scmp.eq.s32.totalorder %s15, 0
    %p57 = por %p55, %p56
    %p58 = scmp.ne.s32.totalorder %s44, %s45
    %p59 = scmp.eq.s32.totalorder %s16, 1
    %p60 = por %p58, %p59
    %p62 = scmp.ne.s32.totalorder %s45, %s61
    %p63 = scmp.eq.s32.totalorder %s16, 0
    %p64 = por %p62, %p63
    %s65 = ssub.s32 %s19, %s28
    %s66 = ssub.s32 %s18, %s32
    %s67 = sor.u32 %s65, %s66
    %p68 = scmp.eq.s32.totalorder %s67, 0
    %s70 = sadd.s32 %s69, 1
    %s71 = scalar_select %p68, %s69, %s70
    %p74 = pneg %p68
    %p75 = scmp.eq.s32.totalorder %s10, 1
    %p76 = por %p74, %p75
    %p77 = scmp.ne.s32.totalorder %s69, %s72
    %p78 = scmp.eq.s32.totalorder %s10, 0
    %p79 = por %p77, %p78
    %p80 = scmp.ne.s32.totalorder %s69, %s72
    %p81 = scmp.eq.s32.totalorder %s15, 1
    %p82 = por %p80, %p81
    %p83 = scmp.ne.s32.totalorder %s72, %s73
    %p84 = scmp.eq.s32.totalorder %s15, 0
    %p85 = por %p83, %p84
    %p86 = scmp.ne.s32.totalorder %s72, %s73
    %p87 = scmp.eq.s32.totalorder %s16, 1
    %p88 = por %p86, %p87
    %p90 = scmp.ne.s32.totalorder %s73, %s89
    %p91 = scmp.eq.s32.totalorder %s16, 0
    %p92 = por %p90, %p91
    %s93 = ssub.s32 %s18, %s32
    %p94 = scmp.eq.s32.totalorder %s93, 0
    %s96 = sadd.s32 %s95, 1
    %s97 = scalar_select %p94, %s95, %s96
    %p100 = pneg %p94
    %p101 = scmp.eq.s32.totalorder %s10, 1
    %p102 = por %p100, %p101
    %p103 = scmp.ne.s32.totalorder %s95, %s98
    %p104 = scmp.eq.s32.totalorder %s10, 0
    %p105 = por %p103, %p104
    %p106 = scmp.ne.s32.totalorder %s95, %s98
    %p107 = scmp.eq.s32.totalorder %s15, 1
    %p108 = por %p106, %p107
    %p109 = scmp.ne.s32.totalorder %s98, %s99
    %p110 = scmp.eq.s32.totalorder %s15, 0
    %p111 = por %p109, %p110
    %p112 = scmp.ne.s32.totalorder %s98, %s99
    %p113 = scmp.eq.s32.totalorder %s16, 1
    %p114 = por %p112, %p113
    %p116 = scmp.ne.s32.totalorder %s99, %s115
    %p117 = scmp.eq.s32.totalorder %s16, 0
    %p118 = por %p116, %p117
    %s119 = ssub.s32 %s18, %s32
    %p120 = scmp.eq.s32.totalorder %s119, 0
    %s122 = sadd.s32 %s121, 1
    %s123 = scalar_select %p120, %s121, %s122
    %p126 = pneg %p120
    %p127 = scmp.eq.s32.totalorder %s10, 1
    %p128 = por %p126, %p127
    %p129 = scmp.ne.s32.totalorder %s121, %s124
    %p130 = scmp.eq.s32.totalorder %s10, 0
    %p131 = por %p129, %p130
    %p132 = scmp.ne.s32.totalorder %s121, %s124
    %p133 = scmp.eq.s32.totalorder %s15, 1
    %p134 = por %p132, %p133
    %p135 = scmp.ne.s32.totalorder %s124, %s125
    %p136 = scmp.eq.s32.totalorder %s15, 0
    %p137 = por %p135, %p136
    %p138 = scmp.ne.s32.totalorder %s124, %s125
    %p139 = scmp.eq.s32.totalorder %s16, 1
    %p140 = por %p138, %p139
    %p142 = scmp.ne.s32.totalorder %s125, %s141
    %p143 = scmp.eq.s32.totalorder %s16, 0
    %p144 = por %p142, %p143
    %s145 = ssub.s32 %s17, %s36
    %s146 = ssub.s32 %s18, %s32
    %s147 = sor.u32 %s145, %s146
    %p148 = scmp.eq.s32.totalorder %s147, 0
    %s150 = sadd.s32 %s149, 1
    %s151 = scalar_select %p148, %s149, %s150
    %p154 = pneg %p148
    %p155 = scmp.eq.s32.totalorder %s10, 1
    %p156 = por %p154, %p155
    %p157 = scmp.ne.s32.totalorder %s149, %s152
    %p158 = scmp.eq.s32.totalorder %s10, 0
    %p159 = por %p157, %p158
    %p160 = scmp.ne.s32.totalorder %s149, %s152
    %p161 = scmp.eq.s32.totalorder %s15, 1
    %p162 = por %p160, %p161
    %p163 = scmp.ne.s32.totalorder %s152, %s153
    %p164 = scmp.eq.s32.totalorder %s15, 0
    %p165 = por %p163, %p164
    %p166 = scmp.ne.s32.totalorder %s152, %s153
    %p167 = scmp.eq.s32.totalorder %s16, 1
    %p168 = por %p166, %p167
    %p170 = scmp.ne.s32.totalorder %s153, %s169
    %p171 = scmp.eq.s32.totalorder %s16, 0
    %p172 = por %p170, %p171
    %p173 = scmp.le.s32.totalorder 1, %s10
    %p174 = scmp.lt.s32.totalorder %s10, 3
    %p175 = pnand %p173, %p174
    %p176 = pneg %p175
    // Predicated region
    $region9: #{forward.13} parent=5 // pred_check
      _
    $region10: #{forward.13} parent=5 // pred_check_branch
      %178 = sbr.rel (%p175) target = $region12
    $region11: #{forward.13} parent=5 // pred_region
      %s179 = ssub.s32 %s10, 1
      // Predicated region
      $region13: #{forward.13} parent=11 // pred_check
        %p180 = pneg %p85
      $region14: #{forward.13} parent=11 // pred_check_branch
        %182 = sbr.rel (%p180) target = $region16
      $region15: #{forward.13} parent=11 // pred_region
        %s183 = smul.u32 19, %s22
        %p184 = scmp.lt.s32.totalorder %s183, 18
        %s185 = scalar_select %p184, %s183, 18
        %p186 = scmp.lt.s32.totalorder %s21, 0
        %s187 = scalar_select %p186, %s21, 0
        %s188 = sadd.s32 %s187, %s185
        %s189 = smul.addr %s188, 4
        %s190 = scalar_lea.vmem %s1, %s189
        %s191 = smul.u32 19, %s22
      $region16: #{forward.13} parent=11 // pred_fallthru
        _
      // Predicated region
      $region17: #{forward.13} parent=11 // pred_check
        %p192 = pneg %p111
      $region18: #{forward.13} parent=11 // pred_check_branch
        %194 = sbr.rel (%p192) target = $region20
      $region19: #{forward.13} parent=11 // pred_region
        %p195 = scmp.lt.s32.totalorder %s21, 0
        %s196 = scalar_select %p195, %s21, 0
        %s197 = scalar_lea.vmem %s2, %s196
      $region20: #{forward.13} parent=11 // pred_fallthru
        _
      // Predicated region
      $region21: #{forward.13} parent=11 // pred_check
        %p198 = pneg %p137
      $region22: #{forward.13} parent=11 // pred_check_branch
        %200 = sbr.rel (%p198) target = $region24
      $region23: #{forward.13} parent=11 // pred_region
        %p201 = scmp.lt.s32.totalorder %s21, 0
        %s202 = scalar_select %p201, %s21, 0
        %s203 = scalar_lea.vmem %s3, %s202
      $region24: #{forward.13} parent=11 // pred_fallthru
        _
    $region12: #{forward.13} parent=5 // pred_fallthru
      _
    %p204 = scmp.lt.s32.totalorder %s10, 2
    // Predicated region
    $region25: #{forward.13} parent=5 // pred_check
      %p205 = pneg %p204
    $region26: #{forward.13} parent=5 // pred_check_branch
      %207 = sbr.rel (%p205) target = $region28
    $region27: #{forward.13} parent=5 // pred_region
      // Predicated region
      $region29: #{forward.13} parent=27 // pred_check
        %p208 = pneg %p51
      $region30: #{forward.13} parent=27 // pred_check_branch
        %210 = sbr.rel (%p208) target = $region32
      $region31: #{forward.13} parent=27 // pred_region
        %s211 = smul.u32 32, %s17
        %s212 = smul.u32 2, %s19
        %p213 = scmp.lt.s32.totalorder %s211, 63
        %s214 = scalar_select %p213, %s211, 63
        %p215 = scmp.lt.s32.totalorder %s212, 1
        %s216 = scalar_select %p215, %s212, 1
        %s217 = smul.addr %s214, 2
        %s218 = sadd.s32 %s216, %s217
        %s219 = smul.addr %s218, 4
        %s220 = scalar_lea.vmem %s0, %s219
        %s221 = smul.u32 32, %s17
        %s222 = smul.u32 2, %s19
      $region32: #{forward.13} parent=27 // pred_fallthru
        _
    $region28: #{forward.13} parent=5 // pred_fallthru
      _
    %p223 = scmp.le.s32.totalorder 1, %s10
    %p224 = scmp.lt.s32.totalorder %s10, 3
    %p225 = pnand %p223, %p224
    %p226 = pneg %p225
    // Predicated region
    $region33: #{forward.13} parent=5 // pred_check
      _
    $region34: #{forward.13} parent=5 // pred_check_branch
      %228 = sbr.rel (%p225) target = $region36
    $region35: #{forward.13} parent=5 // pred_region
      %s229 = ssub.s32 %s10, 1
      %s230 = smul.u32 32, %s20
      %s231 = smul.u32 2, %s22
      %p232 = scmp.lt.s32.totalorder %s230, 63
      %s233 = scalar_select %p232, %s230, 63
      %p234 = scmp.lt.s32.totalorder %s231, 1
      %s235 = scalar_select %p234, %s231, 1
      %s236 = smul.addr %s233, 2
      %s237 = sadd.s32 %s235, %s236
      %s238 = smul.addr %s237, 4
      %s239 = scalar_lea.vmem %s0, %s238
      %p240 = pneg %p57
      %p241 = pneg %p54
      %s242 = smul.u32 19, %s22
      %p243 = scmp.lt.s32.totalorder %s242, 18
      %s244 = scalar_select %p243, %s242, 18
      %p245 = scmp.lt.s32.totalorder %s21, 0
      %s246 = scalar_select %p245, %s21, 0
      %s247 = sadd.s32 %s246, %s244
      %s248 = smul.addr %s247, 4
      %s249 = scalar_lea.vmem %s1, %s248
      %p250 = pneg %p85
      %p251 = pneg %p82
      %p252 = scmp.lt.s32.totalorder %s21, 0
      %s253 = scalar_select %p252, %s21, 0
      %s254 = scalar_lea.vmem %s2, %s253
      %p255 = pneg %p111
      %p256 = pneg %p108
      %p257 = scmp.lt.s32.totalorder %s21, 0
      %s258 = scalar_select %p257, %s21, 0
      %s259 = scalar_lea.vmem %s3, %s258
      %p260 = pneg %p137
      %p261 = pneg %p134
      %p262 = pneg %p165
      %p263 = pneg %p162
      %s264 = smul.u32 32, %s20
      %p265 = scmp.lt.s32.totalorder %s264, 63
      %s266 = scalar_select %p265, %s264, 63
      %p267 = scmp.lt.s32.totalorder %s21, 0
      %s268 = scalar_select %p267, %s21, 0
      %s269 = sadd.s32 %s268, %s266
      %s270 = smul.addr %s269, 8
      %s271 = scalar_lea.vmem %s4, %s270
      %s272 = smul.u32 32, %s20
      %s273 = smul.u32 2, %s22
      %p274 = scmp.lt.s32.totalorder %s272, 63
      %s275 = scalar_select %p274, %s272, 63
      %p276 = scmp.lt.s32.totalorder %s273, 1
      %s277 = scalar_select %p276, %s273, 1
      %s278 = smul.addr %s275, 2
      %s279 = sadd.s32 %s277, %s278
      %s280 = smul.addr %s279, 4
      %s281 = scalar_lea.vmem %s0, %s280
      %s282 = smul.u32 32, %s20
      %s283 = smul.u32 2, %s22
      %s284 = smul.u32 19, %s22
      %p285 = scmp.lt.s32.totalorder %s284, 18
      %s286 = scalar_select %p285, %s284, 18
      %p287 = scmp.lt.s32.totalorder %s21, 0
      %s288 = scalar_select %p287, %s21, 0
      %s289 = sadd.s32 %s288, %s286
      %s290 = smul.addr %s289, 4
      %s291 = scalar_lea.vmem %s1, %s290
      %s292 = smul.u32 19, %s22
      %p293 = scmp.lt.s32.totalorder %s21, 0
      %s294 = scalar_select %p293, %s21, 0
      %s295 = scalar_lea.vmem %s2, %s294
      %p296 = scmp.lt.s32.totalorder %s21, 0
      %s297 = scalar_select %p296, %s21, 0
      %s298 = scalar_lea.vmem %s3, %s297
      %s299 = smul.u32 32, %s20
      %p300 = scmp.lt.s32.totalorder %s299, 63
      %s301 = scalar_select %p300, %s299, 63
      %p302 = scmp.lt.s32.totalorder %s21, 0
      %s303 = scalar_select %p302, %s21, 0
      %s304 = sadd.s32 %s303, %s301
      %s305 = smul.addr %s304, 8
      %s306 = scalar_lea.vmem %s4, %s305
      %s307 = smul.u32 32, %s20
      %v309 = vld [vmem:[%s281] sm:$0xff]
      %v310 = vld [vmem:[%s281 + $0x8] sm:$0xff]
      %v311 = vld [vmem:[%s281 + $0x10] sm:$0xff]
      %v312 = vld [vmem:[%s281 + $0x18] sm:$0xff]
      %v313 = vld [vmem:[%s281 + $0x20] sm:$0xff]
      %v314 = vld [vmem:[%s281 + $0x28] sm:$0xff]
      %v315 = vld [vmem:[%s281 + $0x30] sm:$0xff]
      %v316 = vld [vmem:[%s281 + $0x38] sm:$0xff]
      %v317 = vld [vmem:[%s281 + $0x40] sm:$0xff]
      %v318 = vld [vmem:[%s281 + $0x48] sm:$0xff]
      %v319 = vld [vmem:[%s281 + $0x50] sm:$0xff]
      %v320 = vld [vmem:[%s281 + $0x58] sm:$0xff]
      %v321 = vld [vmem:[%s281 + $0x60] sm:$0xff]
      %v322 = vld [vmem:[%s281 + $0x68] sm:$0xff]
      %v323 = vld [vmem:[%s281 + $0x70] sm:$0xff]
      %v324 = vld [vmem:[%s281 + $0x78] sm:$0xff]
      %v325 = vld [vmem:[%s281 + $0x80] sm:$0xff]
      %v326 = vld [vmem:[%s281 + $0x88] sm:$0xff]
      %v327 = vld [vmem:[%s281 + $0x90] sm:$0xff]
      %v328 = vld [vmem:[%s281 + $0x98] sm:$0xff]
      %v329 = vld [vmem:[%s281 + $0xa0] sm:$0xff]
      %v330 = vld [vmem:[%s281 + $0xa8] sm:$0xff]
      %v331 = vld [vmem:[%s281 + $0xb0] sm:$0xff]
      %v332 = vld [vmem:[%s281 + $0xb8] sm:$0xff]
      %v333 = vld [vmem:[%s281 + $0xc0] sm:$0xff]
      %v334 = vld [vmem:[%s281 + $0xc8] sm:$0xff]
      %v335 = vld [vmem:[%s281 + $0xd0] sm:$0xff]
      %v336 = vld [vmem:[%s281 + $0xd8] sm:$0xff]
      %v337 = vld [vmem:[%s281 + $0xe0] sm:$0xff]
      %v338 = vld [vmem:[%s281 + $0xe8] sm:$0xff]
      %v339 = vld [vmem:[%s281 + $0xf0] sm:$0xff]
      %v340 = vld [vmem:[%s281 + $0xf8] sm:$0xff]
      %v341 = vld [vmem:[%s291] sm:$0xf]
      %v342 = vld [vmem:[%s291 + $0x4] sm:$0xf]
      %v343 = vld [vmem:[%s291 + $0x8] sm:$0xf]
      %v344 = vld [vmem:[%s291 + $0xc] sm:$0xf]
      %v345 = vld [vmem:[%s291 + $0x10] sm:$0xf]
      %v346 = vld [vmem:[%s291 + $0x14] sm:$0xf]
      %v347 = vld [vmem:[%s291 + $0x18] sm:$0xf]
      %v348 = vld [vmem:[%s291 + $0x1c] sm:$0xf]
      %v349 = vld [vmem:[%s291 + $0x20] sm:$0xf]
      %v350 = vld [vmem:[%s291 + $0x24] sm:$0xf]
      %v351 = vld [vmem:[%s291 + $0x28] sm:$0xf]
      %v352 = vld [vmem:[%s291 + $0x2c] sm:$0xf]
      %v353 = vld [vmem:[%s291 + $0x30] sm:$0xf]
      %v354 = vld [vmem:[%s291 + $0x34] sm:$0xf]
      %v355 = vld [vmem:[%s291 + $0x38] sm:$0xf]
      %v356 = vld [vmem:[%s291 + $0x3c] sm:$0xf]
      %v357 = vld [vmem:[%s291 + $0x40] sm:$0xf]
      %v358 = vld [vmem:[%s291 + $0x44] sm:$0xf]
      %v359 = vld [vmem:[%s291 + $0x48] sm:$0x3]
      %v392 = vunpack.c.l.b16 %v309
      %v393 = vunpack.c.h.b16 %v309
      %v394 = vunpack.c.l.b16 %v310
      %v395 = vunpack.c.h.b16 %v310
      %v396 = vunpack.c.l.b16 %v311
      %v397 = vunpack.c.h.b16 %v311
      %v398 = vunpack.c.l.b16 %v312
      %v399 = vunpack.c.h.b16 %v312
      %v400 = vunpack.c.l.b16 %v313
      %v401 = vunpack.c.h.b16 %v313
      %v402 = vunpack.c.l.b16 %v314
      %v403 = vunpack.c.h.b16 %v314
      %v404 = vunpack.c.l.b16 %v315
      %v405 = vunpack.c.h.b16 %v315
      %v406 = vunpack.c.l.b16 %v316
      %v407 = vunpack.c.h.b16 %v316
      %v408 = vunpack.c.l.b16 %v317
      %v409 = vunpack.c.h.b16 %v317
      %v410 = vunpack.c.l.b16 %v318
      %v411 = vunpack.c.h.b16 %v318
      %v412 = vunpack.c.l.b16 %v319
      %v413 = vunpack.c.h.b16 %v319
      %v414 = vunpack.c.l.b16 %v320
      %v415 = vunpack.c.h.b16 %v320
      %v416 = vunpack.c.l.b16 %v321
      %v417 = vunpack.c.h.b16 %v321
      %v418 = vunpack.c.l.b16 %v322
      %v419 = vunpack.c.h.b16 %v322
      %v420 = vunpack.c.l.b16 %v323
      %v421 = vunpack.c.h.b16 %v323
      %v422 = vunpack.c.l.b16 %v324
      %v423 = vunpack.c.h.b16 %v324
      %v424 = vunpack.c.l.b16 %v325
      %v425 = vunpack.c.h.b16 %v325
      %v426 = vunpack.c.l.b16 %v326
      %v427 = vunpack.c.h.b16 %v326
      %v428 = vunpack.c.l.b16 %v327
      %v429 = vunpack.c.h.b16 %v327
      %v430 = vunpack.c.l.b16 %v328
      %v431 = vunpack.c.h.b16 %v328
      %v432 = vunpack.c.l.b16 %v329
      %v433 = vunpack.c.h.b16 %v329
      %v434 = vunpack.c.l.b16 %v330
      %v435 = vunpack.c.h.b16 %v330
      %v436 = vunpack.c.l.b16 %v331
      %v437 = vunpack.c.h.b16 %v331
      %v438 = vunpack.c.l.b16 %v332
      %v439 = vunpack.c.h.b16 %v332
      %v440 = vunpack.c.l.b16 %v333
      %v441 = vunpack.c.h.b16 %v333
      %v442 = vunpack.c.l.b16 %v334
      %v443 = vunpack.c.h.b16 %v334
      %v444 = vunpack.c.l.b16 %v335
      %v445 = vunpack.c.h.b16 %v335
      %v446 = vunpack.c.l.b16 %v336
      %v447 = vunpack.c.h.b16 %v336
      %v448 = vunpack.c.l.b16 %v337
      %v449 = vunpack.c.h.b16 %v337
      %v450 = vunpack.c.l.b16 %v338
      %v451 = vunpack.c.h.b16 %v338
      %v452 = vunpack.c.l.b16 %v339
      %v453 = vunpack.c.h.b16 %v339
      %v454 = vunpack.c.l.b16 %v340
      %v455 = vunpack.c.h.b16 %v340
      %v456 = vpack.c.b16 %v394, %v392
      %v457 = vpack.c.b16 %v395, %v393
      %v458 = vpack.c.b16 %v398, %v396
      %v459 = vpack.c.b16 %v399, %v397
      %v460 = vpack.c.b16 %v402, %v400
      %v461 = vpack.c.b16 %v403, %v401
      %v462 = vpack.c.b16 %v406, %v404
      %v463 = vpack.c.b16 %v407, %v405
      %v464 = vpack.c.b16 %v410, %v408
      %v465 = vpack.c.b16 %v411, %v409
      %v466 = vpack.c.b16 %v414, %v412
      %v467 = vpack.c.b16 %v415, %v413
      %v468 = vpack.c.b16 %v418, %v416
      %v469 = vpack.c.b16 %v419, %v417
      %v470 = vpack.c.b16 %v422, %v420
      %v471 = vpack.c.b16 %v423, %v421
      %v472 = vpack.c.b16 %v426, %v424
      %v473 = vpack.c.b16 %v427, %v425
      %v474 = vpack.c.b16 %v430, %v428
      %v475 = vpack.c.b16 %v431, %v429
      %v476 = vpack.c.b16 %v434, %v432
      %v477 = vpack.c.b16 %v435, %v433
      %v478 = vpack.c.b16 %v438, %v436
      %v479 = vpack.c.b16 %v439, %v437
      %v480 = vpack.c.b16 %v442, %v440
      %v481 = vpack.c.b16 %v443, %v441
      %v482 = vpack.c.b16 %v446, %v444
      %v483 = vpack.c.b16 %v447, %v445
      %v484 = vpack.c.b16 %v450, %v448
      %v485 = vpack.c.b16 %v451, %v449
      %v486 = vpack.c.b16 %v454, %v452
      %v487 = vpack.c.b16 %v455, %v453
      %v523 = vunpack.c.l.b16 %v341
      %v524 = vunpack.c.l.b16 %v342
      %v525 = vunpack.c.l.b16 %v343
      %v526 = vunpack.c.l.b16 %v344
      %v527 = vunpack.c.l.b16 %v345
      %v528 = vunpack.c.l.b16 %v346
      %v529 = vunpack.c.l.b16 %v347
      %v530 = vunpack.c.l.b16 %v348
      %v531 = vunpack.c.l.b16 %v349
      %v532 = vunpack.c.l.b16 %v350
      %v533 = vunpack.c.l.b16 %v351
      %v534 = vunpack.c.l.b16 %v352
      %v535 = vunpack.c.l.b16 %v353
      %v536 = vunpack.c.l.b16 %v354
      %v537 = vunpack.c.l.b16 %v355
      %v538 = vunpack.c.l.b16 %v356
      %v539 = vunpack.c.l.b16 %v357
      %v540 = vunpack.c.l.b16 %v358
      %v541 = vunpack.c.l.b16 %v359
      %v542 = vpack.c.b16 %v524, %v523
      %v543 = vpack.c.b16 %v526, %v525
      %v544 = vpack.c.b16 %v528, %v527
      %v545 = vpack.c.b16 %v530, %v529
      %v546 = vpack.c.b16 %v532, %v531
      %v547 = vpack.c.b16 %v534, %v533
      %v548 = vpack.c.b16 %v536, %v535
      %v549 = vpack.c.b16 %v538, %v537
      %v550 = vpack.c.b16 %v540, %v539
      %v551 = vpack.c.b16 %v541, %v541
      %vm561 = vcmask 154624
      %v563 = vsel %vm561, %v457, 0
      %v566 = vsel %vm561, %v459, 0
      %v569 = vsel %vm561, %v461, 0
      %v572 = vsel %vm561, %v463, 0
      %v575 = vsel %vm561, %v465, 0
      %v578 = vsel %vm561, %v467, 0
      %v581 = vsel %vm561, %v469, 0
      %v584 = vsel %vm561, %v471, 0
      %v587 = vsel %vm561, %v473, 0
      %v590 = vsel %vm561, %v475, 0
      %v593 = vsel %vm561, %v477, 0
      %v596 = vsel %vm561, %v479, 0
      %v599 = vsel %vm561, %v481, 0
      %v602 = vsel %vm561, %v483, 0
      %v605 = vsel %vm561, %v485, 0
      %v608 = vsel %vm561, %v487, 0
      %vm610 = vcmask 1040384
      %vm611 = vcmask 1041408
      %v612 = vsel %vm610, 4294967295, 65535
      %v613 = vsel %vm611, %v612, 0
      %v615 = vand.u32 %v551, %v613
      %617 = vmatprep.subr.bf16.mxu0 0
      %618 = vmatpush1.bf16.msra.mxu0 %v542
      %619 = vmatprep.subr.bf16.mxu0 0
      %620 = vmatpush1.bf16.msra.mxu0 %v543
      %621 = vmatprep.subr.bf16.mxu0 0
      %622 = vmatpush1.bf16.msra.mxu0 %v544
      %623 = vmatprep.subr.bf16.mxu0 0
      %624 = vmatpush1.bf16.msra.mxu0 %v545
      %625 = vmatprep.subr.bf16.mxu0 0
      %626 = vmatpush1.bf16.msra.mxu0 %v546
      %627 = vmatprep.subr.bf16.mxu0 0
      %628 = vmatpush1.bf16.msra.mxu0 %v547
      %629 = vmatprep.subr.bf16.mxu0 0
      %630 = vmatpush1.bf16.msra.mxu0 %v548
      %631 = vmatprep.subr.bf16.mxu0 0
      %632 = vmatpush1.bf16.msra.mxu0 %v549
      %633 = vmatprep.subr.bf16.mxu0 0
      %634 = vmatpush1.bf16.msra.mxu0 %v550
      %635 = vmatprep.subr.bf16.mxu0 0
      %636 = vmatpush1.bf16.msra.mxu0 %v615
      %637 = vmatprep.subr.bf16.mxu0 0
      %638 = vmatpush1.bf16.msra.mxu0 0
      %639 = vmatprep.subr.bf16.mxu0 0
      %640 = vmatpush1.bf16.msra.mxu0 0
      %641 = vmatprep.subr.bf16.mxu0 0
      %642 = vmatpush1.bf16.msra.mxu0 0
      %643 = vmatprep.subr.bf16.mxu0 0
      %644 = vmatpush1.bf16.msra.mxu0 0
      %645 = vmatprep.subr.bf16.mxu0 0
      %646 = vmatpush1.bf16.msra.mxu0 0
      %647 = vmatprep.subr.bf16.mxu0 0
      %648 = vmatpush1.bf16.msra.mxu0 0
      %649 = vmatprep.mubr.bf16.mxu0 %v563
      %650 = vmatmul.mubr.bf16.gmra.mrb[0].mxu0 %v456
      %v651 = vpop.f32.mrb[0].mxu0
      %v652 = vadd.f32 0.0, %v651
      %v653 = vpop.f32.mrb[0].mxu0
      %v654 = vpop.f32.mrb[0].mxu0
      %v655 = vadd.f32 0.0, %v654
      %v656 = vpop.f32.mrb[0].mxu0
      %657 = vmatprep.mubr.bf16.mxu0 %v566
      %658 = vmatmul.mubr.bf16.gmra.mrb[0].mxu0 %v458
      %v659 = vpop.f32.mrb[0].mxu0
      %v660 = vadd.f32 0.0, %v659
      %v661 = vpop.f32.mrb[0].mxu0
      %v662 = vpop.f32.mrb[0].mxu0
      %v663 = vadd.f32 0.0, %v662
      %v664 = vpop.f32.mrb[0].mxu0
      %665 = vmatprep.mubr.bf16.mxu0 %v569
      %666 = vmatmul.mubr.bf16.gmra.mrb[0].mxu0 %v460
      %v667 = vpop.f32.mrb[0].mxu0
      %v668 = vadd.f32 0.0, %v667
      %v669 = vpop.f32.mrb[0].mxu0
      %v670 = vpop.f32.mrb[0].mxu0
      %v671 = vadd.f32 0.0, %v670
      %v672 = vpop.f32.mrb[0].mxu0
      %673 = vmatprep.mubr.bf16.mxu0 %v572
      %674 = vmatmul.mubr.bf16.gmra.mrb[0].mxu0 %v462
      %v675 = vpop.f32.mrb[0].mxu0
      %v676 = vadd.f32 0.0, %v675
      %v677 = vpop.f32.mrb[0].mxu0
      %v678 = vpop.f32.mrb[0].mxu0
      %v679 = vadd.f32 0.0, %v678
      %v680 = vpop.f32.mrb[0].mxu0
      %681 = vmatprep.mubr.bf16.mxu0 %v575
      %682 = vmatmul.mubr.bf16.gmra.mrb[0].mxu0 %v464
      %v683 = vpop.f32.mrb[0].mxu0
      %v684 = vadd.f32 0.0, %v683
      %v685 = vpop.f32.mrb[0].mxu0
      %v686 = vpop.f32.mrb[0].mxu0
      %v687 = vadd.f32 0.0, %v686
      %v688 = vpop.f32.mrb[0].mxu0
      %689 = vmatprep.mubr.bf16.mxu0 %v578
      %690 = vmatmul.mubr.bf16.gmra.mrb[0].mxu0 %v466
      %v691 = vpop.f32.mrb[0].mxu0
      %v692 = vadd.f32 0.0, %v691
      %v693 = vpop.f32.mrb[0].mxu0
      %v694 = vpop.f32.mrb[0].mxu0
      %v695 = vadd.f32 0.0, %v694
      %v696 = vpop.f32.mrb[0].mxu0
      %697 = vmatprep.mubr.bf16.mxu0 %v581
      %698 = vmatmul.mubr.bf16.gmra.mrb[0].mxu0 %v468
      %v699 = vpop.f32.mrb[0].mxu0
      %v700 = vadd.f32 0.0, %v699
      %v701 = vpop.f32.mrb[0].mxu0
      %v702 = vpop.f32.mrb[0].mxu0
      %v703 = vadd.f32 0.0, %v702
      %v704 = vpop.f32.mrb[0].mxu0
      %705 = vmatprep.mubr.bf16.mxu0 %v584
      %706 = vmatmul.mubr.bf16.gmra.mrb[0].mxu0 %v470
      %v707 = vpop.f32.mrb[0].mxu0
      %v708 = vadd.f32 0.0, %v707
      %v709 = vpop.f32.mrb[0].mxu0
      %v710 = vpop.f32.mrb[0].mxu0
      %v711 = vadd.f32 0.0, %v710
      %v712 = vpop.f32.mrb[0].mxu0
      %713 = vmatprep.mubr.bf16.mxu0 %v587
      %714 = vmatmul.mubr.bf16.gmra.mrb[0].mxu0 %v472
      %v715 = vpop.f32.mrb[0].mxu0
      %v716 = vadd.f32 0.0, %v715
      %v717 = vpop.f32.mrb[0].mxu0
      %v718 = vpop.f32.mrb[0].mxu0
      %v719 = vadd.f32 0.0, %v718
      %v720 = vpop.f32.mrb[0].mxu0
      %721 = vmatprep.mubr.bf16.mxu0 %v590
      %722 = vmatmul.mubr.bf16.gmra.mrb[0].mxu0 %v474
      %v723 = vpop.f32.mrb[0].mxu0
      %v724 = vadd.f32 0.0, %v723
      %v725 = vpop.f32.mrb[0].mxu0
      %v726 = vpop.f32.mrb[0].mxu0
      %v727 = vadd.f32 0.0, %v726
      %v728 = vpop.f32.mrb[0].mxu0
      %729 = vmatprep.mubr.bf16.mxu0 %v593
      %730 = vmatmul.mubr.bf16.gmra.mrb[0].mxu0 %v476
      %v731 = vpop.f32.mrb[0].mxu0
      %v732 = vadd.f32 0.0, %v731
      %v733 = vpop.f32.mrb[0].mxu0
      %v734 = vpop.f32.mrb[0].mxu0
      %v735 = vadd.f32 0.0, %v734
      %v736 = vpop.f32.mrb[0].mxu0
      %737 = vmatprep.mubr.bf16.mxu0 %v596
      %738 = vmatmul.mubr.bf16.gmra.mrb[0].mxu0 %v478
      %v739 = vpop.f32.mrb[0].mxu0
      %v740 = vadd.f32 0.0, %v739
      %v741 = vpop.f32.mrb[0].mxu0
      %v742 = vpop.f32.mrb[0].mxu0
      %v743 = vadd.f32 0.0, %v742
      %v744 = vpop.f32.mrb[0].mxu0
      %745 = vmatprep.mubr.bf16.mxu0 %v599
      %746 = vmatmul.mubr.bf16.gmra.mrb[0].mxu0 %v480
      %v747 = vpop.f32.mrb[0].mxu0
      %v748 = vadd.f32 0.0, %v747
      %v749 = vpop.f32.mrb[0].mxu0
      %v750 = vpop.f32.mrb[0].mxu0
      %v751 = vadd.f32 0.0, %v750
      %v752 = vpop.f32.mrb[0].mxu0
      %753 = vmatprep.mubr.bf16.mxu0 %v602
      %754 = vmatmul.mubr.bf16.gmra.mrb[0].mxu0 %v482
      %v755 = vpop.f32.mrb[0].mxu0
      %v756 = vadd.f32 0.0, %v755
      %v757 = vpop.f32.mrb[0].mxu0
      %v758 = vpop.f32.mrb[0].mxu0
      %v759 = vadd.f32 0.0, %v758
      %v760 = vpop.f32.mrb[0].mxu0
      %761 = vmatprep.mubr.bf16.mxu0 %v605
      %762 = vmatmul.mubr.bf16.gmra.mrb[0].mxu0 %v484
      %v763 = vpop.f32.mrb[0].mxu0
      %v764 = vadd.f32 0.0, %v763
      %v765 = vpop.f32.mrb[0].mxu0
      %v766 = vpop.f32.mrb[0].mxu0
      %v767 = vadd.f32 0.0, %v766
      %v768 = vpop.f32.mrb[0].mxu0
      %769 = vmatprep.mubr.bf16.mxu0 %v608
      %770 = vmatmul.mubr.bf16.gmra.mrb[0].mxu0 %v486
      %v771 = vpop.f32.mrb[0].mxu0
      %v772 = vadd.f32 0.0, %v771
      %v773 = vpop.f32.mrb[0].mxu0
      %v774 = vpop.f32.mrb[0].mxu0
      %v775 = vadd.f32 0.0, %v774
      %v776 = vpop.f32.mrb[0].mxu0
      %777 = vdwg.mxu0
      %p778 = scmp.eq.s32.totalorder %s22, 0
      // Predicated region
      $region37: #{forward.13} parent=35 // pred_check
        %p779 = pneg %p778
      $region38: #{forward.13} parent=35 // pred_check_branch
        %781 = sbr.rel (%p779) target = $region40
      $region39: #{forward.13} parent=35 // pred_region
        %782 = vst [vmem:[%s306] sm:$0xff] %v652
        %783 = vst [vmem:[%s306 + $0x8] sm:$0xff] %v655
        %784 = vst [vmem:[%s306 + $0x10] sm:$0xff] %v660
        %785 = vst [vmem:[%s306 + $0x18] sm:$0xff] %v663
        %786 = vst [vmem:[%s306 + $0x20] sm:$0xff] %v668
        %787 = vst [vmem:[%s306 + $0x28] sm:$0xff] %v671
        %788 = vst [vmem:[%s306 + $0x30] sm:$0xff] %v676
        %789 = vst [vmem:[%s306 + $0x38] sm:$0xff] %v679
        %790 = vst [vmem:[%s306 + $0x40] sm:$0xff] %v684
        %791 = vst [vmem:[%s306 + $0x48] sm:$0xff] %v687
        %792 = vst [vmem:[%s306 + $0x50] sm:$0xff] %v692
        %793 = vst [vmem:[%s306 + $0x58] sm:$0xff] %v695
        %794 = vst [vmem:[%s306 + $0x60] sm:$0xff] %v700
        %795 = vst [vmem:[%s306 + $0x68] sm:$0xff] %v703
        %796 = vst [vmem:[%s306 + $0x70] sm:$0xff] %v708
        %797 = vst [vmem:[%s306 + $0x78] sm:$0xff] %v711
        %798 = vst [vmem:[%s306 + $0x80] sm:$0xff] %v716
        %799 = vst [vmem:[%s306 + $0x88] sm:$0xff] %v719
        %800 = vst [vmem:[%s306 + $0x90] sm:$0xff] %v724
        %801 = vst [vmem:[%s306 + $0x98] sm:$0xff] %v727
        %802 = vst [vmem:[%s306 + $0xa0] sm:$0xff] %v732
        %803 = vst [vmem:[%s306 + $0xa8] sm:$0xff] %v735
        %804 = vst [vmem:[%s306 + $0xb0] sm:$0xff] %v740
        %805 = vst [vmem:[%s306 + $0xb8] sm:$0xff] %v743
        %806 = vst [vmem:[%s306 + $0xc0] sm:$0xff] %v748
        %807 = vst [vmem:[%s306 + $0xc8] sm:$0xff] %v751
        %808 = vst [vmem:[%s306 + $0xd0] sm:$0xff] %v756
        %809 = vst [vmem:[%s306 + $0xd8] sm:$0xff] %v759
        %810 = vst [vmem:[%s306 + $0xe0] sm:$0xff] %v764
        %811 = vst [vmem:[%s306 + $0xe8] sm:$0xff] %v767
        %812 = vst [vmem:[%s306 + $0xf0] sm:$0xff] %v772
        %813 = vst [vmem:[%s306 + $0xf8] sm:$0xff] %v775
      $region40: #{forward.13} parent=35 // pred_fallthru
        _
      %p814 = scmp.gt.s32.totalorder %s22, 0
      // Predicated region
      $region41: #{forward.13} parent=35 // pred_check
        %p815 = pneg %p814
      $region42: #{forward.13} parent=35 // pred_check_branch
        %817 = sbr.rel (%p815) target = $region44
      $region43: #{forward.13} parent=35 // pred_region
        %v818 = vld [vmem:[%s306] sm:$0xff]
        %v819 = vld [vmem:[%s306 + $0x8] sm:$0xff]
        %v820 = vld [vmem:[%s306 + $0x10] sm:$0xff]
        %v821 = vld [vmem:[%s306 + $0x18] sm:$0xff]
        %v822 = vld [vmem:[%s306 + $0x20] sm:$0xff]
        %v823 = vld [vmem:[%s306 + $0x28] sm:$0xff]
        %v824 = vld [vmem:[%s306 + $0x30] sm:$0xff]
        %v825 = vld [vmem:[%s306 + $0x38] sm:$0xff]
        %v826 = vld [vmem:[%s306 + $0x40] sm:$0xff]
        %v827 = vld [vmem:[%s306 + $0x48] sm:$0xff]
        %v828 = vld [vmem:[%s306 + $0x50] sm:$0xff]
        %v829 = vld [vmem:[%s306 + $0x58] sm:$0xff]
        %v830 = vld [vmem:[%s306 + $0x60] sm:$0xff]
        %v831 = vld [vmem:[%s306 + $0x68] sm:$0xff]
        %v832 = vld [vmem:[%s306 + $0x70] sm:$0xff]
        %v833 = vld [vmem:[%s306 + $0x78] sm:$0xff]
        %v834 = vld [vmem:[%s306 + $0x80] sm:$0xff]
        %v835 = vld [vmem:[%s306 + $0x88] sm:$0xff]
        %v836 = vld [vmem:[%s306 + $0x90] sm:$0xff]
        %v837 = vld [vmem:[%s306 + $0x98] sm:$0xff]
        %v838 = vld [vmem:[%s306 + $0xa0] sm:$0xff]
        %v839 = vld [vmem:[%s306 + $0xa8] sm:$0xff]
        %v840 = vld [vmem:[%s306 + $0xb0] sm:$0xff]
        %v841 = vld [vmem:[%s306 + $0xb8] sm:$0xff]
        %v842 = vld [vmem:[%s306 + $0xc0] sm:$0xff]
        %v843 = vld [vmem:[%s306 + $0xc8] sm:$0xff]
        %v844 = vld [vmem:[%s306 + $0xd0] sm:$0xff]
        %v845 = vld [vmem:[%s306 + $0xd8] sm:$0xff]
        %v846 = vld [vmem:[%s306 + $0xe0] sm:$0xff]
        %v847 = vld [vmem:[%s306 + $0xe8] sm:$0xff]
        %v848 = vld [vmem:[%s306 + $0xf0] sm:$0xff]
        %v849 = vld [vmem:[%s306 + $0xf8] sm:$0xff]
        %v850 = vadd.f32 %v818, %v652
        %v851 = vadd.f32 %v819, %v655
        %v852 = vadd.f32 %v820, %v660
        %v853 = vadd.f32 %v821, %v663
        %v854 = vadd.f32 %v822, %v668
        %v855 = vadd.f32 %v823, %v671
        %v856 = vadd.f32 %v824, %v676
        %v857 = vadd.f32 %v825, %v679
        %v858 = vadd.f32 %v826, %v684
        %v859 = vadd.f32 %v827, %v687
        %v860 = vadd.f32 %v828, %v692
        %v861 = vadd.f32 %v829, %v695
        %v862 = vadd.f32 %v830, %v700
        %v863 = vadd.f32 %v831, %v703
        %v864 = vadd.f32 %v832, %v708
        %v865 = vadd.f32 %v833, %v711
        %v866 = vadd.f32 %v834, %v716
        %v867 = vadd.f32 %v835, %v719
        %v868 = vadd.f32 %v836, %v724
        %v869 = vadd.f32 %v837, %v727
        %v870 = vadd.f32 %v838, %v732
        %v871 = vadd.f32 %v839, %v735
        %v872 = vadd.f32 %v840, %v740
        %v873 = vadd.f32 %v841, %v743
        %v874 = vadd.f32 %v842, %v748
        %v875 = vadd.f32 %v843, %v751
        %v876 = vadd.f32 %v844, %v756
        %v877 = vadd.f32 %v845, %v759
        %v878 = vadd.f32 %v846, %v764
        %v879 = vadd.f32 %v847, %v767
        %v880 = vadd.f32 %v848, %v772
        %v881 = vadd.f32 %v849, %v775
        %882 = vst [vmem:[%s306] sm:$0xff] %v850
        %883 = vst [vmem:[%s306 + $0x8] sm:$0xff] %v851
        %884 = vst [vmem:[%s306 + $0x10] sm:$0xff] %v852
        %885 = vst [vmem:[%s306 + $0x18] sm:$0xff] %v853
        %886 = vst [vmem:[%s306 + $0x20] sm:$0xff] %v854
        %887 = vst [vmem:[%s306 + $0x28] sm:$0xff] %v855
        %888 = vst [vmem:[%s306 + $0x30] sm:$0xff] %v856
        %889 = vst [vmem:[%s306 + $0x38] sm:$0xff] %v857
        %890 = vst [vmem:[%s306 + $0x40] sm:$0xff] %v858
        %891 = vst [vmem:[%s306 + $0x48] sm:$0xff] %v859
        %892 = vst [vmem:[%s306 + $0x50] sm:$0xff] %v860
        %893 = vst [vmem:[%s306 + $0x58] sm:$0xff] %v861
        %894 = vst [vmem:[%s306 + $0x60] sm:$0xff] %v862
        %895 = vst [vmem:[%s306 + $0x68] sm:$0xff] %v863
        %896 = vst [vmem:[%s306 + $0x70] sm:$0xff] %v864
        %897 = vst [vmem:[%s306 + $0x78] sm:$0xff] %v865
        %898 = vst [vmem:[%s306 + $0x80] sm:$0xff] %v866
        %899 = vst [vmem:[%s306 + $0x88] sm:$0xff] %v867
        %900 = vst [vmem:[%s306 + $0x90] sm:$0xff] %v868
        %901 = vst [vmem:[%s306 + $0x98] sm:$0xff] %v869
        %902 = vst [vmem:[%s306 + $0xa0] sm:$0xff] %v870
        %903 = vst [vmem:[%s306 + $0xa8] sm:$0xff] %v871
        %904 = vst [vmem:[%s306 + $0xb0] sm:$0xff] %v872
        %905 = vst [vmem:[%s306 + $0xb8] sm:$0xff] %v873
        %906 = vst [vmem:[%s306 + $0xc0] sm:$0xff] %v874
        %907 = vst [vmem:[%s306 + $0xc8] sm:$0xff] %v875
        %908 = vst [vmem:[%s306 + $0xd0] sm:$0xff] %v876
        %909 = vst [vmem:[%s306 + $0xd8] sm:$0xff] %v877
        %910 = vst [vmem:[%s306 + $0xe0] sm:$0xff] %v878
        %911 = vst [vmem:[%s306 + $0xe8] sm:$0xff] %v879
        %912 = vst [vmem:[%s306 + $0xf0] sm:$0xff] %v880
        %913 = vst [vmem:[%s306 + $0xf8] sm:$0xff] %v881
      $region44: #{forward.13} parent=35 // pred_fallthru
        _
      // Predicated region
      $region45: #{forward.13} parent=35 // pred_check
        %p914 = pneg %p778
      $region46: #{forward.13} parent=35 // pred_check_branch
        %916 = sbr.rel (%p914) target = $region48
      $region47: #{forward.13} parent=35 // pred_region
        %v917 = vld [vmem:[%s306] sm:$0xff]
        %v918 = vld [vmem:[%s306 + $0x8] sm:$0xff]
        %v919 = vld [vmem:[%s306 + $0x10] sm:$0xff]
        %v920 = vld [vmem:[%s306 + $0x18] sm:$0xff]
        %v921 = vld [vmem:[%s306 + $0x20] sm:$0xff]
        %v922 = vld [vmem:[%s306 + $0x28] sm:$0xff]
        %v923 = vld [vmem:[%s306 + $0x30] sm:$0xff]
        %v924 = vld [vmem:[%s306 + $0x38] sm:$0xff]
        %v925 = vld [vmem:[%s306 + $0x40] sm:$0xff]
        %v926 = vld [vmem:[%s306 + $0x48] sm:$0xff]
        %v927 = vld [vmem:[%s306 + $0x50] sm:$0xff]
        %v928 = vld [vmem:[%s306 + $0x58] sm:$0xff]
        %v929 = vld [vmem:[%s306 + $0x60] sm:$0xff]
        %v930 = vld [vmem:[%s306 + $0x68] sm:$0xff]
        %v931 = vld [vmem:[%s306 + $0x70] sm:$0xff]
        %v932 = vld [vmem:[%s306 + $0x78] sm:$0xff]
        %v933 = vld [vmem:[%s306 + $0x80] sm:$0xff]
        %v934 = vld [vmem:[%s306 + $0x88] sm:$0xff]
        %v935 = vld [vmem:[%s306 + $0x90] sm:$0xff]
        %v936 = vld [vmem:[%s306 + $0x98] sm:$0xff]
        %v937 = vld [vmem:[%s306 + $0xa0] sm:$0xff]
        %v938 = vld [vmem:[%s306 + $0xa8] sm:$0xff]
        %v939 = vld [vmem:[%s306 + $0xb0] sm:$0xff]
        %v940 = vld [vmem:[%s306 + $0xb8] sm:$0xff]
        %v941 = vld [vmem:[%s306 + $0xc0] sm:$0xff]
        %v942 = vld [vmem:[%s306 + $0xc8] sm:$0xff]
        %v943 = vld [vmem:[%s306 + $0xd0] sm:$0xff]
        %v944 = vld [vmem:[%s306 + $0xd8] sm:$0xff]
        %v945 = vld [vmem:[%s306 + $0xe0] sm:$0xff]
        %v946 = vld [vmem:[%s306 + $0xe8] sm:$0xff]
        %v947 = vld [vmem:[%s306 + $0xf0] sm:$0xff]
        %v948 = vld [vmem:[%s306 + $0xf8] sm:$0xff]
        %v949 = vld [vmem:[%s295] sm:$0x1]
        %v951 = vlaneseq
        %v952 = vshrl.u32 %v951, 7
        %v953 = vsub.s32 0, %v952
        %v954 = vrot.slane %v949, %v953
        %v956 = vmul.f32 %v917, %v954
        %v957 = vmul.f32 %v918, %v954
        %v958 = vmul.f32 %v919, %v954
        %v959 = vmul.f32 %v920, %v954
        %v960 = vmul.f32 %v921, %v954
        %v961 = vmul.f32 %v922, %v954
        %v962 = vmul.f32 %v923, %v954
        %v963 = vmul.f32 %v924, %v954
        %v964 = vmul.f32 %v925, %v954
        %v965 = vmul.f32 %v926, %v954
        %v966 = vmul.f32 %v927, %v954
        %v967 = vmul.f32 %v928, %v954
        %v968 = vmul.f32 %v929, %v954
        %v969 = vmul.f32 %v930, %v954
        %v970 = vmul.f32 %v931, %v954
        %v971 = vmul.f32 %v932, %v954
        %v972 = vmul.f32 %v933, %v954
        %v973 = vmul.f32 %v934, %v954
        %v974 = vmul.f32 %v935, %v954
        %v975 = vmul.f32 %v936, %v954
        %v976 = vmul.f32 %v937, %v954
        %v977 = vmul.f32 %v938, %v954
        %v978 = vmul.f32 %v939, %v954
        %v979 = vmul.f32 %v940, %v954
        %v980 = vmul.f32 %v941, %v954
        %v981 = vmul.f32 %v942, %v954
        %v982 = vmul.f32 %v943, %v954
        %v983 = vmul.f32 %v944, %v954
        %v984 = vmul.f32 %v945, %v954
        %v985 = vmul.f32 %v946, %v954
        %v986 = vmul.f32 %v947, %v954
        %v987 = vmul.f32 %v948, %v954
        %v988 = vld [vmem:[%s298] sm:$0x1]
        %v990 = vlaneseq
        %v991 = vshrl.u32 %v990, 7
        %v992 = vsub.s32 0, %v991
        %v993 = vrot.slane %v988, %v992
        %v995 = vadd.f32 %v956, %v993
        %v996 = vadd.f32 %v957, %v993
        %v997 = vadd.f32 %v958, %v993
        %v998 = vadd.f32 %v959, %v993
        %v999 = vadd.f32 %v960, %v993
        %v1000 = vadd.f32 %v961, %v993
        %v1001 = vadd.f32 %v962, %v993
        %v1002 = vadd.f32 %v963, %v993
        %v1003 = vadd.f32 %v964, %v993
        %v1004 = vadd.f32 %v965, %v993
        %v1005 = vadd.f32 %v966, %v993
        %v1006 = vadd.f32 %v967, %v993
        %v1007 = vadd.f32 %v968, %v993
        %v1008 = vadd.f32 %v969, %v993
        %v1009 = vadd.f32 %v970, %v993
        %v1010 = vadd.f32 %v971, %v993
        %v1011 = vadd.f32 %v972, %v993
        %v1012 = vadd.f32 %v973, %v993
        %v1013 = vadd.f32 %v974, %v993
        %v1014 = vadd.f32 %v975, %v993
        %v1015 = vadd.f32 %v976, %v993
        %v1016 = vadd.f32 %v977, %v993
        %v1017 = vadd.f32 %v978, %v993
        %v1018 = vadd.f32 %v979, %v993
        %v1019 = vadd.f32 %v980, %v993
        %v1020 = vadd.f32 %v981, %v993
        %v1021 = vadd.f32 %v982, %v993
        %v1022 = vadd.f32 %v983, %v993
        %v1023 = vadd.f32 %v984, %v993
        %v1024 = vadd.f32 %v985, %v993
        %v1025 = vadd.f32 %v986, %v993
        %v1026 = vadd.f32 %v987, %v993
        %v1027 = vmax.f32 %v995, 0.0
        %v1028 = vmax.f32 %v996, 0.0
        %v1029 = vmax.f32 %v997, 0.0
        %v1030 = vmax.f32 %v998, 0.0
        %v1031 = vmax.f32 %v999, 0.0
        %v1032 = vmax.f32 %v1000, 0.0
        %v1033 = vmax.f32 %v1001, 0.0
        %v1034 = vmax.f32 %v1002, 0.0
        %v1035 = vmax.f32 %v1003, 0.0
        %v1036 = vmax.f32 %v1004, 0.0
        %v1037 = vmax.f32 %v1005, 0.0
        %v1038 = vmax.f32 %v1006, 0.0
        %v1039 = vmax.f32 %v1007, 0.0
        %v1040 = vmax.f32 %v1008, 0.0
        %v1041 = vmax.f32 %v1009, 0.0
        %v1042 = vmax.f32 %v1010, 0.0
        %v1043 = vmax.f32 %v1011, 0.0
        %v1044 = vmax.f32 %v1012, 0.0
        %v1045 = vmax.f32 %v1013, 0.0
        %v1046 = vmax.f32 %v1014, 0.0
        %v1047 = vmax.f32 %v1015, 0.0
        %v1048 = vmax.f32 %v1016, 0.0
        %v1049 = vmax.f32 %v1017, 0.0
        %v1050 = vmax.f32 %v1018, 0.0
        %v1051 = vmax.f32 %v1019, 0.0
        %v1052 = vmax.f32 %v1020, 0.0
        %v1053 = vmax.f32 %v1021, 0.0
        %v1054 = vmax.f32 %v1022, 0.0
        %v1055 = vmax.f32 %v1023, 0.0
        %v1056 = vmax.f32 %v1024, 0.0
        %v1057 = vmax.f32 %v1025, 0.0
        %v1058 = vmax.f32 %v1026, 0.0
        %1059 = vst [vmem:[%s306] sm:$0xff] %v1027
        %1060 = vst [vmem:[%s306 + $0x8] sm:$0xff] %v1028
        %1061 = vst [vmem:[%s306 + $0x10] sm:$0xff] %v1029
        %1062 = vst [vmem:[%s306 + $0x18] sm:$0xff] %v1030
        %1063 = vst [vmem:[%s306 + $0x20] sm:$0xff] %v1031
        %1064 = vst [vmem:[%s306 + $0x28] sm:$0xff] %v1032
        %1065 = vst [vmem:[%s306 + $0x30] sm:$0xff] %v1033
        %1066 = vst [vmem:[%s306 + $0x38] sm:$0xff] %v1034
        %1067 = vst [vmem:[%s306 + $0x40] sm:$0xff] %v1035
        %1068 = vst [vmem:[%s306 + $0x48] sm:$0xff] %v1036
        %1069 = vst [vmem:[%s306 + $0x50] sm:$0xff] %v1037
        %1070 = vst [vmem:[%s306 + $0x58] sm:$0xff] %v1038
        %1071 = vst [vmem:[%s306 + $0x60] sm:$0xff] %v1039
        %1072 = vst [vmem:[%s306 + $0x68] sm:$0xff] %v1040
        %1073 = vst [vmem:[%s306 + $0x70] sm:$0xff] %v1041
        %1074 = vst [vmem:[%s306 + $0x78] sm:$0xff] %v1042
        %1075 = vst [vmem:[%s306 + $0x80] sm:$0xff] %v1043
        %1076 = vst [vmem:[%s306 + $0x88] sm:$0xff] %v1044
        %1077 = vst [vmem:[%s306 + $0x90] sm:$0xff] %v1045
        %1078 = vst [vmem:[%s306 + $0x98] sm:$0xff] %v1046
        %1079 = vst [vmem:[%s306 + $0xa0] sm:$0xff] %v1047
        %1080 = vst [vmem:[%s306 + $0xa8] sm:$0xff] %v1048
        %1081 = vst [vmem:[%s306 + $0xb0] sm:$0xff] %v1049
        %1082 = vst [vmem:[%s306 + $0xb8] sm:$0xff] %v1050
        %1083 = vst [vmem:[%s306 + $0xc0] sm:$0xff] %v1051
        %1084 = vst [vmem:[%s306 + $0xc8] sm:$0xff] %v1052
        %1085 = vst [vmem:[%s306 + $0xd0] sm:$0xff] %v1053
        %1086 = vst [vmem:[%s306 + $0xd8] sm:$0xff] %v1054
        %1087 = vst [vmem:[%s306 + $0xe0] sm:$0xff] %v1055
        %1088 = vst [vmem:[%s306 + $0xe8] sm:$0xff] %v1056
        %1089 = vst [vmem:[%s306 + $0xf0] sm:$0xff] %v1057
        %1090 = vst [vmem:[%s306 + $0xf8] sm:$0xff] %v1058
      $region48: #{forward.13} parent=35 // pred_fallthru
        _
      %s1091 = smul.u32 32, %s20
      %p1092 = scmp.lt.s32.totalorder %s1091, 63
      %s1093 = scalar_select %p1092, %s1091, 63
      %p1094 = scmp.lt.s32.totalorder %s21, 0
      %s1095 = scalar_select %p1094, %s21, 0
      %s1096 = sadd.s32 %s1095, %s1093
      %s1097 = smul.addr %s1096, 8
      %s1098 = scalar_lea.vmem %s4, %s1097
      // Predicated region
      $region49: #{forward.13} parent=35 // pred_check
        %p1099 = pneg %p162
      $region50: #{forward.13} parent=35 // pred_check_branch
        %1101 = sbr.rel (%p1099) target = $region52
      $region51: #{forward.13} parent=35 // pred_region
        %s1102 = smul.u32 32, %s20
      $region52: #{forward.13} parent=35 // pred_fallthru
        _
    $region36: #{forward.13} parent=5 // pred_fallthru
      _
    %p1103 = scmp.le.s32.totalorder 2, %s10
    // Predicated region
    $region53: #{forward.13} parent=5 // pred_check
      %p1104 = pneg %p1103
    $region54: #{forward.13} parent=5 // pred_check_branch
      %1106 = sbr.rel (%p1104) target = $region56
    $region55: #{forward.13} parent=5 // pred_region
      %s1107 = ssub.s32 %s10, 2
      // Predicated region
      $region57: #{forward.13} parent=55 // pred_check
        %p1108 = pneg %p168
      $region58: #{forward.13} parent=55 // pred_check_branch
        %1110 = sbr.rel (%p1108) target = $region60
      $region59: #{forward.13} parent=55 // pred_region
        %s1111 = smul.u32 32, %s23
        %p1112 = scmp.lt.s32.totalorder %s1111, 63
        %s1113 = scalar_select %p1112, %s1111, 63
        %p1114 = scmp.lt.s32.totalorder %s24, 0
        %s1115 = scalar_select %p1114, %s24, 0
        %s1116 = sadd.s32 %s1115, %s1113
        %s1117 = smul.addr %s1116, 8
        %s1118 = scalar_lea.vmem %s4, %s1117
      $region60: #{forward.13} parent=55 // pred_fallthru
        _
    $region56: #{forward.13} parent=5 // pred_fallthru
      _
  $region6: #{forward.13} parent=0 // loop_footer
    %s14 = sadd.s32 1, %s10
  $region7: #{forward.13} parent=0 // loop_footer_branch
    %9 = sbr.rel target = $region3
  $region8: #{forward.13} parent=0 // loop_exit
    _

// kernel: forward.14
$region0: #{forward.14}
  #allocation0 [shape = 'u32[]', space=smem, size = 0x4, offset = 0x4, fixed_abs, tag = 'smem constant byte address 0x4 - core index']
  #allocation1 [shape = 'u32[144,128]{1,0:T(1,128)}', space=vmem, size = 0x12000, scoped, tag = 'internal scratch']
  %s0 = inlined_call_operand.vmem [shape: f32[9,16,128], index: 0, kind: input, shape index: {}]
  %s1 = inlined_call_operand.vmem [shape: f32[16,128], index: 1, kind: output, shape index: {}]
  %s2 = sld [smem:[#allocation0]]
  $region14: #{forward.14} parent=0
    _
  %s4 = ssub.s32 1, %s2
  %s5 = scalar_select 0, %s4, %s2
  // Predicated region
  $region2: #{forward.14} parent=0 // pred_check
    _
  $region3: #{forward.14} parent=0 // pred_check_branch
    %7 = sbr.rel (0) target = $region5
  $region4: #{forward.14} parent=0 // pred_region
    _
  $region5: #{forward.14} parent=0 // pred_fallthru
    _
  %v8 = vld [vmem:[%s0] sm:$0xff]
  %v9 = vld [vmem:[%s0 + $0x8] sm:$0xff]
  %v10 = vld [vmem:[%s0 + $0x10] sm:$0xff]
  %v11 = vld [vmem:[%s0 + $0x18] sm:$0xff]
  %v12 = vld [vmem:[%s0 + $0x20] sm:$0xff]
  %v13 = vld [vmem:[%s0 + $0x28] sm:$0xff]
  %v14 = vld [vmem:[%s0 + $0x30] sm:$0xff]
  %v15 = vld [vmem:[%s0 + $0x38] sm:$0xff]
  %v16 = vld [vmem:[%s0 + $0x40] sm:$0xff]
  %v17 = vld [vmem:[%s0 + $0x48] sm:$0xff]
  %v18 = vld [vmem:[%s0 + $0x50] sm:$0xff]
  %v19 = vld [vmem:[%s0 + $0x58] sm:$0xff]
  %v20 = vld [vmem:[%s0 + $0x60] sm:$0xff]
  %v21 = vld [vmem:[%s0 + $0x68] sm:$0xff]
  %v22 = vld [vmem:[%s0 + $0x70] sm:$0xff]
  %v23 = vld [vmem:[%s0 + $0x78] sm:$0xff]
  %v24 = vld [vmem:[%s0 + $0x80] sm:$0xff]
  %v25 = vld [vmem:[%s0 + $0x88] sm:$0xff]
  %v26 = vmax.f32 %v8, %v12
  %v27 = vmax.f32 %v10, %v14
  %v28 = vmax.f32 %v26, %v16
  %v29 = vmax.f32 %v27, %v18
  %v30 = vmax.f32 %v28, %v20
  %v31 = vmax.f32 %v29, %v22
  %v32 = vmax.f32 %v30, %v24
  %v33 = vmax.f32 %v32, %v31
  %v34 = vmax.f32 %v9, %v13
  %v35 = vmax.f32 %v11, %v15
  %v36 = vmax.f32 %v34, %v17
  %v37 = vmax.f32 %v35, %v19
  %v38 = vmax.f32 %v36, %v21
  %v39 = vmax.f32 %v37, %v23
  %v40 = vmax.f32 %v38, %v25
  %v41 = vmax.f32 %v40, %v39
  %42 = vst [vmem:[%s1] sm:$0xff] %v33
  %43 = vst [vmem:[%s1 + $0x8] sm:$0xff] %v41
  // Predicated region
  $region6: #{forward.14} parent=0 // pred_check
    _
  $region7: #{forward.14} parent=0 // pred_check_branch
    %45 = sbr.rel (0) target = $region9
  $region8: #{forward.14} parent=0 // pred_region
    _
  $region9: #{forward.14} parent=0 // pred_fallthru
    _
  // Predicated region
  $region10: #{forward.14} parent=0 // pred_check
    _
  $region11: #{forward.14} parent=0 // pred_check_branch
    %47 = sbr.rel (0) target = $region13
  $region12: #{forward.14} parent=0 // pred_region
    _
  $region13: #{forward.14} parent=0 // pred_fallthru
    _

// kernel: forward.15
$region0: #{forward.15}
  #allocation0 [shape = 'u32[]', space=smem, size = 0x4, offset = 0x4, fixed_abs, tag = 'smem constant byte address 0x4 - core index']
  #allocation1 [shape = 'u32[144,128]{1,0:T(1,128)}', space=vmem, size = 0x12000, scoped, tag = 'internal scratch']
  %s0 = inlined_call_operand.vmem [shape: bf16[128,16], index: 0, kind: input, shape index: {}]
  %s1 = inlined_call_operand.vmem [shape: bf16[16,128], index: 1, kind: input, shape index: {}]
  %s2 = inlined_call_operand.vmem [shape: f32[1,16], index: 2, kind: input, shape index: {}]
  %s3 = inlined_call_operand.vmem [shape: f32[1,16], index: 3, kind: input, shape index: {}]
  %s4 = inlined_call_operand.vmem [shape: f32[1,128], index: 4, kind: input, shape index: {}]
  %s5 = inlined_call_operand.vmem [shape: f32[1,128], index: 5, kind: input, shape index: {}]
  %s6 = inlined_call_operand.vmem [shape: f32[128,128], index: 6, kind: output, shape index: {}]
  %s7 = sld [smem:[#allocation0]]
  $region46: #{forward.15} parent=0
    _
  %s9 = ssub.s32 1, %s7
  %s10 = scalar_select 0, %s9, %s7
  // Predicated region
  $region2: #{forward.15} parent=0 // pred_check
    _
  $region3: #{forward.15} parent=0 // pred_check_branch
    %12 = sbr.rel (0) target = $region5
  $region4: #{forward.15} parent=0 // pred_region
    _
  $region5: #{forward.15} parent=0 // pred_fallthru
    _
  // Predicated region
  $region6: #{forward.15} parent=0 // pred_check
    _
  $region7: #{forward.15} parent=0 // pred_check_branch
    %14 = sbr.rel (0) target = $region9
  $region8: #{forward.15} parent=0 // pred_region
    _
  $region9: #{forward.15} parent=0 // pred_fallthru
    _
  // Predicated region
  $region10: #{forward.15} parent=0 // pred_check
    _
  $region11: #{forward.15} parent=0 // pred_check_branch
    %16 = sbr.rel (0) target = $region13
  $region12: #{forward.15} parent=0 // pred_region
    _
  $region13: #{forward.15} parent=0 // pred_fallthru
    _
  // Predicated region
  $region14: #{forward.15} parent=0 // pred_check
    _
  $region15: #{forward.15} parent=0 // pred_check_branch
    %18 = sbr.rel (0) target = $region17
  $region16: #{forward.15} parent=0 // pred_region
    _
  $region17: #{forward.15} parent=0 // pred_fallthru
    _
  // Predicated region
  $region18: #{forward.15} parent=0 // pred_check
    _
  $region19: #{forward.15} parent=0 // pred_check_branch
    %20 = sbr.rel (0) target = $region21
  $region20: #{forward.15} parent=0 // pred_region
    _
  $region21: #{forward.15} parent=0 // pred_fallthru
    _
  // Predicated region
  $region22: #{forward.15} parent=0 // pred_check
    _
  $region23: #{forward.15} parent=0 // pred_check_branch
    %22 = sbr.rel (0) target = $region25
  $region24: #{forward.15} parent=0 // pred_region
    _
  $region25: #{forward.15} parent=0 // pred_fallthru
    _
  %v24 = vld [vmem:[%s0] sm:$0xf]
  %v25 = vld [vmem:[%s0 + $0x4] sm:$0xf]
  %v26 = vld [vmem:[%s0 + $0x8] sm:$0xf]
  %v27 = vld [vmem:[%s0 + $0xc] sm:$0xf]
  %v28 = vld [vmem:[%s0 + $0x10] sm:$0xf]
  %v29 = vld [vmem:[%s0 + $0x14] sm:$0xf]
  %v30 = vld [vmem:[%s0 + $0x18] sm:$0xf]
  %v31 = vld [vmem:[%s0 + $0x1c] sm:$0xf]
  %v32 = vld [vmem:[%s0 + $0x20] sm:$0xf]
  %v33 = vld [vmem:[%s0 + $0x24] sm:$0xf]
  %v34 = vld [vmem:[%s0 + $0x28] sm:$0xf]
  %v35 = vld [vmem:[%s0 + $0x2c] sm:$0xf]
  %v36 = vld [vmem:[%s0 + $0x30] sm:$0xf]
  %v37 = vld [vmem:[%s0 + $0x34] sm:$0xf]
  %v38 = vld [vmem:[%s0 + $0x38] sm:$0xf]
  %v39 = vld [vmem:[%s0 + $0x3c] sm:$0xf]
  %v40 = vunpack.c.l.bf16 %v24
  %v41 = vunpack.c.l.bf16 %v25
  %v42 = vunpack.c.l.bf16 %v26
  %v43 = vunpack.c.l.bf16 %v27
  %v44 = vunpack.c.l.bf16 %v28
  %v45 = vunpack.c.l.bf16 %v29
  %v46 = vunpack.c.l.bf16 %v30
  %v47 = vunpack.c.l.bf16 %v31
  %v48 = vunpack.c.l.bf16 %v32
  %v49 = vunpack.c.l.bf16 %v33
  %v50 = vunpack.c.l.bf16 %v34
  %v51 = vunpack.c.l.bf16 %v35
  %v52 = vunpack.c.l.bf16 %v36
  %v53 = vunpack.c.l.bf16 %v37
  %v54 = vunpack.c.l.bf16 %v38
  %v55 = vunpack.c.l.bf16 %v39
  %v56 = vld [vmem:[%s2] sm:$0x1]
  %v58 = vlaneseq
  %v59 = vshrl.u32 %v58, 7
  %v60 = vsub.s32 0, %v59
  %v61 = vrot.slane %v56, %v60
  %v63 = vmul.f32 %v40, %v61
  %v64 = vmul.f32 %v41, %v61
  %v65 = vmul.f32 %v42, %v61
  %v66 = vmul.f32 %v43, %v61
  %v67 = vmul.f32 %v44, %v61
  %v68 = vmul.f32 %v45, %v61
  %v69 = vmul.f32 %v46, %v61
  %v70 = vmul.f32 %v47, %v61
  %v71 = vmul.f32 %v48, %v61
  %v72 = vmul.f32 %v49, %v61
  %v73 = vmul.f32 %v50, %v61
  %v74 = vmul.f32 %v51, %v61
  %v75 = vmul.f32 %v52, %v61
  %v76 = vmul.f32 %v53, %v61
  %v77 = vmul.f32 %v54, %v61
  %v78 = vmul.f32 %v55, %v61
  %v79 = vld [vmem:[%s3] sm:$0x1]
  %v81 = vlaneseq
  %v82 = vshrl.u32 %v81, 7
  %v83 = vsub.s32 0, %v82
  %v84 = vrot.slane %v79, %v83
  %v86 = vadd.f32 %v63, %v84
  %v87 = vadd.f32 %v64, %v84
  %v88 = vadd.f32 %v65, %v84
  %v89 = vadd.f32 %v66, %v84
  %v90 = vadd.f32 %v67, %v84
  %v91 = vadd.f32 %v68, %v84
  %v92 = vadd.f32 %v69, %v84
  %v93 = vadd.f32 %v70, %v84
  %v94 = vadd.f32 %v71, %v84
  %v95 = vadd.f32 %v72, %v84
  %v96 = vadd.f32 %v73, %v84
  %v97 = vadd.f32 %v74, %v84
  %v98 = vadd.f32 %v75, %v84
  %v99 = vadd.f32 %v76, %v84
  %v100 = vadd.f32 %v77, %v84
  %v101 = vadd.f32 %v78, %v84
  %v102 = vmax.f32 %v86, 0.0
  %v103 = vmax.f32 %v87, 0.0
  %v104 = vmax.f32 %v88, 0.0
  %v105 = vmax.f32 %v89, 0.0
  %v106 = vmax.f32 %v90, 0.0
  %v107 = vmax.f32 %v91, 0.0
  %v108 = vmax.f32 %v92, 0.0
  %v109 = vmax.f32 %v93, 0.0
  %v110 = vmax.f32 %v94, 0.0
  %v111 = vmax.f32 %v95, 0.0
  %v112 = vmax.f32 %v96, 0.0
  %v113 = vmax.f32 %v97, 0.0
  %v114 = vmax.f32 %v98, 0.0
  %v115 = vmax.f32 %v99, 0.0
  %v116 = vmax.f32 %v100, 0.0
  %v117 = vmax.f32 %v101, 0.0
  %v118 = vpack.c.bf16 %v103, %v102
  %v119 = vpack.c.bf16 %v105, %v104
  %v120 = vpack.c.bf16 %v107, %v106
  %v121 = vpack.c.bf16 %v109, %v108
  %v122 = vpack.c.bf16 %v111, %v110
  %v123 = vpack.c.bf16 %v113, %v112
  %v124 = vpack.c.bf16 %v115, %v114
  %v125 = vpack.c.bf16 %v117, %v116
  %v126 = vld [vmem:[%s1] sm:$0xf]
  %v127 = vld [vmem:[%s1 + $0x4] sm:$0xf]
  %v130 = vunpack.c.l.b16 %v126
  %v131 = vunpack.c.l.b16 %v127
  %v132 = vpack.c.b16 %v131, %v130
  %vm134 = vcmask 130048
  %v136 = vsel %vm134, %v118, 0
  %v139 = vsel %vm134, %v119, 0
  %v142 = vsel %vm134, %v120, 0
  %v145 = vsel %vm134, %v121, 0
  %v148 = vsel %vm134, %v122, 0
  %v151 = vsel %vm134, %v123, 0
  %v154 = vsel %vm134, %v124, 0
  %v157 = vsel %vm134, %v125, 0
  %159 = vmatprep.subr.bf16.mxu0 0
  %160 = vmatpush1.bf16.msra.mxu0 %v132
  %161 = vmatprep.subr.bf16.mxu0 0
  %162 = vmatpush1.bf16.msra.mxu0 0
  %163 = vmatprep.subr.bf16.mxu0 0
  %164 = vmatpush1.bf16.msra.mxu0 0
  %165 = vmatprep.subr.bf16.mxu0 0
  %166 = vmatpush1.bf16.msra.mxu0 0
  %167 = vmatprep.subr.bf16.mxu0 0
  %168 = vmatpush1.bf16.msra.mxu0 0
  %169 = vmatprep.subr.bf16.mxu0 0
  %170 = vmatpush1.bf16.msra.mxu0 0
  %171 = vmatprep.subr.bf16.mxu0 0
  %172 = vmatpush1.bf16.msra.mxu0 0
  %173 = vmatprep.subr.bf16.mxu0 0
  %174 = vmatpush1.bf16.msra.mxu0 0
  %175 = vmatprep.subr.bf16.mxu0 0
  %176 = vmatpush1.bf16.msra.mxu0 0
  %177 = vmatprep.subr.bf16.mxu0 0
  %178 = vmatpush1.bf16.msra.mxu0 0
  %179 = vmatprep.subr.bf16.mxu0 0
  %180 = vmatpush1.bf16.msra.mxu0 0
  %181 = vmatprep.subr.bf16.mxu0 0
  %182 = vmatpush1.bf16.msra.mxu0 0
  %183 = vmatprep.subr.bf16.mxu0 0
  %184 = vmatpush1.bf16.msra.mxu0 0
  %185 = vmatprep.subr.bf16.mxu0 0
  %186 = vmatpush1.bf16.msra.mxu0 0
  %187 = vmatprep.subr.bf16.mxu0 0
  %188 = vmatpush1.bf16.msra.mxu0 0
  %189 = vmatprep.subr.bf16.mxu0 0
  %190 = vmatpush1.bf16.msra.mxu0 0
  %191 = vmatprep.mubr.bf16.mxu0 0
  %192 = vmatmul.mubr.bf16.gmra.mrb[0].mxu0 %v136
  %v193 = vpop.f32.mrb[0].mxu0
  %v194 = vadd.f32 0.0, %v193
  %v195 = vpop.f32.mrb[0].mxu0
  %v196 = vpop.f32.mrb[0].mxu0
  %v197 = vadd.f32 0.0, %v196
  %v198 = vpop.f32.mrb[0].mxu0
  %199 = vmatprep.mubr.bf16.mxu0 0
  %200 = vmatmul.mubr.bf16.gmra.mrb[0].mxu0 %v139
  %v201 = vpop.f32.mrb[0].mxu0
  %v202 = vadd.f32 0.0, %v201
  %v203 = vpop.f32.mrb[0].mxu0
  %v204 = vpop.f32.mrb[0].mxu0
  %v205 = vadd.f32 0.0, %v204
  %v206 = vpop.f32.mrb[0].mxu0
  %207 = vmatprep.mubr.bf16.mxu0 0
  %208 = vmatmul.mubr.bf16.gmra.mrb[0].mxu0 %v142
  %v209 = vpop.f32.mrb[0].mxu0
  %v210 = vadd.f32 0.0, %v209
  %v211 = vpop.f32.mrb[0].mxu0
  %v212 = vpop.f32.mrb[0].mxu0
  %v213 = vadd.f32 0.0, %v212
  %v214 = vpop.f32.mrb[0].mxu0
  %215 = vmatprep.mubr.bf16.mxu0 0
  %216 = vmatmul.mubr.bf16.gmra.mrb[0].mxu0 %v145
  %v217 = vpop.f32.mrb[0].mxu0
  %v218 = vadd.f32 0.0, %v217
  %v219 = vpop.f32.mrb[0].mxu0
  %v220 = vpop.f32.mrb[0].mxu0
  %v221 = vadd.f32 0.0, %v220
  %v222 = vpop.f32.mrb[0].mxu0
  %223 = vmatprep.mubr.bf16.mxu0 0
  %224 = vmatmul.mubr.bf16.gmra.mrb[0].mxu0 %v148
  %v225 = vpop.f32.mrb[0].mxu0
  %v226 = vadd.f32 0.0, %v225
  %v227 = vpop.f32.mrb[0].mxu0
  %v228 = vpop.f32.mrb[0].mxu0
  %v229 = vadd.f32 0.0, %v228
  %v230 = vpop.f32.mrb[0].mxu0
  %231 = vmatprep.mubr.bf16.mxu0 0
  %232 = vmatmul.mubr.bf16.gmra.mrb[0].mxu0 %v151
  %v233 = vpop.f32.mrb[0].mxu0
  %v234 = vadd.f32 0.0, %v233
  %v235 = vpop.f32.mrb[0].mxu0
  %v236 = vpop.f32.mrb[0].mxu0
  %v237 = vadd.f32 0.0, %v236
  %v238 = vpop.f32.mrb[0].mxu0
  %239 = vmatprep.mubr.bf16.mxu0 0
  %240 = vmatmul.mubr.bf16.gmra.mrb[0].mxu0 %v154
  %v241 = vpop.f32.mrb[0].mxu0
  %v242 = vadd.f32 0.0, %v241
  %v243 = vpop.f32.mrb[0].mxu0
  %v244 = vpop.f32.mrb[0].mxu0
  %v245 = vadd.f32 0.0, %v244
  %v246 = vpop.f32.mrb[0].mxu0
  %247 = vmatprep.mubr.bf16.mxu0 0
  %248 = vmatmul.mubr.bf16.gmra.mrb[0].mxu0 %v157
  %v249 = vpop.f32.mrb[0].mxu0
  %v250 = vadd.f32 0.0, %v249
  %v251 = vpop.f32.mrb[0].mxu0
  %v252 = vpop.f32.mrb[0].mxu0
  %v253 = vadd.f32 0.0, %v252
  %v254 = vpop.f32.mrb[0].mxu0
  %255 = vdwg.mxu0
  %p256 = scmp.eq.s32.totalorder 0, 0
  // Predicated region
  $region26: #{forward.15} parent=0 // pred_check
    %p257 = pneg %p256
  $region27: #{forward.15} parent=0 // pred_check_branch
    %259 = sbr.rel (%p257) target = $region29
  $region28: #{forward.15} parent=0 // pred_region
    %260 = vst [vmem:[%s6] sm:$0xff] %v194
    %261 = vst [vmem:[%s6 + $0x8] sm:$0xff] %v197
    %262 = vst [vmem:[%s6 + $0x10] sm:$0xff] %v202
    %263 = vst [vmem:[%s6 + $0x18] sm:$0xff] %v205
    %264 = vst [vmem:[%s6 + $0x20] sm:$0xff] %v210
    %265 = vst [vmem:[%s6 + $0x28] sm:$0xff] %v213
    %266 = vst [vmem:[%s6 + $0x30] sm:$0xff] %v218
    %267 = vst [vmem:[%s6 + $0x38] sm:$0xff] %v221
    %268 = vst [vmem:[%s6 + $0x40] sm:$0xff] %v226
    %269 = vst [vmem:[%s6 + $0x48] sm:$0xff] %v229
    %270 = vst [vmem:[%s6 + $0x50] sm:$0xff] %v234
    %271 = vst [vmem:[%s6 + $0x58] sm:$0xff] %v237
    %272 = vst [vmem:[%s6 + $0x60] sm:$0xff] %v242
    %273 = vst [vmem:[%s6 + $0x68] sm:$0xff] %v245
    %274 = vst [vmem:[%s6 + $0x70] sm:$0xff] %v250
    %275 = vst [vmem:[%s6 + $0x78] sm:$0xff] %v253
  $region29: #{forward.15} parent=0 // pred_fallthru
    _
  %p276 = scmp.gt.s32.totalorder 0, 0
  // Predicated region
  $region30: #{forward.15} parent=0 // pred_check
    %p277 = pneg %p276
  $region31: #{forward.15} parent=0 // pred_check_branch
    %279 = sbr.rel (%p277) target = $region33
  $region32: #{forward.15} parent=0 // pred_region
    %v280 = vld [vmem:[%s6] sm:$0xff]
    %v281 = vld [vmem:[%s6 + $0x8] sm:$0xff]
    %v282 = vld [vmem:[%s6 + $0x10] sm:$0xff]
    %v283 = vld [vmem:[%s6 + $0x18] sm:$0xff]
    %v284 = vld [vmem:[%s6 + $0x20] sm:$0xff]
    %v285 = vld [vmem:[%s6 + $0x28] sm:$0xff]
    %v286 = vld [vmem:[%s6 + $0x30] sm:$0xff]
    %v287 = vld [vmem:[%s6 + $0x38] sm:$0xff]
    %v288 = vld [vmem:[%s6 + $0x40] sm:$0xff]
    %v289 = vld [vmem:[%s6 + $0x48] sm:$0xff]
    %v290 = vld [vmem:[%s6 + $0x50] sm:$0xff]
    %v291 = vld [vmem:[%s6 + $0x58] sm:$0xff]
    %v292 = vld [vmem:[%s6 + $0x60] sm:$0xff]
    %v293 = vld [vmem:[%s6 + $0x68] sm:$0xff]
    %v294 = vld [vmem:[%s6 + $0x70] sm:$0xff]
    %v295 = vld [vmem:[%s6 + $0x78] sm:$0xff]
    %v296 = vadd.f32 %v280, %v194
    %v297 = vadd.f32 %v281, %v197
    %v298 = vadd.f32 %v282, %v202
    %v299 = vadd.f32 %v283, %v205
    %v300 = vadd.f32 %v284, %v210
    %v301 = vadd.f32 %v285, %v213
    %v302 = vadd.f32 %v286, %v218
    %v303 = vadd.f32 %v287, %v221
    %v304 = vadd.f32 %v288, %v226
    %v305 = vadd.f32 %v289, %v229
    %v306 = vadd.f32 %v290, %v234
    %v307 = vadd.f32 %v291, %v237
    %v308 = vadd.f32 %v292, %v242
    %v309 = vadd.f32 %v293, %v245
    %v310 = vadd.f32 %v294, %v250
    %v311 = vadd.f32 %v295, %v253
    %312 = vst [vmem:[%s6] sm:$0xff] %v296
    %313 = vst [vmem:[%s6 + $0x8] sm:$0xff] %v297
    %314 = vst [vmem:[%s6 + $0x10] sm:$0xff] %v298
    %315 = vst [vmem:[%s6 + $0x18] sm:$0xff] %v299
    %316 = vst [vmem:[%s6 + $0x20] sm:$0xff] %v300
    %317 = vst [vmem:[%s6 + $0x28] sm:$0xff] %v301
    %318 = vst [vmem:[%s6 + $0x30] sm:$0xff] %v302
    %319 = vst [vmem:[%s6 + $0x38] sm:$0xff] %v303
    %320 = vst [vmem:[%s6 + $0x40] sm:$0xff] %v304
    %321 = vst [vmem:[%s6 + $0x48] sm:$0xff] %v305
    %322 = vst [vmem:[%s6 + $0x50] sm:$0xff] %v306
    %323 = vst [vmem:[%s6 + $0x58] sm:$0xff] %v307
    %324 = vst [vmem:[%s6 + $0x60] sm:$0xff] %v308
    %325 = vst [vmem:[%s6 + $0x68] sm:$0xff] %v309
    %326 = vst [vmem:[%s6 + $0x70] sm:$0xff] %v310
    %327 = vst [vmem:[%s6 + $0x78] sm:$0xff] %v311
  $region33: #{forward.15} parent=0 // pred_fallthru
    _
  // Predicated region
  $region34: #{forward.15} parent=0 // pred_check
    %p328 = pneg %p256
  $region35: #{forward.15} parent=0 // pred_check_branch
    %330 = sbr.rel (%p328) target = $region37
  $region36: #{forward.15} parent=0 // pred_region
    %v331 = vld [vmem:[%s6] sm:$0xff]
    %v332 = vld [vmem:[%s6 + $0x8] sm:$0xff]
    %v333 = vld [vmem:[%s6 + $0x10] sm:$0xff]
    %v334 = vld [vmem:[%s6 + $0x18] sm:$0xff]
    %v335 = vld [vmem:[%s6 + $0x20] sm:$0xff]
    %v336 = vld [vmem:[%s6 + $0x28] sm:$0xff]
    %v337 = vld [vmem:[%s6 + $0x30] sm:$0xff]
    %v338 = vld [vmem:[%s6 + $0x38] sm:$0xff]
    %v339 = vld [vmem:[%s6 + $0x40] sm:$0xff]
    %v340 = vld [vmem:[%s6 + $0x48] sm:$0xff]
    %v341 = vld [vmem:[%s6 + $0x50] sm:$0xff]
    %v342 = vld [vmem:[%s6 + $0x58] sm:$0xff]
    %v343 = vld [vmem:[%s6 + $0x60] sm:$0xff]
    %v344 = vld [vmem:[%s6 + $0x68] sm:$0xff]
    %v345 = vld [vmem:[%s6 + $0x70] sm:$0xff]
    %v346 = vld [vmem:[%s6 + $0x78] sm:$0xff]
    %v347 = vld [vmem:[%s4] sm:$0x1]
    %v349 = vlaneseq
    %v350 = vshrl.u32 %v349, 7
    %v351 = vsub.s32 0, %v350
    %v352 = vrot.slane %v347, %v351
    %v354 = vmul.f32 %v331, %v352
    %v355 = vmul.f32 %v332, %v352
    %v356 = vmul.f32 %v333, %v352
    %v357 = vmul.f32 %v334, %v352
    %v358 = vmul.f32 %v335, %v352
    %v359 = vmul.f32 %v336, %v352
    %v360 = vmul.f32 %v337, %v352
    %v361 = vmul.f32 %v338, %v352
    %v362 = vmul.f32 %v339, %v352
    %v363 = vmul.f32 %v340, %v352
    %v364 = vmul.f32 %v341, %v352
    %v365 = vmul.f32 %v342, %v352
    %v366 = vmul.f32 %v343, %v352
    %v367 = vmul.f32 %v344, %v352
    %v368 = vmul.f32 %v345, %v352
    %v369 = vmul.f32 %v346, %v352
    %v370 = vld [vmem:[%s5] sm:$0x1]
    %v372 = vlaneseq
    %v373 = vshrl.u32 %v372, 7
    %v374 = vsub.s32 0, %v373
    %v375 = vrot.slane %v370, %v374
    %v377 = vadd.f32 %v354, %v375
    %v378 = vadd.f32 %v355, %v375
    %v379 = vadd.f32 %v356, %v375
    %v380 = vadd.f32 %v357, %v375
    %v381 = vadd.f32 %v358, %v375
    %v382 = vadd.f32 %v359, %v375
    %v383 = vadd.f32 %v360, %v375
    %v384 = vadd.f32 %v361, %v375
    %v385 = vadd.f32 %v362, %v375
    %v386 = vadd.f32 %v363, %v375
    %v387 = vadd.f32 %v364, %v375
    %v388 = vadd.f32 %v365, %v375
    %v389 = vadd.f32 %v366, %v375
    %v390 = vadd.f32 %v367, %v375
    %v391 = vadd.f32 %v368, %v375
    %v392 = vadd.f32 %v369, %v375
    %v393 = vmax.f32 %v377, 0.0
    %v394 = vmax.f32 %v378, 0.0
    %v395 = vmax.f32 %v379, 0.0
    %v396 = vmax.f32 %v380, 0.0
    %v397 = vmax.f32 %v381, 0.0
    %v398 = vmax.f32 %v382, 0.0
    %v399 = vmax.f32 %v383, 0.0
    %v400 = vmax.f32 %v384, 0.0
    %v401 = vmax.f32 %v385, 0.0
    %v402 = vmax.f32 %v386, 0.0
    %v403 = vmax.f32 %v387, 0.0
    %v404 = vmax.f32 %v388, 0.0
    %v405 = vmax.f32 %v389, 0.0
    %v406 = vmax.f32 %v390, 0.0
    %v407 = vmax.f32 %v391, 0.0
    %v408 = vmax.f32 %v392, 0.0
    %409 = vst [vmem:[%s6] sm:$0xff] %v393
    %410 = vst [vmem:[%s6 + $0x8] sm:$0xff] %v394
    %411 = vst [vmem:[%s6 + $0x10] sm:$0xff] %v395
    %412 = vst [vmem:[%s6 + $0x18] sm:$0xff] %v396
    %413 = vst [vmem:[%s6 + $0x20] sm:$0xff] %v397
    %414 = vst [vmem:[%s6 + $0x28] sm:$0xff] %v398
    %415 = vst [vmem:[%s6 + $0x30] sm:$0xff] %v399
    %416 = vst [vmem:[%s6 + $0x38] sm:$0xff] %v400
    %417 = vst [vmem:[%s6 + $0x40] sm:$0xff] %v401
    %418 = vst [vmem:[%s6 + $0x48] sm:$0xff] %v402
    %419 = vst [vmem:[%s6 + $0x50] sm:$0xff] %v403
    %420 = vst [vmem:[%s6 + $0x58] sm:$0xff] %v404
    %421 = vst [vmem:[%s6 + $0x60] sm:$0xff] %v405
    %422 = vst [vmem:[%s6 + $0x68] sm:$0xff] %v406
    %423 = vst [vmem:[%s6 + $0x70] sm:$0xff] %v407
    %424 = vst [vmem:[%s6 + $0x78] sm:$0xff] %v408
  $region37: #{forward.15} parent=0 // pred_fallthru
    _
  // Predicated region
  $region38: #{forward.15} parent=0 // pred_check
    _
  $region39: #{forward.15} parent=0 // pred_check_branch
    %426 = sbr.rel (0) target = $region41
  $region40: #{forward.15} parent=0 // pred_region
    _
  $region41: #{forward.15} parent=0 // pred_fallthru
    _
  // Predicated region
  $region42: #{forward.15} parent=0 // pred_check
    _
  $region43: #{forward.15} parent=0 // pred_check_branch
    %428 = sbr.rel (0) target = $region45
  $region44: #{forward.15} parent=0 // pred_region
    _
  $region45: #{forward.15} parent=0 // pred_fallthru
    _

// kernel: forward.16
$region0: #{forward.16}
  #allocation0 [shape = 'u32[]', space=smem, size = 0x4, offset = 0x4, fixed_abs, tag = 'smem constant byte address 0x4 - core index']
  #allocation1 [shape = 'u32[144,128]{1,0:T(1,128)}', space=vmem, size = 0x12000, scoped, tag = 'internal scratch']
  %s0 = inlined_call_operand.vmem [shape: bf16[128,144], index: 0, kind: input, shape index: {}]
  %s1 = inlined_call_operand.vmem [shape: bf16[144,128], index: 1, kind: input, shape index: {}]
  %s2 = inlined_call_operand.vmem [shape: f32[128,128], index: 2, kind: output, shape index: {}]
  %s3 = sld [smem:[#allocation0]]
  $region26: #{forward.16} parent=0
    _
  %s5 = ssub.s32 1, %s3
  %s6 = scalar_select 0, %s5, %s3
  // Predicated region
  $region2: #{forward.16} parent=0 // pred_check
    _
  $region3: #{forward.16} parent=0 // pred_check_branch
    %8 = sbr.rel (0) target = $region5
  $region4: #{forward.16} parent=0 // pred_region
    _
  $region5: #{forward.16} parent=0 // pred_fallthru
    _
  // Predicated region
  $region6: #{forward.16} parent=0 // pred_check
    _
  $region7: #{forward.16} parent=0 // pred_check_branch
    %10 = sbr.rel (0) target = $region9
  $region8: #{forward.16} parent=0 // pred_region
    _
  $region9: #{forward.16} parent=0 // pred_fallthru
    _
  %v12 = vld [vmem:[%s0] sm:$0xff]
  %v13 = vld [vmem:[%s0 + $0x8] sm:$0xff]
  %v14 = vld [vmem:[%s0 + $0x10] sm:$0xff]
  %v15 = vld [vmem:[%s0 + $0x18] sm:$0xff]
  %v16 = vld [vmem:[%s0 + $0x20] sm:$0xff]
  %v17 = vld [vmem:[%s0 + $0x28] sm:$0xff]
  %v18 = vld [vmem:[%s0 + $0x30] sm:$0xff]
  %v19 = vld [vmem:[%s0 + $0x38] sm:$0xff]
  %v20 = vld [vmem:[%s0 + $0x40] sm:$0xff]
  %v21 = vld [vmem:[%s0 + $0x48] sm:$0xff]
  %v22 = vld [vmem:[%s0 + $0x50] sm:$0xff]
  %v23 = vld [vmem:[%s0 + $0x58] sm:$0xff]
  %v24 = vld [vmem:[%s0 + $0x60] sm:$0xff]
  %v25 = vld [vmem:[%s0 + $0x68] sm:$0xff]
  %v26 = vld [vmem:[%s0 + $0x70] sm:$0xff]
  %v27 = vld [vmem:[%s0 + $0x78] sm:$0xff]
  %v28 = vld [vmem:[%s1] sm:$0xf]
  %v29 = vld [vmem:[%s1 + $0x4] sm:$0xf]
  %v30 = vld [vmem:[%s1 + $0x8] sm:$0xf]
  %v31 = vld [vmem:[%s1 + $0xc] sm:$0xf]
  %v32 = vld [vmem:[%s1 + $0x10] sm:$0xf]
  %v33 = vld [vmem:[%s1 + $0x14] sm:$0xf]
  %v34 = vld [vmem:[%s1 + $0x18] sm:$0xf]
  %v35 = vld [vmem:[%s1 + $0x1c] sm:$0xf]
  %v36 = vld [vmem:[%s1 + $0x20] sm:$0xf]
  %v37 = vld [vmem:[%s1 + $0x24] sm:$0xf]
  %v38 = vld [vmem:[%s1 + $0x28] sm:$0xf]
  %v39 = vld [vmem:[%s1 + $0x2c] sm:$0xf]
  %v40 = vld [vmem:[%s1 + $0x30] sm:$0xf]
  %v41 = vld [vmem:[%s1 + $0x34] sm:$0xf]
  %v42 = vld [vmem:[%s1 + $0x38] sm:$0xf]
  %v43 = vld [vmem:[%s1 + $0x3c] sm:$0xf]
  %v44 = vld [vmem:[%s1 + $0x40] sm:$0xf]
  %v45 = vld [vmem:[%s1 + $0x44] sm:$0xf]
  %v62 = vunpack.c.l.b16 %v12
  %v63 = vunpack.c.h.b16 %v12
  %v64 = vunpack.c.l.b16 %v13
  %v65 = vunpack.c.h.b16 %v13
  %v66 = vunpack.c.l.b16 %v14
  %v67 = vunpack.c.h.b16 %v14
  %v68 = vunpack.c.l.b16 %v15
  %v69 = vunpack.c.h.b16 %v15
  %v70 = vunpack.c.l.b16 %v16
  %v71 = vunpack.c.h.b16 %v16
  %v72 = vunpack.c.l.b16 %v17
  %v73 = vunpack.c.h.b16 %v17
  %v74 = vunpack.c.l.b16 %v18
  %v75 = vunpack.c.h.b16 %v18
  %v76 = vunpack.c.l.b16 %v19
  %v77 = vunpack.c.h.b16 %v19
  %v78 = vunpack.c.l.b16 %v20
  %v79 = vunpack.c.h.b16 %v20
  %v80 = vunpack.c.l.b16 %v21
  %v81 = vunpack.c.h.b16 %v21
  %v82 = vunpack.c.l.b16 %v22
  %v83 = vunpack.c.h.b16 %v22
  %v84 = vunpack.c.l.b16 %v23
  %v85 = vunpack.c.h.b16 %v23
  %v86 = vunpack.c.l.b16 %v24
  %v87 = vunpack.c.h.b16 %v24
  %v88 = vunpack.c.l.b16 %v25
  %v89 = vunpack.c.h.b16 %v25
  %v90 = vunpack.c.l.b16 %v26
  %v91 = vunpack.c.h.b16 %v26
  %v92 = vunpack.c.l.b16 %v27
  %v93 = vunpack.c.h.b16 %v27
  %v94 = vpack.c.b16 %v64, %v62
  %v95 = vpack.c.b16 %v65, %v63
  %v96 = vpack.c.b16 %v68, %v66
  %v97 = vpack.c.b16 %v69, %v67
  %v98 = vpack.c.b16 %v72, %v70
  %v99 = vpack.c.b16 %v73, %v71
  %v100 = vpack.c.b16 %v76, %v74
  %v101 = vpack.c.b16 %v77, %v75
  %v102 = vpack.c.b16 %v80, %v78
  %v103 = vpack.c.b16 %v81, %v79
  %v104 = vpack.c.b16 %v84, %v82
  %v105 = vpack.c.b16 %v85, %v83
  %v106 = vpack.c.b16 %v88, %v86
  %v107 = vpack.c.b16 %v89, %v87
  %v108 = vpack.c.b16 %v92, %v90
  %v109 = vpack.c.b16 %v93, %v91
  %v136 = vunpack.c.l.b16 %v28
  %v137 = vunpack.c.l.b16 %v29
  %v138 = vunpack.c.l.b16 %v30
  %v139 = vunpack.c.l.b16 %v31
  %v140 = vunpack.c.l.b16 %v32
  %v141 = vunpack.c.l.b16 %v33
  %v142 = vunpack.c.l.b16 %v34
  %v143 = vunpack.c.l.b16 %v35
  %v144 = vunpack.c.l.b16 %v36
  %v145 = vunpack.c.l.b16 %v37
  %v146 = vunpack.c.l.b16 %v38
  %v147 = vunpack.c.l.b16 %v39
  %v148 = vunpack.c.l.b16 %v40
  %v149 = vunpack.c.l.b16 %v41
  %v150 = vunpack.c.l.b16 %v42
  %v151 = vunpack.c.l.b16 %v43
  %v152 = vunpack.c.l.b16 %v44
  %v153 = vunpack.c.l.b16 %v45
  %v154 = vpack.c.b16 %v137, %v136
  %v155 = vpack.c.b16 %v139, %v138
  %v156 = vpack.c.b16 %v141, %v140
  %v157 = vpack.c.b16 %v143, %v142
  %v158 = vpack.c.b16 %v145, %v144
  %v159 = vpack.c.b16 %v147, %v146
  %v160 = vpack.c.b16 %v149, %v148
  %v161 = vpack.c.b16 %v151, %v150
  %v162 = vpack.c.b16 %v153, %v152
  %vm172 = vcmask 130048
  %v174 = vsel %vm172, %v95, 0
  %v177 = vsel %vm172, %v97, 0
  %v180 = vsel %vm172, %v99, 0
  %v183 = vsel %vm172, %v101, 0
  %v186 = vsel %vm172, %v103, 0
  %v189 = vsel %vm172, %v105, 0
  %v192 = vsel %vm172, %v107, 0
  %v195 = vsel %vm172, %v109, 0
  %197 = vmatprep.subr.bf16.mxu0 0
  %198 = vmatpush1.bf16.msra.mxu0 %v154
  %199 = vmatprep.subr.bf16.mxu0 0
  %200 = vmatpush1.bf16.msra.mxu0 %v155
  %201 = vmatprep.subr.bf16.mxu0 0
  %202 = vmatpush1.bf16.msra.mxu0 %v156
  %203 = vmatprep.subr.bf16.mxu0 0
  %204 = vmatpush1.bf16.msra.mxu0 %v157
  %205 = vmatprep.subr.bf16.mxu0 0
  %206 = vmatpush1.bf16.msra.mxu0 %v158
  %207 = vmatprep.subr.bf16.mxu0 0
  %208 = vmatpush1.bf16.msra.mxu0 %v159
  %209 = vmatprep.subr.bf16.mxu0 0
  %210 = vmatpush1.bf16.msra.mxu0 %v160
  %211 = vmatprep.subr.bf16.mxu0 0
  %212 = vmatpush1.bf16.msra.mxu0 %v161
  %213 = vmatprep.subr.bf16.mxu0 0
  %214 = vmatpush1.bf16.msra.mxu0 %v162
  %215 = vmatprep.subr.bf16.mxu0 0
  %216 = vmatpush1.bf16.msra.mxu0 0
  %217 = vmatprep.subr.bf16.mxu0 0
  %218 = vmatpush1.bf16.msra.mxu0 0
  %219 = vmatprep.subr.bf16.mxu0 0
  %220 = vmatpush1.bf16.msra.mxu0 0
  %221 = vmatprep.subr.bf16.mxu0 0
  %222 = vmatpush1.bf16.msra.mxu0 0
  %223 = vmatprep.subr.bf16.mxu0 0
  %224 = vmatpush1.bf16.msra.mxu0 0
  %225 = vmatprep.subr.bf16.mxu0 0
  %226 = vmatpush1.bf16.msra.mxu0 0
  %227 = vmatprep.subr.bf16.mxu0 0
  %228 = vmatpush1.bf16.msra.mxu0 0
  %229 = vmatprep.mubr.bf16.mxu0 %v174
  %230 = vmatmul.mubr.bf16.gmra.mrb[0].mxu0 %v94
  %v231 = vpop.f32.mrb[0].mxu0
  %v232 = vadd.f32 0.0, %v231
  %v233 = vpop.f32.mrb[0].mxu0
  %v234 = vpop.f32.mrb[0].mxu0
  %v235 = vadd.f32 0.0, %v234
  %v236 = vpop.f32.mrb[0].mxu0
  %237 = vmatprep.mubr.bf16.mxu0 %v177
  %238 = vmatmul.mubr.bf16.gmra.mrb[0].mxu0 %v96
  %v239 = vpop.f32.mrb[0].mxu0
  %v240 = vadd.f32 0.0, %v239
  %v241 = vpop.f32.mrb[0].mxu0
  %v242 = vpop.f32.mrb[0].mxu0
  %v243 = vadd.f32 0.0, %v242
  %v244 = vpop.f32.mrb[0].mxu0
  %245 = vmatprep.mubr.bf16.mxu0 %v180
  %246 = vmatmul.mubr.bf16.gmra.mrb[0].mxu0 %v98
  %v247 = vpop.f32.mrb[0].mxu0
  %v248 = vadd.f32 0.0, %v247
  %v249 = vpop.f32.mrb[0].mxu0
  %v250 = vpop.f32.mrb[0].mxu0
  %v251 = vadd.f32 0.0, %v250
  %v252 = vpop.f32.mrb[0].mxu0
  %253 = vmatprep.mubr.bf16.mxu0 %v183
  %254 = vmatmul.mubr.bf16.gmra.mrb[0].mxu0 %v100
  %v255 = vpop.f32.mrb[0].mxu0
  %v256 = vadd.f32 0.0, %v255
  %v257 = vpop.f32.mrb[0].mxu0
  %v258 = vpop.f32.mrb[0].mxu0
  %v259 = vadd.f32 0.0, %v258
  %v260 = vpop.f32.mrb[0].mxu0
  %261 = vmatprep.mubr.bf16.mxu0 %v186
  %262 = vmatmul.mubr.bf16.gmra.mrb[0].mxu0 %v102
  %v263 = vpop.f32.mrb[0].mxu0
  %v264 = vadd.f32 0.0, %v263
  %v265 = vpop.f32.mrb[0].mxu0
  %v266 = vpop.f32.mrb[0].mxu0
  %v267 = vadd.f32 0.0, %v266
  %v268 = vpop.f32.mrb[0].mxu0
  %269 = vmatprep.mubr.bf16.mxu0 %v189
  %270 = vmatmul.mubr.bf16.gmra.mrb[0].mxu0 %v104
  %v271 = vpop.f32.mrb[0].mxu0
  %v272 = vadd.f32 0.0, %v271
  %v273 = vpop.f32.mrb[0].mxu0
  %v274 = vpop.f32.mrb[0].mxu0
  %v275 = vadd.f32 0.0, %v274
  %v276 = vpop.f32.mrb[0].mxu0
  %277 = vmatprep.mubr.bf16.mxu0 %v192
  %278 = vmatmul.mubr.bf16.gmra.mrb[0].mxu0 %v106
  %v279 = vpop.f32.mrb[0].mxu0
  %v280 = vadd.f32 0.0, %v279
  %v281 = vpop.f32.mrb[0].mxu0
  %v282 = vpop.f32.mrb[0].mxu0
  %v283 = vadd.f32 0.0, %v282
  %v284 = vpop.f32.mrb[0].mxu0
  %285 = vmatprep.mubr.bf16.mxu0 %v195
  %286 = vmatmul.mubr.bf16.gmra.mrb[0].mxu0 %v108
  %v287 = vpop.f32.mrb[0].mxu0
  %v288 = vadd.f32 0.0, %v287
  %v289 = vpop.f32.mrb[0].mxu0
  %v290 = vpop.f32.mrb[0].mxu0
  %v291 = vadd.f32 0.0, %v290
  %v292 = vpop.f32.mrb[0].mxu0
  %293 = vdwg.mxu0
  %p294 = scmp.eq.s32.totalorder 0, 0
  // Predicated region
  $region10: #{forward.16} parent=0 // pred_check
    %p295 = pneg %p294
  $region11: #{forward.16} parent=0 // pred_check_branch
    %297 = sbr.rel (%p295) target = $region13
  $region12: #{forward.16} parent=0 // pred_region
    %298 = vst [vmem:[%s2] sm:$0xff] %v232
    %299 = vst [vmem:[%s2 + $0x8] sm:$0xff] %v235
    %300 = vst [vmem:[%s2 + $0x10] sm:$0xff] %v240
    %301 = vst [vmem:[%s2 + $0x18] sm:$0xff] %v243
    %302 = vst [vmem:[%s2 + $0x20] sm:$0xff] %v248
    %303 = vst [vmem:[%s2 + $0x28] sm:$0xff] %v251
    %304 = vst [vmem:[%s2 + $0x30] sm:$0xff] %v256
    %305 = vst [vmem:[%s2 + $0x38] sm:$0xff] %v259
    %306 = vst [vmem:[%s2 + $0x40] sm:$0xff] %v264
    %307 = vst [vmem:[%s2 + $0x48] sm:$0xff] %v267
    %308 = vst [vmem:[%s2 + $0x50] sm:$0xff] %v272
    %309 = vst [vmem:[%s2 + $0x58] sm:$0xff] %v275
    %310 = vst [vmem:[%s2 + $0x60] sm:$0xff] %v280
    %311 = vst [vmem:[%s2 + $0x68] sm:$0xff] %v283
    %312 = vst [vmem:[%s2 + $0x70] sm:$0xff] %v288
    %313 = vst [vmem:[%s2 + $0x78] sm:$0xff] %v291
  $region13: #{forward.16} parent=0 // pred_fallthru
    _
  %p314 = scmp.gt.s32.totalorder 0, 0
  // Predicated region
  $region14: #{forward.16} parent=0 // pred_check
    %p315 = pneg %p314
  $region15: #{forward.16} parent=0 // pred_check_branch
    %317 = sbr.rel (%p315) target = $region17
  $region16: #{forward.16} parent=0 // pred_region
    %v318 = vld [vmem:[%s2] sm:$0xff]
    %v319 = vld [vmem:[%s2 + $0x8] sm:$0xff]
    %v320 = vld [vmem:[%s2 + $0x10] sm:$0xff]
    %v321 = vld [vmem:[%s2 + $0x18] sm:$0xff]
    %v322 = vld [vmem:[%s2 + $0x20] sm:$0xff]
    %v323 = vld [vmem:[%s2 + $0x28] sm:$0xff]
    %v324 = vld [vmem:[%s2 + $0x30] sm:$0xff]
    %v325 = vld [vmem:[%s2 + $0x38] sm:$0xff]
    %v326 = vld [vmem:[%s2 + $0x40] sm:$0xff]
    %v327 = vld [vmem:[%s2 + $0x48] sm:$0xff]
    %v328 = vld [vmem:[%s2 + $0x50] sm:$0xff]
    %v329 = vld [vmem:[%s2 + $0x58] sm:$0xff]
    %v330 = vld [vmem:[%s2 + $0x60] sm:$0xff]
    %v331 = vld [vmem:[%s2 + $0x68] sm:$0xff]
    %v332 = vld [vmem:[%s2 + $0x70] sm:$0xff]
    %v333 = vld [vmem:[%s2 + $0x78] sm:$0xff]
    %v334 = vadd.f32 %v318, %v232
    %v335 = vadd.f32 %v319, %v235
    %v336 = vadd.f32 %v320, %v240
    %v337 = vadd.f32 %v321, %v243
    %v338 = vadd.f32 %v322, %v248
    %v339 = vadd.f32 %v323, %v251
    %v340 = vadd.f32 %v324, %v256
    %v341 = vadd.f32 %v325, %v259
    %v342 = vadd.f32 %v326, %v264
    %v343 = vadd.f32 %v327, %v267
    %v344 = vadd.f32 %v328, %v272
    %v345 = vadd.f32 %v329, %v275
    %v346 = vadd.f32 %v330, %v280
    %v347 = vadd.f32 %v331, %v283
    %v348 = vadd.f32 %v332, %v288
    %v349 = vadd.f32 %v333, %v291
    %350 = vst [vmem:[%s2] sm:$0xff] %v334
    %351 = vst [vmem:[%s2 + $0x8] sm:$0xff] %v335
    %352 = vst [vmem:[%s2 + $0x10] sm:$0xff] %v336
    %353 = vst [vmem:[%s2 + $0x18] sm:$0xff] %v337
    %354 = vst [vmem:[%s2 + $0x20] sm:$0xff] %v338
    %355 = vst [vmem:[%s2 + $0x28] sm:$0xff] %v339
    %356 = vst [vmem:[%s2 + $0x30] sm:$0xff] %v340
    %357 = vst [vmem:[%s2 + $0x38] sm:$0xff] %v341
    %358 = vst [vmem:[%s2 + $0x40] sm:$0xff] %v342
    %359 = vst [vmem:[%s2 + $0x48] sm:$0xff] %v343
    %360 = vst [vmem:[%s2 + $0x50] sm:$0xff] %v344
    %361 = vst [vmem:[%s2 + $0x58] sm:$0xff] %v345
    %362 = vst [vmem:[%s2 + $0x60] sm:$0xff] %v346
    %363 = vst [vmem:[%s2 + $0x68] sm:$0xff] %v347
    %364 = vst [vmem:[%s2 + $0x70] sm:$0xff] %v348
    %365 = vst [vmem:[%s2 + $0x78] sm:$0xff] %v349
  $region17: #{forward.16} parent=0 // pred_fallthru
    _
  // Predicated region
  $region18: #{forward.16} parent=0 // pred_check
    _
  $region19: #{forward.16} parent=0 // pred_check_branch
    %367 = sbr.rel (0) target = $region21
  $region20: #{forward.16} parent=0 // pred_region
    _
  $region21: #{forward.16} parent=0 // pred_fallthru
    _
  // Predicated region
  $region22: #{forward.16} parent=0 // pred_check
    _
  $region23: #{forward.16} parent=0 // pred_check_branch
    %369 = sbr.rel (0) target = $region25
  $region24: #{forward.16} parent=0 // pred_region
    _
  $region25: #{forward.16} parent=0 // pred_fallthru
    _

// kernel: forward.17
$region0: #{forward.17}
  #allocation0 [shape = 'u32[]', space=smem, size = 0x4, offset = 0x4, fixed_abs, tag = 'smem constant byte address 0x4 - core index']
  #allocation1 [shape = 'u32[144,128]{1,0:T(1,128)}', space=vmem, size = 0x12000, scoped, tag = 'internal scratch']
  %s0 = inlined_call_operand.vmem [shape: bf16[128,24], index: 0, kind: input, shape index: {}]
  %s1 = inlined_call_operand.vmem [shape: bf16[24,128], index: 1, kind: input, shape index: {}]
  %s2 = inlined_call_operand.vmem [shape: f32[1,24], index: 2, kind: input, shape index: {}]
  %s3 = inlined_call_operand.vmem [shape: f32[1,24], index: 3, kind: input, shape index: {}]
  %s4 = inlined_call_operand.vmem [shape: f32[1,128], index: 4, kind: input, shape index: {}]
  %s5 = inlined_call_operand.vmem [shape: f32[1,128], index: 5, kind: input, shape index: {}]
  %s6 = inlined_call_operand.vmem [shape: f32[128,128], index: 6, kind: output, shape index: {}]
  %s7 = sld [smem:[#allocation0]]
  $region46: #{forward.17} parent=0
    _
  %s9 = ssub.s32 1, %s7
  %s10 = scalar_select 0, %s9, %s7
  // Predicated region
  $region2: #{forward.17} parent=0 // pred_check
    _
  $region3: #{forward.17} parent=0 // pred_check_branch
    %12 = sbr.rel (0) target = $region5
  $region4: #{forward.17} parent=0 // pred_region
    _
  $region5: #{forward.17} parent=0 // pred_fallthru
    _
  // Predicated region
  $region6: #{forward.17} parent=0 // pred_check
    _
  $region7: #{forward.17} parent=0 // pred_check_branch
    %14 = sbr.rel (0) target = $region9
  $region8: #{forward.17} parent=0 // pred_region
    _
  $region9: #{forward.17} parent=0 // pred_fallthru
    _
  // Predicated region
  $region10: #{forward.17} parent=0 // pred_check
    _
  $region11: #{forward.17} parent=0 // pred_check_branch
    %16 = sbr.rel (0) target = $region13
  $region12: #{forward.17} parent=0 // pred_region
    _
  $region13: #{forward.17} parent=0 // pred_fallthru
    _
  // Predicated region
  $region14: #{forward.17} parent=0 // pred_check
    _
  $region15: #{forward.17} parent=0 // pred_check_branch
    %18 = sbr.rel (0) target = $region17
  $region16: #{forward.17} parent=0 // pred_region
    _
  $region17: #{forward.17} parent=0 // pred_fallthru
    _
  // Predicated region
  $region18: #{forward.17} parent=0 // pred_check
    _
  $region19: #{forward.17} parent=0 // pred_check_branch
    %20 = sbr.rel (0) target = $region21
  $region20: #{forward.17} parent=0 // pred_region
    _
  $region21: #{forward.17} parent=0 // pred_fallthru
    _
  // Predicated region
  $region22: #{forward.17} parent=0 // pred_check
    _
  $region23: #{forward.17} parent=0 // pred_check_branch
    %22 = sbr.rel (0) target = $region25
  $region24: #{forward.17} parent=0 // pred_region
    _
  $region25: #{forward.17} parent=0 // pred_fallthru
    _
  %v24 = vld [vmem:[%s0] sm:$0xf]
  %v25 = vld [vmem:[%s0 + $0x4] sm:$0xf]
  %v26 = vld [vmem:[%s0 + $0x8] sm:$0xf]
  %v27 = vld [vmem:[%s0 + $0xc] sm:$0xf]
  %v28 = vld [vmem:[%s0 + $0x10] sm:$0xf]
  %v29 = vld [vmem:[%s0 + $0x14] sm:$0xf]
  %v30 = vld [vmem:[%s0 + $0x18] sm:$0xf]
  %v31 = vld [vmem:[%s0 + $0x1c] sm:$0xf]
  %v32 = vld [vmem:[%s0 + $0x20] sm:$0xf]
  %v33 = vld [vmem:[%s0 + $0x24] sm:$0xf]
  %v34 = vld [vmem:[%s0 + $0x28] sm:$0xf]
  %v35 = vld [vmem:[%s0 + $0x2c] sm:$0xf]
  %v36 = vld [vmem:[%s0 + $0x30] sm:$0xf]
  %v37 = vld [vmem:[%s0 + $0x34] sm:$0xf]
  %v38 = vld [vmem:[%s0 + $0x38] sm:$0xf]
  %v39 = vld [vmem:[%s0 + $0x3c] sm:$0xf]
  %v40 = vunpack.c.l.bf16 %v24
  %v41 = vunpack.c.l.bf16 %v25
  %v42 = vunpack.c.l.bf16 %v26
  %v43 = vunpack.c.l.bf16 %v27
  %v44 = vunpack.c.l.bf16 %v28
  %v45 = vunpack.c.l.bf16 %v29
  %v46 = vunpack.c.l.bf16 %v30
  %v47 = vunpack.c.l.bf16 %v31
  %v48 = vunpack.c.l.bf16 %v32
  %v49 = vunpack.c.l.bf16 %v33
  %v50 = vunpack.c.l.bf16 %v34
  %v51 = vunpack.c.l.bf16 %v35
  %v52 = vunpack.c.l.bf16 %v36
  %v53 = vunpack.c.l.bf16 %v37
  %v54 = vunpack.c.l.bf16 %v38
  %v55 = vunpack.c.l.bf16 %v39
  %v56 = vld [vmem:[%s2] sm:$0x1]
  %v58 = vlaneseq
  %v59 = vshrl.u32 %v58, 7
  %v60 = vsub.s32 0, %v59
  %v61 = vrot.slane %v56, %v60
  %v63 = vmul.f32 %v40, %v61
  %v64 = vmul.f32 %v41, %v61
  %v65 = vmul.f32 %v42, %v61
  %v66 = vmul.f32 %v43, %v61
  %v67 = vmul.f32 %v44, %v61
  %v68 = vmul.f32 %v45, %v61
  %v69 = vmul.f32 %v46, %v61
  %v70 = vmul.f32 %v47, %v61
  %v71 = vmul.f32 %v48, %v61
  %v72 = vmul.f32 %v49, %v61
  %v73 = vmul.f32 %v50, %v61
  %v74 = vmul.f32 %v51, %v61
  %v75 = vmul.f32 %v52, %v61
  %v76 = vmul.f32 %v53, %v61
  %v77 = vmul.f32 %v54, %v61
  %v78 = vmul.f32 %v55, %v61
  %v79 = vld [vmem:[%s3] sm:$0x1]
  %v81 = vlaneseq
  %v82 = vshrl.u32 %v81, 7
  %v83 = vsub.s32 0, %v82
  %v84 = vrot.slane %v79, %v83
  %v86 = vadd.f32 %v63, %v84
  %v87 = vadd.f32 %v64, %v84
  %v88 = vadd.f32 %v65, %v84
  %v89 = vadd.f32 %v66, %v84
  %v90 = vadd.f32 %v67, %v84
  %v91 = vadd.f32 %v68, %v84
  %v92 = vadd.f32 %v69, %v84
  %v93 = vadd.f32 %v70, %v84
  %v94 = vadd.f32 %v71, %v84
  %v95 = vadd.f32 %v72, %v84
  %v96 = vadd.f32 %v73, %v84
  %v97 = vadd.f32 %v74, %v84
  %v98 = vadd.f32 %v75, %v84
  %v99 = vadd.f32 %v76, %v84
  %v100 = vadd.f32 %v77, %v84
  %v101 = vadd.f32 %v78, %v84
  %v102 = vmax.f32 %v86, 0.0
  %v103 = vmax.f32 %v87, 0.0
  %v104 = vmax.f32 %v88, 0.0
  %v105 = vmax.f32 %v89, 0.0
  %v106 = vmax.f32 %v90, 0.0
  %v107 = vmax.f32 %v91, 0.0
  %v108 = vmax.f32 %v92, 0.0
  %v109 = vmax.f32 %v93, 0.0
  %v110 = vmax.f32 %v94, 0.0
  %v111 = vmax.f32 %v95, 0.0
  %v112 = vmax.f32 %v96, 0.0
  %v113 = vmax.f32 %v97, 0.0
  %v114 = vmax.f32 %v98, 0.0
  %v115 = vmax.f32 %v99, 0.0
  %v116 = vmax.f32 %v100, 0.0
  %v117 = vmax.f32 %v101, 0.0
  %v118 = vpack.c.bf16 %v103, %v102
  %v119 = vpack.c.bf16 %v105, %v104
  %v120 = vpack.c.bf16 %v107, %v106
  %v121 = vpack.c.bf16 %v109, %v108
  %v122 = vpack.c.bf16 %v111, %v110
  %v123 = vpack.c.bf16 %v113, %v112
  %v124 = vpack.c.bf16 %v115, %v114
  %v125 = vpack.c.bf16 %v117, %v116
  %v126 = vld [vmem:[%s1] sm:$0xf]
  %v127 = vld [vmem:[%s1 + $0x4] sm:$0xf]
  %v128 = vld [vmem:[%s1 + $0x8] sm:$0xf]
  %v132 = vunpack.c.l.b16 %v126
  %v133 = vunpack.c.l.b16 %v127
  %v134 = vunpack.c.l.b16 %v128
  %v135 = vpack.c.b16 %v133, %v132
  %v136 = vpack.c.b16 %v134, %v134
  %vm138 = vcmask 195584
  %v140 = vsel %vm138, %v118, 0
  %v143 = vsel %vm138, %v119, 0
  %v146 = vsel %vm138, %v120, 0
  %v149 = vsel %vm138, %v121, 0
  %v152 = vsel %vm138, %v122, 0
  %v155 = vsel %vm138, %v123, 0
  %v158 = vsel %vm138, %v124, 0
  %v161 = vsel %vm138, %v125, 0
  %vm163 = vcmask 1043456
  %v165 = vsel %vm163, %v136, 0
  %167 = vmatprep.subr.bf16.mxu0 0
  %168 = vmatpush1.bf16.msra.mxu0 %v135
  %169 = vmatprep.subr.bf16.mxu0 0
  %170 = vmatpush1.bf16.msra.mxu0 %v165
  %171 = vmatprep.subr.bf16.mxu0 0
  %172 = vmatpush1.bf16.msra.mxu0 0
  %173 = vmatprep.subr.bf16.mxu0 0
  %174 = vmatpush1.bf16.msra.mxu0 0
  %175 = vmatprep.subr.bf16.mxu0 0
  %176 = vmatpush1.bf16.msra.mxu0 0
  %177 = vmatprep.subr.bf16.mxu0 0
  %178 = vmatpush1.bf16.msra.mxu0 0
  %179 = vmatprep.subr.bf16.mxu0 0
  %180 = vmatpush1.bf16.msra.mxu0 0
  %181 = vmatprep.subr.bf16.mxu0 0
  %182 = vmatpush1.bf16.msra.mxu0 0
  %183 = vmatprep.subr.bf16.mxu0 0
  %184 = vmatpush1.bf16.msra.mxu0 0
  %185 = vmatprep.subr.bf16.mxu0 0
  %186 = vmatpush1.bf16.msra.mxu0 0
  %187 = vmatprep.subr.bf16.mxu0 0
  %188 = vmatpush1.bf16.msra.mxu0 0
  %189 = vmatprep.subr.bf16.mxu0 0
  %190 = vmatpush1.bf16.msra.mxu0 0
  %191 = vmatprep.subr.bf16.mxu0 0
  %192 = vmatpush1.bf16.msra.mxu0 0
  %193 = vmatprep.subr.bf16.mxu0 0
  %194 = vmatpush1.bf16.msra.mxu0 0
  %195 = vmatprep.subr.bf16.mxu0 0
  %196 = vmatpush1.bf16.msra.mxu0 0
  %197 = vmatprep.subr.bf16.mxu0 0
  %198 = vmatpush1.bf16.msra.mxu0 0
  %199 = vmatprep.mubr.bf16.mxu0 0
  %200 = vmatmul.mubr.bf16.gmra.mrb[0].mxu0 %v140
  %v201 = vpop.f32.mrb[0].mxu0
  %v202 = vadd.f32 0.0, %v201
  %v203 = vpop.f32.mrb[0].mxu0
  %v204 = vpop.f32.mrb[0].mxu0
  %v205 = vadd.f32 0.0, %v204
  %v206 = vpop.f32.mrb[0].mxu0
  %207 = vmatprep.mubr.bf16.mxu0 0
  %208 = vmatmul.mubr.bf16.gmra.mrb[0].mxu0 %v143
  %v209 = vpop.f32.mrb[0].mxu0
  %v210 = vadd.f32 0.0, %v209
  %v211 = vpop.f32.mrb[0].mxu0
  %v212 = vpop.f32.mrb[0].mxu0
  %v213 = vadd.f32 0.0, %v212
  %v214 = vpop.f32.mrb[0].mxu0
  %215 = vmatprep.mubr.bf16.mxu0 0
  %216 = vmatmul.mubr.bf16.gmra.mrb[0].mxu0 %v146
  %v217 = vpop.f32.mrb[0].mxu0
  %v218 = vadd.f32 0.0, %v217
  %v219 = vpop.f32.mrb[0].mxu0
  %v220 = vpop.f32.mrb[0].mxu0
  %v221 = vadd.f32 0.0, %v220
  %v222 = vpop.f32.mrb[0].mxu0
  %223 = vmatprep.mubr.bf16.mxu0 0
  %224 = vmatmul.mubr.bf16.gmra.mrb[0].mxu0 %v149
  %v225 = vpop.f32.mrb[0].mxu0
  %v226 = vadd.f32 0.0, %v225
  %v227 = vpop.f32.mrb[0].mxu0
  %v228 = vpop.f32.mrb[0].mxu0
  %v229 = vadd.f32 0.0, %v228
  %v230 = vpop.f32.mrb[0].mxu0
  %231 = vmatprep.mubr.bf16.mxu0 0
  %232 = vmatmul.mubr.bf16.gmra.mrb[0].mxu0 %v152
  %v233 = vpop.f32.mrb[0].mxu0
  %v234 = vadd.f32 0.0, %v233
  %v235 = vpop.f32.mrb[0].mxu0
  %v236 = vpop.f32.mrb[0].mxu0
  %v237 = vadd.f32 0.0, %v236
  %v238 = vpop.f32.mrb[0].mxu0
  %239 = vmatprep.mubr.bf16.mxu0 0
  %240 = vmatmul.mubr.bf16.gmra.mrb[0].mxu0 %v155
  %v241 = vpop.f32.mrb[0].mxu0
  %v242 = vadd.f32 0.0, %v241
  %v243 = vpop.f32.mrb[0].mxu0
  %v244 = vpop.f32.mrb[0].mxu0
  %v245 = vadd.f32 0.0, %v244
  %v246 = vpop.f32.mrb[0].mxu0
  %247 = vmatprep.mubr.bf16.mxu0 0
  %248 = vmatmul.mubr.bf16.gmra.mrb[0].mxu0 %v158
  %v249 = vpop.f32.mrb[0].mxu0
  %v250 = vadd.f32 0.0, %v249
  %v251 = vpop.f32.mrb[0].mxu0
  %v252 = vpop.f32.mrb[0].mxu0
  %v253 = vadd.f32 0.0, %v252
  %v254 = vpop.f32.mrb[0].mxu0
  %255 = vmatprep.mubr.bf16.mxu0 0
  %256 = vmatmul.mubr.bf16.gmra.mrb[0].mxu0 %v161
  %v257 = vpop.f32.mrb[0].mxu0
  %v258 = vadd.f32 0.0, %v257
  %v259 = vpop.f32.mrb[0].mxu0
  %v260 = vpop.f32.mrb[0].mxu0
  %v261 = vadd.f32 0.0, %v260
  %v262 = vpop.f32.mrb[0].mxu0
  %263 = vdwg.mxu0
  %p264 = scmp.eq.s32.totalorder 0, 0
  // Predicated region
  $region26: #{forward.17} parent=0 // pred_check
    %p265 = pneg %p264
  $region27: #{forward.17} parent=0 // pred_check_branch
    %267 = sbr.rel (%p265) target = $region29
  $region28: #{forward.17} parent=0 // pred_region
    %268 = vst [vmem:[%s6] sm:$0xff] %v202
    %269 = vst [vmem:[%s6 + $0x8] sm:$0xff] %v205
    %270 = vst [vmem:[%s6 + $0x10] sm:$0xff] %v210
    %271 = vst [vmem:[%s6 + $0x18] sm:$0xff] %v213
    %272 = vst [vmem:[%s6 + $0x20] sm:$0xff] %v218
    %273 = vst [vmem:[%s6 + $0x28] sm:$0xff] %v221
    %274 = vst [vmem:[%s6 + $0x30] sm:$0xff] %v226
    %275 = vst [vmem:[%s6 + $0x38] sm:$0xff] %v229
    %276 = vst [vmem:[%s6 + $0x40] sm:$0xff] %v234
    %277 = vst [vmem:[%s6 + $0x48] sm:$0xff] %v237
    %278 = vst [vmem:[%s6 + $0x50] sm:$0xff] %v242
    %279 = vst [vmem:[%s6 + $0x58] sm:$0xff] %v245
    %280 = vst [vmem:[%s6 + $0x60] sm:$0xff] %v250
    %281 = vst [vmem:[%s6 + $0x68] sm:$0xff] %v253
    %282 = vst [vmem:[%s6 + $0x70] sm:$0xff] %v258
    %283 = vst [vmem:[%s6 + $0x78] sm:$0xff] %v261
  $region29: #{forward.17} parent=0 // pred_fallthru
    _
  %p284 = scmp.gt.s32.totalorder 0, 0
  // Predicated region
  $region30: #{forward.17} parent=0 // pred_check
    %p285 = pneg %p284
  $region31: #{forward.17} parent=0 // pred_check_branch
    %287 = sbr.rel (%p285) target = $region33
  $region32: #{forward.17} parent=0 // pred_region
    %v288 = vld [vmem:[%s6] sm:$0xff]
    %v289 = vld [vmem:[%s6 + $0x8] sm:$0xff]
    %v290 = vld [vmem:[%s6 + $0x10] sm:$0xff]
    %v291 = vld [vmem:[%s6 + $0x18] sm:$0xff]
    %v292 = vld [vmem:[%s6 + $0x20] sm:$0xff]
    %v293 = vld [vmem:[%s6 + $0x28] sm:$0xff]
    %v294 = vld [vmem:[%s6 + $0x30] sm:$0xff]
    %v295 = vld [vmem:[%s6 + $0x38] sm:$0xff]
    %v296 = vld [vmem:[%s6 + $0x40] sm:$0xff]
    %v297 = vld [vmem:[%s6 + $0x48] sm:$0xff]
    %v298 = vld [vmem:[%s6 + $0x50] sm:$0xff]
    %v299 = vld [vmem:[%s6 + $0x58] sm:$0xff]
    %v300 = vld [vmem:[%s6 + $0x60] sm:$0xff]
    %v301 = vld [vmem:[%s6 + $0x68] sm:$0xff]
    %v302 = vld [vmem:[%s6 + $0x70] sm:$0xff]
    %v303 = vld [vmem:[%s6 + $0x78] sm:$0xff]
    %v304 = vadd.f32 %v288, %v202
    %v305 = vadd.f32 %v289, %v205
    %v306 = vadd.f32 %v290, %v210
    %v307 = vadd.f32 %v291, %v213
    %v308 = vadd.f32 %v292, %v218
    %v309 = vadd.f32 %v293, %v221
    %v310 = vadd.f32 %v294, %v226
    %v311 = vadd.f32 %v295, %v229
    %v312 = vadd.f32 %v296, %v234
    %v313 = vadd.f32 %v297, %v237
    %v314 = vadd.f32 %v298, %v242
    %v315 = vadd.f32 %v299, %v245
    %v316 = vadd.f32 %v300, %v250
    %v317 = vadd.f32 %v301, %v253
    %v318 = vadd.f32 %v302, %v258
    %v319 = vadd.f32 %v303, %v261
    %320 = vst [vmem:[%s6] sm:$0xff] %v304
    %321 = vst [vmem:[%s6 + $0x8] sm:$0xff] %v305
    %322 = vst [vmem:[%s6 + $0x10] sm:$0xff] %v306
    %323 = vst [vmem:[%s6 + $0x18] sm:$0xff] %v307
    %324 = vst [vmem:[%s6 + $0x20] sm:$0xff] %v308
    %325 = vst [vmem:[%s6 + $0x28] sm:$0xff] %v309
    %326 = vst [vmem:[%s6 + $0x30] sm:$0xff] %v310
    %327 = vst [vmem:[%s6 + $0x38] sm:$0xff] %v311
    %328 = vst [vmem:[%s6 + $0x40] sm:$0xff] %v312
    %329 = vst [vmem:[%s6 + $0x48] sm:$0xff] %v313
    %330 = vst [vmem:[%s6 + $0x50] sm:$0xff] %v314
    %331 = vst [vmem:[%s6 + $0x58] sm:$0xff] %v315
    %332 = vst [vmem:[%s6 + $0x60] sm:$0xff] %v316
    %333 = vst [vmem:[%s6 + $0x68] sm:$0xff] %v317
    %334 = vst [vmem:[%s6 + $0x70] sm:$0xff] %v318
    %335 = vst [vmem:[%s6 + $0x78] sm:$0xff] %v319
  $region33: #{forward.17} parent=0 // pred_fallthru
    _
  // Predicated region
  $region34: #{forward.17} parent=0 // pred_check
    %p336 = pneg %p264
  $region35: #{forward.17} parent=0 // pred_check_branch
    %338 = sbr.rel (%p336) target = $region37
  $region36: #{forward.17} parent=0 // pred_region
    %v339 = vld [vmem:[%s6] sm:$0xff]
    %v340 = vld [vmem:[%s6 + $0x8] sm:$0xff]
    %v341 = vld [vmem:[%s6 + $0x10] sm:$0xff]
    %v342 = vld [vmem:[%s6 + $0x18] sm:$0xff]
    %v343 = vld [vmem:[%s6 + $0x20] sm:$0xff]
    %v344 = vld [vmem:[%s6 + $0x28] sm:$0xff]
    %v345 = vld [vmem:[%s6 + $0x30] sm:$0xff]
    %v346 = vld [vmem:[%s6 + $0x38] sm:$0xff]
    %v347 = vld [vmem:[%s6 + $0x40] sm:$0xff]
    %v348 = vld [vmem:[%s6 + $0x48] sm:$0xff]
    %v349 = vld [vmem:[%s6 + $0x50] sm:$0xff]
    %v350 = vld [vmem:[%s6 + $0x58] sm:$0xff]
    %v351 = vld [vmem:[%s6 + $0x60] sm:$0xff]
    %v352 = vld [vmem:[%s6 + $0x68] sm:$0xff]
    %v353 = vld [vmem:[%s6 + $0x70] sm:$0xff]
    %v354 = vld [vmem:[%s6 + $0x78] sm:$0xff]
    %v355 = vld [vmem:[%s4] sm:$0x1]
    %v357 = vlaneseq
    %v358 = vshrl.u32 %v357, 7
    %v359 = vsub.s32 0, %v358
    %v360 = vrot.slane %v355, %v359
    %v362 = vmul.f32 %v339, %v360
    %v363 = vmul.f32 %v340, %v360
    %v364 = vmul.f32 %v341, %v360
    %v365 = vmul.f32 %v342, %v360
    %v366 = vmul.f32 %v343, %v360
    %v367 = vmul.f32 %v344, %v360
    %v368 = vmul.f32 %v345, %v360
    %v369 = vmul.f32 %v346, %v360
    %v370 = vmul.f32 %v347, %v360
    %v371 = vmul.f32 %v348, %v360
    %v372 = vmul.f32 %v349, %v360
    %v373 = vmul.f32 %v350, %v360
    %v374 = vmul.f32 %v351, %v360
    %v375 = vmul.f32 %v352, %v360
    %v376 = vmul.f32 %v353, %v360
    %v377 = vmul.f32 %v354, %v360
    %v378 = vld [vmem:[%s5] sm:$0x1]
    %v380 = vlaneseq
    %v381 = vshrl.u32 %v380, 7
    %v382 = vsub.s32 0, %v381
    %v383 = vrot.slane %v378, %v382
    %v385 = vadd.f32 %v362, %v383
    %v386 = vadd.f32 %v363, %v383
    %v387 = vadd.f32 %v364, %v383
    %v388 = vadd.f32 %v365, %v383
    %v389 = vadd.f32 %v366, %v383
    %v390 = vadd.f32 %v367, %v383
    %v391 = vadd.f32 %v368, %v383
    %v392 = vadd.f32 %v369, %v383
    %v393 = vadd.f32 %v370, %v383
    %v394 = vadd.f32 %v371, %v383
    %v395 = vadd.f32 %v372, %v383
    %v396 = vadd.f32 %v373, %v383
    %v397 = vadd.f32 %v374, %v383
    %v398 = vadd.f32 %v375, %v383
    %v399 = vadd.f32 %v376, %v383
    %v400 = vadd.f32 %v377, %v383
    %v401 = vmax.f32 %v385, 0.0
    %v402 = vmax.f32 %v386, 0.0
    %v403 = vmax.f32 %v387, 0.0
    %v404 = vmax.f32 %v388, 0.0
    %v405 = vmax.f32 %v389, 0.0
    %v406 = vmax.f32 %v390, 0.0
    %v407 = vmax.f32 %v391, 0.0
    %v408 = vmax.f32 %v392, 0.0
    %v409 = vmax.f32 %v393, 0.0
    %v410 = vmax.f32 %v394, 0.0
    %v411 = vmax.f32 %v395, 0.0
    %v412 = vmax.f32 %v396, 0.0
    %v413 = vmax.f32 %v397, 0.0
    %v414 = vmax.f32 %v398, 0.0
    %v415 = vmax.f32 %v399, 0.0
    %v416 = vmax.f32 %v400, 0.0
    %417 = vst [vmem:[%s6] sm:$0xff] %v401
    %418 = vst [vmem:[%s6 + $0x8] sm:$0xff] %v402
    %419 = vst [vmem:[%s6 + $0x10] sm:$0xff] %v403
    %420 = vst [vmem:[%s6 + $0x18] sm:$0xff] %v404
    %421 = vst [vmem:[%s6 + $0x20] sm:$0xff] %v405
    %422 = vst [vmem:[%s6 + $0x28] sm:$0xff] %v406
    %423 = vst [vmem:[%s6 + $0x30] sm:$0xff] %v407
    %424 = vst [vmem:[%s6 + $0x38] sm:$0xff] %v408
    %425 = vst [vmem:[%s6 + $0x40] sm:$0xff] %v409
    %426 = vst [vmem:[%s6 + $0x48] sm:$0xff] %v410
    %427 = vst [vmem:[%s6 + $0x50] sm:$0xff] %v411
    %428 = vst [vmem:[%s6 + $0x58] sm:$0xff] %v412
    %429 = vst [vmem:[%s6 + $0x60] sm:$0xff] %v413
    %430 = vst [vmem:[%s6 + $0x68] sm:$0xff] %v414
    %431 = vst [vmem:[%s6 + $0x70] sm:$0xff] %v415
    %432 = vst [vmem:[%s6 + $0x78] sm:$0xff] %v416
  $region37: #{forward.17} parent=0 // pred_fallthru
    _
  // Predicated region
  $region38: #{forward.17} parent=0 // pred_check
    _
  $region39: #{forward.17} parent=0 // pred_check_branch
    %434 = sbr.rel (0) target = $region41
  $region40: #{forward.17} parent=0 // pred_region
    _
  $region41: #{forward.17} parent=0 // pred_fallthru
    _
  // Predicated region
  $region42: #{forward.17} parent=0 // pred_check
    _
  $region43: #{forward.17} parent=0 // pred_check_branch
    %436 = sbr.rel (0) target = $region45
  $region44: #{forward.17} parent=0 // pred_region
    _
  $region45: #{forward.17} parent=0 // pred_fallthru
    _

// kernel: forward.19
$region0: #{forward.19}
  #allocation0 [shape = 'u32[]', space=smem, size = 0x4, offset = 0x4, fixed_abs, tag = 'smem constant byte address 0x4 - core index']
  #allocation1 [shape = 'u32[144,128]{1,0:T(1,128)}', space=vmem, size = 0x12000, scoped, tag = 'internal scratch']
  %s0 = inlined_call_operand.vmem [shape: bf16[128,32], index: 0, kind: input, shape index: {}]
  %s1 = inlined_call_operand.vmem [shape: bf16[32,128], index: 1, kind: input, shape index: {}]
  %s2 = inlined_call_operand.vmem [shape: f32[1,32], index: 2, kind: input, shape index: {}]
  %s3 = inlined_call_operand.vmem [shape: f32[1,32], index: 3, kind: input, shape index: {}]
  %s4 = inlined_call_operand.vmem [shape: f32[128,128], index: 4, kind: output, shape index: {}]
  %s5 = sld [smem:[#allocation0]]
  $region34: #{forward.19} parent=0
    _
  %s7 = ssub.s32 1, %s5
  %s8 = scalar_select 0, %s7, %s5
  // Predicated region
  $region2: #{forward.19} parent=0 // pred_check
    _
  $region3: #{forward.19} parent=0 // pred_check_branch
    %10 = sbr.rel (0) target = $region5
  $region4: #{forward.19} parent=0 // pred_region
    _
  $region5: #{forward.19} parent=0 // pred_fallthru
    _
  // Predicated region
  $region6: #{forward.19} parent=0 // pred_check
    _
  $region7: #{forward.19} parent=0 // pred_check_branch
    %12 = sbr.rel (0) target = $region9
  $region8: #{forward.19} parent=0 // pred_region
    _
  $region9: #{forward.19} parent=0 // pred_fallthru
    _
  // Predicated region
  $region10: #{forward.19} parent=0 // pred_check
    _
  $region11: #{forward.19} parent=0 // pred_check_branch
    %14 = sbr.rel (0) target = $region13
  $region12: #{forward.19} parent=0 // pred_region
    _
  $region13: #{forward.19} parent=0 // pred_fallthru
    _
  // Predicated region
  $region14: #{forward.19} parent=0 // pred_check
    _
  $region15: #{forward.19} parent=0 // pred_check_branch
    %16 = sbr.rel (0) target = $region17
  $region16: #{forward.19} parent=0 // pred_region
    _
  $region17: #{forward.19} parent=0 // pred_fallthru
    _
  %v18 = vld [vmem:[%s0] sm:$0xf]
  %v19 = vld [vmem:[%s0 + $0x4] sm:$0xf]
  %v20 = vld [vmem:[%s0 + $0x8] sm:$0xf]
  %v21 = vld [vmem:[%s0 + $0xc] sm:$0xf]
  %v22 = vld [vmem:[%s0 + $0x10] sm:$0xf]
  %v23 = vld [vmem:[%s0 + $0x14] sm:$0xf]
  %v24 = vld [vmem:[%s0 + $0x18] sm:$0xf]
  %v25 = vld [vmem:[%s0 + $0x1c] sm:$0xf]
  %v26 = vld [vmem:[%s0 + $0x20] sm:$0xf]
  %v27 = vld [vmem:[%s0 + $0x24] sm:$0xf]
  %v28 = vld [vmem:[%s0 + $0x28] sm:$0xf]
  %v29 = vld [vmem:[%s0 + $0x2c] sm:$0xf]
  %v30 = vld [vmem:[%s0 + $0x30] sm:$0xf]
  %v31 = vld [vmem:[%s0 + $0x34] sm:$0xf]
  %v32 = vld [vmem:[%s0 + $0x38] sm:$0xf]
  %v33 = vld [vmem:[%s0 + $0x3c] sm:$0xf]
  %v34 = vunpack.c.l.bf16 %v18
  %v35 = vunpack.c.l.bf16 %v19
  %v36 = vunpack.c.l.bf16 %v20
  %v37 = vunpack.c.l.bf16 %v21
  %v38 = vunpack.c.l.bf16 %v22
  %v39 = vunpack.c.l.bf16 %v23
  %v40 = vunpack.c.l.bf16 %v24
  %v41 = vunpack.c.l.bf16 %v25
  %v42 = vunpack.c.l.bf16 %v26
  %v43 = vunpack.c.l.bf16 %v27
  %v44 = vunpack.c.l.bf16 %v28
  %v45 = vunpack.c.l.bf16 %v29
  %v46 = vunpack.c.l.bf16 %v30
  %v47 = vunpack.c.l.bf16 %v31
  %v48 = vunpack.c.l.bf16 %v32
  %v49 = vunpack.c.l.bf16 %v33
  %v50 = vld [vmem:[%s2] sm:$0x1]
  %v52 = vlaneseq
  %v53 = vshrl.u32 %v52, 7
  %v54 = vsub.s32 0, %v53
  %v55 = vrot.slane %v50, %v54
  %v57 = vmul.f32 %v34, %v55
  %v58 = vmul.f32 %v35, %v55
  %v59 = vmul.f32 %v36, %v55
  %v60 = vmul.f32 %v37, %v55
  %v61 = vmul.f32 %v38, %v55
  %v62 = vmul.f32 %v39, %v55
  %v63 = vmul.f32 %v40, %v55
  %v64 = vmul.f32 %v41, %v55
  %v65 = vmul.f32 %v42, %v55
  %v66 = vmul.f32 %v43, %v55
  %v67 = vmul.f32 %v44, %v55
  %v68 = vmul.f32 %v45, %v55
  %v69 = vmul.f32 %v46, %v55
  %v70 = vmul.f32 %v47, %v55
  %v71 = vmul.f32 %v48, %v55
  %v72 = vmul.f32 %v49, %v55
  %v73 = vld [vmem:[%s3] sm:$0x1]
  %v75 = vlaneseq
  %v76 = vshrl.u32 %v75, 7
  %v77 = vsub.s32 0, %v76
  %v78 = vrot.slane %v73, %v77
  %v80 = vadd.f32 %v57, %v78
  %v81 = vadd.f32 %v58, %v78
  %v82 = vadd.f32 %v59, %v78
  %v83 = vadd.f32 %v60, %v78
  %v84 = vadd.f32 %v61, %v78
  %v85 = vadd.f32 %v62, %v78
  %v86 = vadd.f32 %v63, %v78
  %v87 = vadd.f32 %v64, %v78
  %v88 = vadd.f32 %v65, %v78
  %v89 = vadd.f32 %v66, %v78
  %v90 = vadd.f32 %v67, %v78
  %v91 = vadd.f32 %v68, %v78
  %v92 = vadd.f32 %v69, %v78
  %v93 = vadd.f32 %v70, %v78
  %v94 = vadd.f32 %v71, %v78
  %v95 = vadd.f32 %v72, %v78
  %v96 = vmax.f32 %v80, 0.0
  %v97 = vmax.f32 %v81, 0.0
  %v98 = vmax.f32 %v82, 0.0
  %v99 = vmax.f32 %v83, 0.0
  %v100 = vmax.f32 %v84, 0.0
  %v101 = vmax.f32 %v85, 0.0
  %v102 = vmax.f32 %v86, 0.0
  %v103 = vmax.f32 %v87, 0.0
  %v104 = vmax.f32 %v88, 0.0
  %v105 = vmax.f32 %v89, 0.0
  %v106 = vmax.f32 %v90, 0.0
  %v107 = vmax.f32 %v91, 0.0
  %v108 = vmax.f32 %v92, 0.0
  %v109 = vmax.f32 %v93, 0.0
  %v110 = vmax.f32 %v94, 0.0
  %v111 = vmax.f32 %v95, 0.0
  %v112 = vpack.c.bf16 %v97, %v96
  %v113 = vpack.c.bf16 %v99, %v98
  %v114 = vpack.c.bf16 %v101, %v100
  %v115 = vpack.c.bf16 %v103, %v102
  %v116 = vpack.c.bf16 %v105, %v104
  %v117 = vpack.c.bf16 %v107, %v106
  %v118 = vpack.c.bf16 %v109, %v108
  %v119 = vpack.c.bf16 %v111, %v110
  %v120 = vld [vmem:[%s1] sm:$0xf]
  %v121 = vld [vmem:[%s1 + $0x4] sm:$0xf]
  %v122 = vld [vmem:[%s1 + $0x8] sm:$0xf]
  %v123 = vld [vmem:[%s1 + $0xc] sm:$0xf]
  %v128 = vunpack.c.l.b16 %v120
  %v129 = vunpack.c.l.b16 %v121
  %v130 = vunpack.c.l.b16 %v122
  %v131 = vunpack.c.l.b16 %v123
  %v132 = vpack.c.b16 %v129, %v128
  %v133 = vpack.c.b16 %v131, %v130
  %vm136 = vcmask 261120
  %v138 = vsel %vm136, %v112, 0
  %v141 = vsel %vm136, %v113, 0
  %v144 = vsel %vm136, %v114, 0
  %v147 = vsel %vm136, %v115, 0
  %v150 = vsel %vm136, %v116, 0
  %v153 = vsel %vm136, %v117, 0
  %v156 = vsel %vm136, %v118, 0
  %v159 = vsel %vm136, %v119, 0
  %161 = vmatprep.subr.bf16.mxu0 0
  %162 = vmatpush1.bf16.msra.mxu0 %v132
  %163 = vmatprep.subr.bf16.mxu0 0
  %164 = vmatpush1.bf16.msra.mxu0 %v133
  %165 = vmatprep.subr.bf16.mxu0 0
  %166 = vmatpush1.bf16.msra.mxu0 0
  %167 = vmatprep.subr.bf16.mxu0 0
  %168 = vmatpush1.bf16.msra.mxu0 0
  %169 = vmatprep.subr.bf16.mxu0 0
  %170 = vmatpush1.bf16.msra.mxu0 0
  %171 = vmatprep.subr.bf16.mxu0 0
  %172 = vmatpush1.bf16.msra.mxu0 0
  %173 = vmatprep.subr.bf16.mxu0 0
  %174 = vmatpush1.bf16.msra.mxu0 0
  %175 = vmatprep.subr.bf16.mxu0 0
  %176 = vmatpush1.bf16.msra.mxu0 0
  %177 = vmatprep.subr.bf16.mxu0 0
  %178 = vmatpush1.bf16.msra.mxu0 0
  %179 = vmatprep.subr.bf16.mxu0 0
  %180 = vmatpush1.bf16.msra.mxu0 0
  %181 = vmatprep.subr.bf16.mxu0 0
  %182 = vmatpush1.bf16.msra.mxu0 0
  %183 = vmatprep.subr.bf16.mxu0 0
  %184 = vmatpush1.bf16.msra.mxu0 0
  %185 = vmatprep.subr.bf16.mxu0 0
  %186 = vmatpush1.bf16.msra.mxu0 0
  %187 = vmatprep.subr.bf16.mxu0 0
  %188 = vmatpush1.bf16.msra.mxu0 0
  %189 = vmatprep.subr.bf16.mxu0 0
  %190 = vmatpush1.bf16.msra.mxu0 0
  %191 = vmatprep.subr.bf16.mxu0 0
  %192 = vmatpush1.bf16.msra.mxu0 0
  %193 = vmatprep.mubr.bf16.mxu0 0
  %194 = vmatmul.mubr.bf16.gmra.mrb[0].mxu0 %v138
  %v195 = vpop.f32.mrb[0].mxu0
  %v196 = vadd.f32 0.0, %v195
  %v197 = vpop.f32.mrb[0].mxu0
  %v198 = vpop.f32.mrb[0].mxu0
  %v199 = vadd.f32 0.0, %v198
  %v200 = vpop.f32.mrb[0].mxu0
  %201 = vmatprep.mubr.bf16.mxu0 0
  %202 = vmatmul.mubr.bf16.gmra.mrb[0].mxu0 %v141
  %v203 = vpop.f32.mrb[0].mxu0
  %v204 = vadd.f32 0.0, %v203
  %v205 = vpop.f32.mrb[0].mxu0
  %v206 = vpop.f32.mrb[0].mxu0
  %v207 = vadd.f32 0.0, %v206
  %v208 = vpop.f32.mrb[0].mxu0
  %209 = vmatprep.mubr.bf16.mxu0 0
  %210 = vmatmul.mubr.bf16.gmra.mrb[0].mxu0 %v144
  %v211 = vpop.f32.mrb[0].mxu0
  %v212 = vadd.f32 0.0, %v211
  %v213 = vpop.f32.mrb[0].mxu0
  %v214 = vpop.f32.mrb[0].mxu0
  %v215 = vadd.f32 0.0, %v214
  %v216 = vpop.f32.mrb[0].mxu0
  %217 = vmatprep.mubr.bf16.mxu0 0
  %218 = vmatmul.mubr.bf16.gmra.mrb[0].mxu0 %v147
  %v219 = vpop.f32.mrb[0].mxu0
  %v220 = vadd.f32 0.0, %v219
  %v221 = vpop.f32.mrb[0].mxu0
  %v222 = vpop.f32.mrb[0].mxu0
  %v223 = vadd.f32 0.0, %v222
  %v224 = vpop.f32.mrb[0].mxu0
  %225 = vmatprep.mubr.bf16.mxu0 0
  %226 = vmatmul.mubr.bf16.gmra.mrb[0].mxu0 %v150
  %v227 = vpop.f32.mrb[0].mxu0
  %v228 = vadd.f32 0.0, %v227
  %v229 = vpop.f32.mrb[0].mxu0
  %v230 = vpop.f32.mrb[0].mxu0
  %v231 = vadd.f32 0.0, %v230
  %v232 = vpop.f32.mrb[0].mxu0
  %233 = vmatprep.mubr.bf16.mxu0 0
  %234 = vmatmul.mubr.bf16.gmra.mrb[0].mxu0 %v153
  %v235 = vpop.f32.mrb[0].mxu0
  %v236 = vadd.f32 0.0, %v235
  %v237 = vpop.f32.mrb[0].mxu0
  %v238 = vpop.f32.mrb[0].mxu0
  %v239 = vadd.f32 0.0, %v238
  %v240 = vpop.f32.mrb[0].mxu0
  %241 = vmatprep.mubr.bf16.mxu0 0
  %242 = vmatmul.mubr.bf16.gmra.mrb[0].mxu0 %v156
  %v243 = vpop.f32.mrb[0].mxu0
  %v244 = vadd.f32 0.0, %v243
  %v245 = vpop.f32.mrb[0].mxu0
  %v246 = vpop.f32.mrb[0].mxu0
  %v247 = vadd.f32 0.0, %v246
  %v248 = vpop.f32.mrb[0].mxu0
  %249 = vmatprep.mubr.bf16.mxu0 0
  %250 = vmatmul.mubr.bf16.gmra.mrb[0].mxu0 %v159
  %v251 = vpop.f32.mrb[0].mxu0
  %v252 = vadd.f32 0.0, %v251
  %v253 = vpop.f32.mrb[0].mxu0
  %v254 = vpop.f32.mrb[0].mxu0
  %v255 = vadd.f32 0.0, %v254
  %v256 = vpop.f32.mrb[0].mxu0
  %257 = vdwg.mxu0
  %p258 = scmp.eq.s32.totalorder 0, 0
  // Predicated region
  $region18: #{forward.19} parent=0 // pred_check
    %p259 = pneg %p258
  $region19: #{forward.19} parent=0 // pred_check_branch
    %261 = sbr.rel (%p259) target = $region21
  $region20: #{forward.19} parent=0 // pred_region
    %262 = vst [vmem:[%s4] sm:$0xff] %v196
    %263 = vst [vmem:[%s4 + $0x8] sm:$0xff] %v199
    %264 = vst [vmem:[%s4 + $0x10] sm:$0xff] %v204
    %265 = vst [vmem:[%s4 + $0x18] sm:$0xff] %v207
    %266 = vst [vmem:[%s4 + $0x20] sm:$0xff] %v212
    %267 = vst [vmem:[%s4 + $0x28] sm:$0xff] %v215
    %268 = vst [vmem:[%s4 + $0x30] sm:$0xff] %v220
    %269 = vst [vmem:[%s4 + $0x38] sm:$0xff] %v223
    %270 = vst [vmem:[%s4 + $0x40] sm:$0xff] %v228
    %271 = vst [vmem:[%s4 + $0x48] sm:$0xff] %v231
    %272 = vst [vmem:[%s4 + $0x50] sm:$0xff] %v236
    %273 = vst [vmem:[%s4 + $0x58] sm:$0xff] %v239
    %274 = vst [vmem:[%s4 + $0x60] sm:$0xff] %v244
    %275 = vst [vmem:[%s4 + $0x68] sm:$0xff] %v247
    %276 = vst [vmem:[%s4 + $0x70] sm:$0xff] %v252
    %277 = vst [vmem:[%s4 + $0x78] sm:$0xff] %v255
  $region21: #{forward.19} parent=0 // pred_fallthru
    _
  %p278 = scmp.gt.s32.totalorder 0, 0
  // Predicated region
  $region22: #{forward.19} parent=0 // pred_check
    %p279 = pneg %p278
  $region23: #{forward.19} parent=0 // pred_check_branch
    %281 = sbr.rel (%p279) target = $region25
  $region24: #{forward.19} parent=0 // pred_region
    %v282 = vld [vmem:[%s4] sm:$0xff]
    %v283 = vld [vmem:[%s4 + $0x8] sm:$0xff]
    %v284 = vld [vmem:[%s4 + $0x10] sm:$0xff]
    %v285 = vld [vmem:[%s4 + $0x18] sm:$0xff]
    %v286 = vld [vmem:[%s4 + $0x20] sm:$0xff]
    %v287 = vld [vmem:[%s4 + $0x28] sm:$0xff]
    %v288 = vld [vmem:[%s4 + $0x30] sm:$0xff]
    %v289 = vld [vmem:[%s4 + $0x38] sm:$0xff]
    %v290 = vld [vmem:[%s4 + $0x40] sm:$0xff]
    %v291 = vld [vmem:[%s4 + $0x48] sm:$0xff]
    %v292 = vld [vmem:[%s4 + $0x50] sm:$0xff]
    %v293 = vld [vmem:[%s4 + $0x58] sm:$0xff]
    %v294 = vld [vmem:[%s4 + $0x60] sm:$0xff]
    %v295 = vld [vmem:[%s4 + $0x68] sm:$0xff]
    %v296 = vld [vmem:[%s4 + $0x70] sm:$0xff]
    %v297 = vld [vmem:[%s4 + $0x78] sm:$0xff]
    %v298 = vadd.f32 %v282, %v196
    %v299 = vadd.f32 %v283, %v199
    %v300 = vadd.f32 %v284, %v204
    %v301 = vadd.f32 %v285, %v207
    %v302 = vadd.f32 %v286, %v212
    %v303 = vadd.f32 %v287, %v215
    %v304 = vadd.f32 %v288, %v220
    %v305 = vadd.f32 %v289, %v223
    %v306 = vadd.f32 %v290, %v228
    %v307 = vadd.f32 %v291, %v231
    %v308 = vadd.f32 %v292, %v236
    %v309 = vadd.f32 %v293, %v239
    %v310 = vadd.f32 %v294, %v244
    %v311 = vadd.f32 %v295, %v247
    %v312 = vadd.f32 %v296, %v252
    %v313 = vadd.f32 %v297, %v255
    %314 = vst [vmem:[%s4] sm:$0xff] %v298
    %315 = vst [vmem:[%s4 + $0x8] sm:$0xff] %v299
    %316 = vst [vmem:[%s4 + $0x10] sm:$0xff] %v300
    %317 = vst [vmem:[%s4 + $0x18] sm:$0xff] %v301
    %318 = vst [vmem:[%s4 + $0x20] sm:$0xff] %v302
    %319 = vst [vmem:[%s4 + $0x28] sm:$0xff] %v303
    %320 = vst [vmem:[%s4 + $0x30] sm:$0xff] %v304
    %321 = vst [vmem:[%s4 + $0x38] sm:$0xff] %v305
    %322 = vst [vmem:[%s4 + $0x40] sm:$0xff] %v306
    %323 = vst [vmem:[%s4 + $0x48] sm:$0xff] %v307
    %324 = vst [vmem:[%s4 + $0x50] sm:$0xff] %v308
    %325 = vst [vmem:[%s4 + $0x58] sm:$0xff] %v309
    %326 = vst [vmem:[%s4 + $0x60] sm:$0xff] %v310
    %327 = vst [vmem:[%s4 + $0x68] sm:$0xff] %v311
    %328 = vst [vmem:[%s4 + $0x70] sm:$0xff] %v312
    %329 = vst [vmem:[%s4 + $0x78] sm:$0xff] %v313
  $region25: #{forward.19} parent=0 // pred_fallthru
    _
  // Predicated region
  $region26: #{forward.19} parent=0 // pred_check
    _
  $region27: #{forward.19} parent=0 // pred_check_branch
    %331 = sbr.rel (0) target = $region29
  $region28: #{forward.19} parent=0 // pred_region
    _
  $region29: #{forward.19} parent=0 // pred_fallthru
    _
  // Predicated region
  $region30: #{forward.19} parent=0 // pred_check
    _
  $region31: #{forward.19} parent=0 // pred_check_branch
    %333 = sbr.rel (0) target = $region33
  $region32: #{forward.19} parent=0 // pred_region
    _
  $region33: #{forward.19} parent=0 // pred_fallthru
    _

// kernel: forward.20
$region0: #{forward.20}
  #allocation0 [shape = 'u32[]', space=smem, size = 0x4, offset = 0x4, fixed_abs, tag = 'smem constant byte address 0x4 - core index']
  #allocation1 [shape = 'u32[144,128]{1,0:T(1,128)}', space=vmem, size = 0x12000, scoped, tag = 'internal scratch']
  %s0 = inlined_call_operand.vmem [shape: f32[4,2,256], index: 0, kind: input, shape index: {}]
  %s1 = inlined_call_operand.vmem [shape: f32[2,256], index: 1, kind: output, shape index: {}]
  %s2 = sld [smem:[#allocation0]]
  $region14: #{forward.20} parent=0
    _
  %s4 = ssub.s32 1, %s2
  %s5 = scalar_select 0, %s4, %s2
  // Predicated region
  $region2: #{forward.20} parent=0 // pred_check
    _
  $region3: #{forward.20} parent=0 // pred_check_branch
    %7 = sbr.rel (0) target = $region5
  $region4: #{forward.20} parent=0 // pred_region
    _
  $region5: #{forward.20} parent=0 // pred_fallthru
    _
  %v8 = vld [vmem:[%s0] sm:$0xf]
  %v9 = vld [vmem:[%s0 + $0x4] sm:$0xf]
  %v10 = vld [vmem:[%s0 + $0x8] sm:$0xf]
  %v11 = vld [vmem:[%s0 + $0xc] sm:$0xf]
  %v17 = vunpack.c.l.s4 1983009808
  %v18 = vunpack.c.0.s8 %v17
  %v19 = vlaneseq
  %v20 = vshrl.u32 %v19, 7
  %v21 = vsub.s32 %v18, %v20
  %v22 = vrot.slane %v8, %v21
  %v23 = vcombine.high %v22, %v22
  %v25 = vunpack.c.l.s4 1983009808
  %v26 = vunpack.c.0.s8 %v25
  %v27 = vlaneseq
  %v28 = vshrl.u32 %v27, 7
  %v29 = vsub.s32 %v26, %v28
  %v30 = vrot.slane %v9, %v29
  %v31 = vcombine.high %v30, %v30
  %v33 = vunpack.c.l.s4 1983009808
  %v34 = vunpack.c.0.s8 %v33
  %v35 = vlaneseq
  %v36 = vshrl.u32 %v35, 7
  %v37 = vsub.s32 %v34, %v36
  %v38 = vrot.slane %v10, %v37
  %v39 = vcombine.high %v38, %v38
  %v41 = vunpack.c.l.s4 1983009808
  %v42 = vunpack.c.0.s8 %v41
  %v43 = vlaneseq
  %v44 = vshrl.u32 %v43, 7
  %v45 = vsub.s32 %v42, %v44
  %v46 = vrot.slane %v11, %v45
  %v47 = vcombine.high %v46, %v46
  %vm56 = vcmask 1041408
  %v57 = vsel %vm56, %v22, 0.0
  %v58 = vsel %vm56, %v30, 0.0
  %v59 = vadd.f32 %v57, %v58
  %v60 = vsel %vm56, %v38, 0.0
  %v61 = vadd.f32 %v59, %v60
  %v62 = vsel %vm56, %v46, 0.0
  %v63 = vadd.f32 %v61, %v62
  %v64 = vsel %vm56, %v23, 0.0
  %v65 = vsel %vm56, %v31, 0.0
  %v66 = vadd.f32 %v64, %v65
  %v67 = vsel %vm56, %v39, 0.0
  %v68 = vadd.f32 %v66, %v67
  %v69 = vsel %vm56, %v47, 0.0
  %v70 = vadd.f32 %v68, %v69
  %v71 = vrcp.pop 4.0
  %v72 = vmul.f32 %v63, %v71
  %v73 = vmul.f32 %v70, %v71
  %v76 = vcombine.low %v72, %v73
  %v78 = vunpack.c.l.s4 1983009808
  %v79 = vunpack.c.0.s8 %v78
  %v80 = vlaneseq
  %v81 = vshrl.u32 %v80, 7
  %v82 = vsub.s32 %v79, %v81
  %v83 = vrot.slane %v76, %v82
  %85 = vst [vmem:[%s1] sm:$0xf] %v83
  // Predicated region
  $region6: #{forward.20} parent=0 // pred_check
    _
  $region7: #{forward.20} parent=0 // pred_check_branch
    %87 = sbr.rel (0) target = $region9
  $region8: #{forward.20} parent=0 // pred_region
    _
  $region9: #{forward.20} parent=0 // pred_fallthru
    _
  // Predicated region
  $region10: #{forward.20} parent=0 // pred_check
    _
  $region11: #{forward.20} parent=0 // pred_check_branch
    %89 = sbr.rel (0) target = $region13
  $region12: #{forward.20} parent=0 // pred_region
    _
  $region13: #{forward.20} parent=0 // pred_fallthru
    _

// kernel: forward.21
$region0: #{forward.21}
  #allocation0 [shape = 'u32[]', space=smem, size = 0x4, offset = 0x4, fixed_abs, tag = 'smem constant byte address 0x4 - core index']
  #allocation1 [shape = 'u32[144,128]{1,0:T(1,128)}', space=vmem, size = 0x12000, scoped, tag = 'internal scratch']
  %s0 = inlined_call_operand.vmem [shape: bf16[32,16], index: 0, kind: input, shape index: {}]
  %s1 = inlined_call_operand.vmem [shape: bf16[16,128], index: 1, kind: input, shape index: {}]
  %s2 = inlined_call_operand.vmem [shape: f32[1,16], index: 2, kind: input, shape index: {}]
  %s3 = inlined_call_operand.vmem [shape: f32[1,16], index: 3, kind: input, shape index: {}]
  %s4 = inlined_call_operand.vmem [shape: f32[1,128], index: 4, kind: input, shape index: {}]
  %s5 = inlined_call_operand.vmem [shape: f32[1,128], index: 5, kind: input, shape index: {}]
  %s6 = inlined_call_operand.vmem [shape: f32[32,128], index: 6, kind: output, shape index: {}]
  %s7 = sld [smem:[#allocation0]]
  $region46: #{forward.21} parent=0
    _
  %s9 = ssub.s32 1, %s7
  %s10 = scalar_select 0, %s9, %s7
  // Predicated region
  $region2: #{forward.21} parent=0 // pred_check
    _
  $region3: #{forward.21} parent=0 // pred_check_branch
    %12 = sbr.rel (0) target = $region5
  $region4: #{forward.21} parent=0 // pred_region
    _
  $region5: #{forward.21} parent=0 // pred_fallthru
    _
  // Predicated region
  $region6: #{forward.21} parent=0 // pred_check
    _
  $region7: #{forward.21} parent=0 // pred_check_branch
    %14 = sbr.rel (0) target = $region9
  $region8: #{forward.21} parent=0 // pred_region
    _
  $region9: #{forward.21} parent=0 // pred_fallthru
    _
  // Predicated region
  $region10: #{forward.21} parent=0 // pred_check
    _
  $region11: #{forward.21} parent=0 // pred_check_branch
    %16 = sbr.rel (0) target = $region13
  $region12: #{forward.21} parent=0 // pred_region
    _
  $region13: #{forward.21} parent=0 // pred_fallthru
    _
  // Predicated region
  $region14: #{forward.21} parent=0 // pred_check
    _
  $region15: #{forward.21} parent=0 // pred_check_branch
    %18 = sbr.rel (0) target = $region17
  $region16: #{forward.21} parent=0 // pred_region
    _
  $region17: #{forward.21} parent=0 // pred_fallthru
    _
  // Predicated region
  $region18: #{forward.21} parent=0 // pred_check
    _
  $region19: #{forward.21} parent=0 // pred_check_branch
    %20 = sbr.rel (0) target = $region21
  $region20: #{forward.21} parent=0 // pred_region
    _
  $region21: #{forward.21} parent=0 // pred_fallthru
    _
  // Predicated region
  $region22: #{forward.21} parent=0 // pred_check
    _
  $region23: #{forward.21} parent=0 // pred_check_branch
    %22 = sbr.rel (0) target = $region25
  $region24: #{forward.21} parent=0 // pred_region
    _
  $region25: #{forward.21} parent=0 // pred_fallthru
    _
  %v24 = vld [vmem:[%s0] sm:$0xf]
  %v25 = vld [vmem:[%s0 + $0x4] sm:$0xf]
  %v26 = vld [vmem:[%s0 + $0x8] sm:$0xf]
  %v27 = vld [vmem:[%s0 + $0xc] sm:$0xf]
  %v28 = vunpack.c.l.bf16 %v24
  %v29 = vunpack.c.l.bf16 %v25
  %v30 = vunpack.c.l.bf16 %v26
  %v31 = vunpack.c.l.bf16 %v27
  %v32 = vld [vmem:[%s2] sm:$0x1]
  %v34 = vlaneseq
  %v35 = vshrl.u32 %v34, 7
  %v36 = vsub.s32 0, %v35
  %v37 = vrot.slane %v32, %v36
  %v39 = vmul.f32 %v28, %v37
  %v40 = vmul.f32 %v29, %v37
  %v41 = vmul.f32 %v30, %v37
  %v42 = vmul.f32 %v31, %v37
  %v43 = vld [vmem:[%s3] sm:$0x1]
  %v45 = vlaneseq
  %v46 = vshrl.u32 %v45, 7
  %v47 = vsub.s32 0, %v46
  %v48 = vrot.slane %v43, %v47
  %v50 = vadd.f32 %v39, %v48
  %v51 = vadd.f32 %v40, %v48
  %v52 = vadd.f32 %v41, %v48
  %v53 = vadd.f32 %v42, %v48
  %v54 = vmax.f32 %v50, 0.0
  %v55 = vmax.f32 %v51, 0.0
  %v56 = vmax.f32 %v52, 0.0
  %v57 = vmax.f32 %v53, 0.0
  %v58 = vpack.c.bf16 %v55, %v54
  %v59 = vpack.c.bf16 %v57, %v56
  %v60 = vld [vmem:[%s1] sm:$0xf]
  %v61 = vld [vmem:[%s1 + $0x4] sm:$0xf]
  %v64 = vunpack.c.l.b16 %v60
  %v65 = vunpack.c.l.b16 %v61
  %v66 = vpack.c.b16 %v65, %v64
  %vm68 = vcmask 130048
  %v70 = vsel %vm68, %v58, 0
  %v73 = vsel %vm68, %v59, 0
  %75 = vmatprep.subr.bf16.mxu0 0
  %76 = vmatpush1.bf16.msra.mxu0 %v66
  %77 = vmatprep.subr.bf16.mxu0 0
  %78 = vmatpush1.bf16.msra.mxu0 0
  %79 = vmatprep.subr.bf16.mxu0 0
  %80 = vmatpush1.bf16.msra.mxu0 0
  %81 = vmatprep.subr.bf16.mxu0 0
  %82 = vmatpush1.bf16.msra.mxu0 0
  %83 = vmatprep.subr.bf16.mxu0 0
  %84 = vmatpush1.bf16.msra.mxu0 0
  %85 = vmatprep.subr.bf16.mxu0 0
  %86 = vmatpush1.bf16.msra.mxu0 0
  %87 = vmatprep.subr.bf16.mxu0 0
  %88 = vmatpush1.bf16.msra.mxu0 0
  %89 = vmatprep.subr.bf16.mxu0 0
  %90 = vmatpush1.bf16.msra.mxu0 0
  %91 = vmatprep.subr.bf16.mxu0 0
  %92 = vmatpush1.bf16.msra.mxu0 0
  %93 = vmatprep.subr.bf16.mxu0 0
  %94 = vmatpush1.bf16.msra.mxu0 0
  %95 = vmatprep.subr.bf16.mxu0 0
  %96 = vmatpush1.bf16.msra.mxu0 0
  %97 = vmatprep.subr.bf16.mxu0 0
  %98 = vmatpush1.bf16.msra.mxu0 0
  %99 = vmatprep.subr.bf16.mxu0 0
  %100 = vmatpush1.bf16.msra.mxu0 0
  %101 = vmatprep.subr.bf16.mxu0 0
  %102 = vmatpush1.bf16.msra.mxu0 0
  %103 = vmatprep.subr.bf16.mxu0 0
  %104 = vmatpush1.bf16.msra.mxu0 0
  %105 = vmatprep.subr.bf16.mxu0 0
  %106 = vmatpush1.bf16.msra.mxu0 0
  %107 = vmatprep.mubr.bf16.mxu0 0
  %108 = vmatmul.mubr.bf16.gmra.mrb[0].mxu0 %v70
  %v109 = vpop.f32.mrb[0].mxu0
  %v110 = vadd.f32 0.0, %v109
  %v111 = vpop.f32.mrb[0].mxu0
  %v112 = vpop.f32.mrb[0].mxu0
  %v113 = vadd.f32 0.0, %v112
  %v114 = vpop.f32.mrb[0].mxu0
  %115 = vmatprep.mubr.bf16.mxu0 0
  %116 = vmatmul.mubr.bf16.gmra.mrb[0].mxu0 %v73
  %v117 = vpop.f32.mrb[0].mxu0
  %v118 = vadd.f32 0.0, %v117
  %v119 = vpop.f32.mrb[0].mxu0
  %v120 = vpop.f32.mrb[0].mxu0
  %v121 = vadd.f32 0.0, %v120
  %v122 = vpop.f32.mrb[0].mxu0
  %123 = vdwg.mxu0
  %p124 = scmp.eq.s32.totalorder 0, 0
  // Predicated region
  $region26: #{forward.21} parent=0 // pred_check
    %p125 = pneg %p124
  $region27: #{forward.21} parent=0 // pred_check_branch
    %127 = sbr.rel (%p125) target = $region29
  $region28: #{forward.21} parent=0 // pred_region
    %128 = vst [vmem:[%s6] sm:$0xff] %v110
    %129 = vst [vmem:[%s6 + $0x8] sm:$0xff] %v113
    %130 = vst [vmem:[%s6 + $0x10] sm:$0xff] %v118
    %131 = vst [vmem:[%s6 + $0x18] sm:$0xff] %v121
  $region29: #{forward.21} parent=0 // pred_fallthru
    _
  %p132 = scmp.gt.s32.totalorder 0, 0
  // Predicated region
  $region30: #{forward.21} parent=0 // pred_check
    %p133 = pneg %p132
  $region31: #{forward.21} parent=0 // pred_check_branch
    %135 = sbr.rel (%p133) target = $region33
  $region32: #{forward.21} parent=0 // pred_region
    %v136 = vld [vmem:[%s6] sm:$0xff]
    %v137 = vld [vmem:[%s6 + $0x8] sm:$0xff]
    %v138 = vld [vmem:[%s6 + $0x10] sm:$0xff]
    %v139 = vld [vmem:[%s6 + $0x18] sm:$0xff]
    %v140 = vadd.f32 %v136, %v110
    %v141 = vadd.f32 %v137, %v113
    %v142 = vadd.f32 %v138, %v118
    %v143 = vadd.f32 %v139, %v121
    %144 = vst [vmem:[%s6] sm:$0xff] %v140
    %145 = vst [vmem:[%s6 + $0x8] sm:$0xff] %v141
    %146 = vst [vmem:[%s6 + $0x10] sm:$0xff] %v142
    %147 = vst [vmem:[%s6 + $0x18] sm:$0xff] %v143
  $region33: #{forward.21} parent=0 // pred_fallthru
    _
  // Predicated region
  $region34: #{forward.21} parent=0 // pred_check
    %p148 = pneg %p124
  $region35: #{forward.21} parent=0 // pred_check_branch
    %150 = sbr.rel (%p148) target = $region37
  $region36: #{forward.21} parent=0 // pred_region
    %v151 = vld [vmem:[%s6] sm:$0xff]
    %v152 = vld [vmem:[%s6 + $0x8] sm:$0xff]
    %v153 = vld [vmem:[%s6 + $0x10] sm:$0xff]
    %v154 = vld [vmem:[%s6 + $0x18] sm:$0xff]
    %v155 = vld [vmem:[%s4] sm:$0x1]
    %v157 = vlaneseq
    %v158 = vshrl.u32 %v157, 7
    %v159 = vsub.s32 0, %v158
    %v160 = vrot.slane %v155, %v159
    %v162 = vmul.f32 %v151, %v160
    %v163 = vmul.f32 %v152, %v160
    %v164 = vmul.f32 %v153, %v160
    %v165 = vmul.f32 %v154, %v160
    %v166 = vld [vmem:[%s5] sm:$0x1]
    %v168 = vlaneseq
    %v169 = vshrl.u32 %v168, 7
    %v170 = vsub.s32 0, %v169
    %v171 = vrot.slane %v166, %v170
    %v173 = vadd.f32 %v162, %v171
    %v174 = vadd.f32 %v163, %v171
    %v175 = vadd.f32 %v164, %v171
    %v176 = vadd.f32 %v165, %v171
    %v177 = vmax.f32 %v173, 0.0
    %v178 = vmax.f32 %v174, 0.0
    %v179 = vmax.f32 %v175, 0.0
    %v180 = vmax.f32 %v176, 0.0
    %181 = vst [vmem:[%s6] sm:$0xff] %v177
    %182 = vst [vmem:[%s6 + $0x8] sm:$0xff] %v178
    %183 = vst [vmem:[%s6 + $0x10] sm:$0xff] %v179
    %184 = vst [vmem:[%s6 + $0x18] sm:$0xff] %v180
  $region37: #{forward.21} parent=0 // pred_fallthru
    _
  // Predicated region
  $region38: #{forward.21} parent=0 // pred_check
    _
  $region39: #{forward.21} parent=0 // pred_check_branch
    %186 = sbr.rel (0) target = $region41
  $region40: #{forward.21} parent=0 // pred_region
    _
  $region41: #{forward.21} parent=0 // pred_fallthru
    _
  // Predicated region
  $region42: #{forward.21} parent=0 // pred_check
    _
  $region43: #{forward.21} parent=0 // pred_check_branch
    %188 = sbr.rel (0) target = $region45
  $region44: #{forward.21} parent=0 // pred_region
    _
  $region45: #{forward.21} parent=0 // pred_fallthru
    _

// kernel: forward.22
$region0: #{forward.22}
  #allocation0 [shape = 'u32[]', space=smem, size = 0x4, offset = 0x4, fixed_abs, tag = 'smem constant byte address 0x4 - core index']
  #allocation1 [shape = 'u32[144,128]{1,0:T(1,128)}', space=vmem, size = 0x12000, scoped, tag = 'internal scratch']
  %s0 = inlined_call_operand.vmem [shape: bf16[32,144], index: 0, kind: input, shape index: {}]
  %s1 = inlined_call_operand.vmem [shape: bf16[144,128], index: 1, kind: input, shape index: {}]
  %s2 = inlined_call_operand.vmem [shape: f32[32,128], index: 2, kind: output, shape index: {}]
  %s3 = sld [smem:[#allocation0]]
  $region26: #{forward.22} parent=0
    _
  %s5 = ssub.s32 1, %s3
  %s6 = scalar_select 0, %s5, %s3
  // Predicated region
  $region2: #{forward.22} parent=0 // pred_check
    _
  $region3: #{forward.22} parent=0 // pred_check_branch
    %8 = sbr.rel (0) target = $region5
  $region4: #{forward.22} parent=0 // pred_region
    _
  $region5: #{forward.22} parent=0 // pred_fallthru
    _
  // Predicated region
  $region6: #{forward.22} parent=0 // pred_check
    _
  $region7: #{forward.22} parent=0 // pred_check_branch
    %10 = sbr.rel (0) target = $region9
  $region8: #{forward.22} parent=0 // pred_region
    _
  $region9: #{forward.22} parent=0 // pred_fallthru
    _
  %v12 = vld [vmem:[%s0] sm:$0xff]
  %v13 = vld [vmem:[%s0 + $0x8] sm:$0xff]
  %v14 = vld [vmem:[%s0 + $0x10] sm:$0xff]
  %v15 = vld [vmem:[%s0 + $0x18] sm:$0xff]
  %v16 = vld [vmem:[%s1] sm:$0xf]
  %v17 = vld [vmem:[%s1 + $0x4] sm:$0xf]
  %v18 = vld [vmem:[%s1 + $0x8] sm:$0xf]
  %v19 = vld [vmem:[%s1 + $0xc] sm:$0xf]
  %v20 = vld [vmem:[%s1 + $0x10] sm:$0xf]
  %v21 = vld [vmem:[%s1 + $0x14] sm:$0xf]
  %v22 = vld [vmem:[%s1 + $0x18] sm:$0xf]
  %v23 = vld [vmem:[%s1 + $0x1c] sm:$0xf]
  %v24 = vld [vmem:[%s1 + $0x20] sm:$0xf]
  %v25 = vld [vmem:[%s1 + $0x24] sm:$0xf]
  %v26 = vld [vmem:[%s1 + $0x28] sm:$0xf]
  %v27 = vld [vmem:[%s1 + $0x2c] sm:$0xf]
  %v28 = vld [vmem:[%s1 + $0x30] sm:$0xf]
  %v29 = vld [vmem:[%s1 + $0x34] sm:$0xf]
  %v30 = vld [vmem:[%s1 + $0x38] sm:$0xf]
  %v31 = vld [vmem:[%s1 + $0x3c] sm:$0xf]
  %v32 = vld [vmem:[%s1 + $0x40] sm:$0xf]
  %v33 = vld [vmem:[%s1 + $0x44] sm:$0xf]
  %v38 = vunpack.c.l.b16 %v12
  %v39 = vunpack.c.h.b16 %v12
  %v40 = vunpack.c.l.b16 %v13
  %v41 = vunpack.c.h.b16 %v13
  %v42 = vunpack.c.l.b16 %v14
  %v43 = vunpack.c.h.b16 %v14
  %v44 = vunpack.c.l.b16 %v15
  %v45 = vunpack.c.h.b16 %v15
  %v46 = vpack.c.b16 %v40, %v38
  %v47 = vpack.c.b16 %v41, %v39
  %v48 = vpack.c.b16 %v44, %v42
  %v49 = vpack.c.b16 %v45, %v43
  %v70 = vunpack.c.l.b16 %v16
  %v71 = vunpack.c.l.b16 %v17
  %v72 = vunpack.c.l.b16 %v18
  %v73 = vunpack.c.l.b16 %v19
  %v74 = vunpack.c.l.b16 %v20
  %v75 = vunpack.c.l.b16 %v21
  %v76 = vunpack.c.l.b16 %v22
  %v77 = vunpack.c.l.b16 %v23
  %v78 = vunpack.c.l.b16 %v24
  %v79 = vunpack.c.l.b16 %v25
  %v80 = vunpack.c.l.b16 %v26
  %v81 = vunpack.c.l.b16 %v27
  %v82 = vunpack.c.l.b16 %v28
  %v83 = vunpack.c.l.b16 %v29
  %v84 = vunpack.c.l.b16 %v30
  %v85 = vunpack.c.l.b16 %v31
  %v86 = vunpack.c.l.b16 %v32
  %v87 = vunpack.c.l.b16 %v33
  %v88 = vpack.c.b16 %v71, %v70
  %v89 = vpack.c.b16 %v73, %v72
  %v90 = vpack.c.b16 %v75, %v74
  %v91 = vpack.c.b16 %v77, %v76
  %v92 = vpack.c.b16 %v79, %v78
  %v93 = vpack.c.b16 %v81, %v80
  %v94 = vpack.c.b16 %v83, %v82
  %v95 = vpack.c.b16 %v85, %v84
  %v96 = vpack.c.b16 %v87, %v86
  %vm106 = vcmask 130048
  %v108 = vsel %vm106, %v47, 0
  %v111 = vsel %vm106, %v49, 0
  %113 = vmatprep.subr.bf16.mxu0 0
  %114 = vmatpush1.bf16.msra.mxu0 %v88
  %115 = vmatprep.subr.bf16.mxu0 0
  %116 = vmatpush1.bf16.msra.mxu0 %v89
  %117 = vmatprep.subr.bf16.mxu0 0
  %118 = vmatpush1.bf16.msra.mxu0 %v90
  %119 = vmatprep.subr.bf16.mxu0 0
  %120 = vmatpush1.bf16.msra.mxu0 %v91
  %121 = vmatprep.subr.bf16.mxu0 0
  %122 = vmatpush1.bf16.msra.mxu0 %v92
  %123 = vmatprep.subr.bf16.mxu0 0
  %124 = vmatpush1.bf16.msra.mxu0 %v93
  %125 = vmatprep.subr.bf16.mxu0 0
  %126 = vmatpush1.bf16.msra.mxu0 %v94
  %127 = vmatprep.subr.bf16.mxu0 0
  %128 = vmatpush1.bf16.msra.mxu0 %v95
  %129 = vmatprep.subr.bf16.mxu0 0
  %130 = vmatpush1.bf16.msra.mxu0 %v96
  %131 = vmatprep.subr.bf16.mxu0 0
  %132 = vmatpush1.bf16.msra.mxu0 0
  %133 = vmatprep.subr.bf16.mxu0 0
  %134 = vmatpush1.bf16.msra.mxu0 0
  %135 = vmatprep.subr.bf16.mxu0 0
  %136 = vmatpush1.bf16.msra.mxu0 0
  %137 = vmatprep.subr.bf16.mxu0 0
  %138 = vmatpush1.bf16.msra.mxu0 0
  %139 = vmatprep.subr.bf16.mxu0 0
  %140 = vmatpush1.bf16.msra.mxu0 0
  %141 = vmatprep.subr.bf16.mxu0 0
  %142 = vmatpush1.bf16.msra.mxu0 0
  %143 = vmatprep.subr.bf16.mxu0 0
  %144 = vmatpush1.bf16.msra.mxu0 0
  %145 = vmatprep.mubr.bf16.mxu0 %v108
  %146 = vmatmul.mubr.bf16.gmra.mrb[0].mxu0 %v46
  %v147 = vpop.f32.mrb[0].mxu0
  %v148 = vadd.f32 0.0, %v147
  %v149 = vpop.f32.mrb[0].mxu0
  %v150 = vpop.f32.mrb[0].mxu0
  %v151 = vadd.f32 0.0, %v150
  %v152 = vpop.f32.mrb[0].mxu0
  %153 = vmatprep.mubr.bf16.mxu0 %v111
  %154 = vmatmul.mubr.bf16.gmra.mrb[0].mxu0 %v48
  %v155 = vpop.f32.mrb[0].mxu0
  %v156 = vadd.f32 0.0, %v155
  %v157 = vpop.f32.mrb[0].mxu0
  %v158 = vpop.f32.mrb[0].mxu0
  %v159 = vadd.f32 0.0, %v158
  %v160 = vpop.f32.mrb[0].mxu0
  %161 = vdwg.mxu0
  %p162 = scmp.eq.s32.totalorder 0, 0
  // Predicated region
  $region10: #{forward.22} parent=0 // pred_check
    %p163 = pneg %p162
  $region11: #{forward.22} parent=0 // pred_check_branch
    %165 = sbr.rel (%p163) target = $region13
  $region12: #{forward.22} parent=0 // pred_region
    %166 = vst [vmem:[%s2] sm:$0xff] %v148
    %167 = vst [vmem:[%s2 + $0x8] sm:$0xff] %v151
    %168 = vst [vmem:[%s2 + $0x10] sm:$0xff] %v156
    %169 = vst [vmem:[%s2 + $0x18] sm:$0xff] %v159
  $region13: #{forward.22} parent=0 // pred_fallthru
    _
  %p170 = scmp.gt.s32.totalorder 0, 0
  // Predicated region
  $region14: #{forward.22} parent=0 // pred_check
    %p171 = pneg %p170
  $region15: #{forward.22} parent=0 // pred_check_branch
    %173 = sbr.rel (%p171) target = $region17
  $region16: #{forward.22} parent=0 // pred_region
    %v174 = vld [vmem:[%s2] sm:$0xff]
    %v175 = vld [vmem:[%s2 + $0x8] sm:$0xff]
    %v176 = vld [vmem:[%s2 + $0x10] sm:$0xff]
    %v177 = vld [vmem:[%s2 + $0x18] sm:$0xff]
    %v178 = vadd.f32 %v174, %v148
    %v179 = vadd.f32 %v175, %v151
    %v180 = vadd.f32 %v176, %v156
    %v181 = vadd.f32 %v177, %v159
    %182 = vst [vmem:[%s2] sm:$0xff] %v178
    %183 = vst [vmem:[%s2 + $0x8] sm:$0xff] %v179
    %184 = vst [vmem:[%s2 + $0x10] sm:$0xff] %v180
    %185 = vst [vmem:[%s2 + $0x18] sm:$0xff] %v181
  $region17: #{forward.22} parent=0 // pred_fallthru
    _
  // Predicated region
  $region18: #{forward.22} parent=0 // pred_check
    _
  $region19: #{forward.22} parent=0 // pred_check_branch
    %187 = sbr.rel (0) target = $region21
  $region20: #{forward.22} parent=0 // pred_region
    _
  $region21: #{forward.22} parent=0 // pred_fallthru
    _
  // Predicated region
  $region22: #{forward.22} parent=0 // pred_check
    _
  $region23: #{forward.22} parent=0 // pred_check_branch
    %189 = sbr.rel (0) target = $region25
  $region24: #{forward.22} parent=0 // pred_region
    _
  $region25: #{forward.22} parent=0 // pred_fallthru
    _

// kernel: forward.25
$region0: #{forward.25}
  #allocation0 [shape = 'u32[]', space=smem, size = 0x4, offset = 0x4, fixed_abs, tag = 'smem constant byte address 0x4 - core index']
  #allocation1 [shape = 'u32[144,128]{1,0:T(1,128)}', space=vmem, size = 0x12000, scoped, tag = 'internal scratch']
  %s0 = inlined_call_operand.vmem [shape: bf16[16,2,32], index: 0, kind: input, shape index: {}]
  %s1 = inlined_call_operand.vmem [shape: f32[1,1,32], index: 1, kind: input, shape index: {}]
  %s2 = inlined_call_operand.vmem [shape: f32[1,1,32], index: 2, kind: input, shape index: {}]
  %s3 = inlined_call_operand.vmem [shape: bf16[32,128], index: 3, kind: input, shape index: {}]
  %s4 = inlined_call_operand.vmem [shape: f32[1,128], index: 4, kind: input, shape index: {}]
  %s5 = inlined_call_operand.hbm [shape: f32[2,128], index: 5, kind: output, shape index: {0}]
  %s6 = inlined_call_operand.hbm [shape: f32[2,32], index: 6, kind: output, shape index: {1}]
  %7 = xla_tuple %s5, %s6
  %s8 = sld [smem:[#allocation0]]
  $region38: #{forward.25} parent=0
    _
  %s10 = ssub.s32 1, %s8
  %s11 = scalar_select 0, %s10, %s8
  $region1: #{forward.25} parent=0
    #allocation2 [shape = 'u8[1024]{0}', space=vmem, size = 0x400, scoped, tag = 'output window, operand 0, single buffered']
    #allocation3 [shape = 's32[1]{0}', space=sflag, size = 0x4, scoped, tag = 'scoped memory for forward.25']
    #allocation4 [shape = 'u8[1024]{0}', space=vmem, size = 0x400, scoped, tag = 'output window, operand 1, single buffered']
    #allocation5 [shape = 's32[1]{0}', space=sflag, size = 0x4, scoped, tag = 'scoped memory for forward.25']
    %12 = vsyncpa [#allocation3], 0
    %13 = vsyncpa [#allocation5], 0
    // Predicated region
    $region2: #{forward.25} parent=1 // pred_check
      _
    $region3: #{forward.25} parent=1 // pred_check_branch
      %15 = sbr.rel (0) target = $region5
    $region4: #{forward.25} parent=1 // pred_region
      _
    $region5: #{forward.25} parent=1 // pred_fallthru
      _
    // Predicated region
    $region6: #{forward.25} parent=1 // pred_check
      _
    $region7: #{forward.25} parent=1 // pred_check_branch
      %17 = sbr.rel (0) target = $region9
    $region8: #{forward.25} parent=1 // pred_region
      _
    $region9: #{forward.25} parent=1 // pred_fallthru
      _
    // Predicated region
    $region10: #{forward.25} parent=1 // pred_check
      _
    $region11: #{forward.25} parent=1 // pred_check_branch
      %19 = sbr.rel (0) target = $region13
    $region12: #{forward.25} parent=1 // pred_region
      _
    $region13: #{forward.25} parent=1 // pred_fallthru
      _
    // Predicated region
    $region14: #{forward.25} parent=1 // pred_check
      _
    $region15: #{forward.25} parent=1 // pred_check_branch
      %21 = sbr.rel (0) target = $region17
    $region16: #{forward.25} parent=1 // pred_region
      _
    $region17: #{forward.25} parent=1 // pred_fallthru
      _
    // Predicated region
    $region18: #{forward.25} parent=1 // pred_check
      _
    $region19: #{forward.25} parent=1 // pred_check_branch
      %23 = sbr.rel (0) target = $region21
    $region20: #{forward.25} parent=1 // pred_region
      _
    $region21: #{forward.25} parent=1 // pred_fallthru
      _
    %v25 = vld [vmem:[%s0] sm:$0x1]
    %v26 = vld [vmem:[%s0 + $0x1] sm:$0x1]
    %v27 = vld [vmem:[%s0 + $0x2] sm:$0x1]
    %v28 = vld [vmem:[%s0 + $0x3] sm:$0x1]
    %v29 = vld [vmem:[%s0 + $0x4] sm:$0x1]
    %v30 = vld [vmem:[%s0 + $0x5] sm:$0x1]
    %v31 = vld [vmem:[%s0 + $0x6] sm:$0x1]
    %v32 = vld [vmem:[%s0 + $0x7] sm:$0x1]
    %v33 = vld [vmem:[%s0 + $0x8] sm:$0x1]
    %v34 = vld [vmem:[%s0 + $0x9] sm:$0x1]
    %v35 = vld [vmem:[%s0 + $0xa] sm:$0x1]
    %v36 = vld [vmem:[%s0 + $0xb] sm:$0x1]
    %v37 = vld [vmem:[%s0 + $0xc] sm:$0x1]
    %v38 = vld [vmem:[%s0 + $0xd] sm:$0x1]
    %v39 = vld [vmem:[%s0 + $0xe] sm:$0x1]
    %v40 = vld [vmem:[%s0 + $0xf] sm:$0x1]
    %v41 = vunpack.c.l.bf16 %v25
    %v42 = vunpack.c.l.bf16 %v26
    %v43 = vunpack.c.l.bf16 %v27
    %v44 = vunpack.c.l.bf16 %v28
    %v45 = vunpack.c.l.bf16 %v29
    %v46 = vunpack.c.l.bf16 %v30
    %v47 = vunpack.c.l.bf16 %v31
    %v48 = vunpack.c.l.bf16 %v32
    %v49 = vunpack.c.l.bf16 %v33
    %v50 = vunpack.c.l.bf16 %v34
    %v51 = vunpack.c.l.bf16 %v35
    %v52 = vunpack.c.l.bf16 %v36
    %v53 = vunpack.c.l.bf16 %v37
    %v54 = vunpack.c.l.bf16 %v38
    %v55 = vunpack.c.l.bf16 %v39
    %v56 = vunpack.c.l.bf16 %v40
    %v57 = vld [vmem:[%s1] sm:$0x1]
    %v59 = vlaneseq
    %v60 = vshrl.u32 %v59, 7
    %v61 = vsub.s32 0, %v60
    %v62 = vrot.slane %v57, %v61
    %v64 = vmul.f32 %v41, %v62
    %v65 = vmul.f32 %v42, %v62
    %v66 = vmul.f32 %v43, %v62
    %v67 = vmul.f32 %v44, %v62
    %v68 = vmul.f32 %v45, %v62
    %v69 = vmul.f32 %v46, %v62
    %v70 = vmul.f32 %v47, %v62
    %v71 = vmul.f32 %v48, %v62
    %v72 = vmul.f32 %v49, %v62
    %v73 = vmul.f32 %v50, %v62
    %v74 = vmul.f32 %v51, %v62
    %v75 = vmul.f32 %v52, %v62
    %v76 = vmul.f32 %v53, %v62
    %v77 = vmul.f32 %v54, %v62
    %v78 = vmul.f32 %v55, %v62
    %v79 = vmul.f32 %v56, %v62
    %v80 = vld [vmem:[%s2] sm:$0x1]
    %v82 = vlaneseq
    %v83 = vshrl.u32 %v82, 7
    %v84 = vsub.s32 0, %v83
    %v85 = vrot.slane %v80, %v84
    %v87 = vadd.f32 %v64, %v85
    %v88 = vadd.f32 %v65, %v85
    %v89 = vadd.f32 %v66, %v85
    %v90 = vadd.f32 %v67, %v85
    %v91 = vadd.f32 %v68, %v85
    %v92 = vadd.f32 %v69, %v85
    %v93 = vadd.f32 %v70, %v85
    %v94 = vadd.f32 %v71, %v85
    %v95 = vadd.f32 %v72, %v85
    %v96 = vadd.f32 %v73, %v85
    %v97 = vadd.f32 %v74, %v85
    %v98 = vadd.f32 %v75, %v85
    %v99 = vadd.f32 %v76, %v85
    %v100 = vadd.f32 %v77, %v85
    %v101 = vadd.f32 %v78, %v85
    %v102 = vadd.f32 %v79, %v85
    %v103 = vmax.f32 %v87, 0.0
    %v104 = vmax.f32 %v88, 0.0
    %v105 = vmax.f32 %v89, 0.0
    %v106 = vmax.f32 %v90, 0.0
    %v107 = vmax.f32 %v91, 0.0
    %v108 = vmax.f32 %v92, 0.0
    %v109 = vmax.f32 %v93, 0.0
    %v110 = vmax.f32 %v94, 0.0
    %v111 = vmax.f32 %v95, 0.0
    %v112 = vmax.f32 %v96, 0.0
    %v113 = vmax.f32 %v97, 0.0
    %v114 = vmax.f32 %v98, 0.0
    %v115 = vmax.f32 %v99, 0.0
    %v116 = vmax.f32 %v100, 0.0
    %v117 = vmax.f32 %v101, 0.0
    %v118 = vmax.f32 %v102, 0.0
    %vm119 = vcmask 254976
    %v120 = vsel %vm119, %v103, 0.0
    %v121 = vsel %vm119, %v104, 0.0
    %v122 = vadd.f32 %v120, %v121
    %v123 = vsel %vm119, %v105, 0.0
    %v124 = vadd.f32 %v122, %v123
    %v125 = vsel %vm119, %v106, 0.0
    %v126 = vadd.f32 %v124, %v125
    %v127 = vsel %vm119, %v107, 0.0
    %v128 = vadd.f32 %v126, %v127
    %v129 = vsel %vm119, %v108, 0.0
    %v130 = vadd.f32 %v128, %v129
    %v131 = vsel %vm119, %v109, 0.0
    %v132 = vadd.f32 %v130, %v131
    %v133 = vsel %vm119, %v110, 0.0
    %v134 = vadd.f32 %v132, %v133
    %v135 = vsel %vm119, %v111, 0.0
    %v136 = vadd.f32 %v134, %v135
    %v137 = vsel %vm119, %v112, 0.0
    %v138 = vadd.f32 %v136, %v137
    %v139 = vsel %vm119, %v113, 0.0
    %v140 = vadd.f32 %v138, %v139
    %v141 = vsel %vm119, %v114, 0.0
    %v142 = vadd.f32 %v140, %v141
    %v143 = vsel %vm119, %v115, 0.0
    %v144 = vadd.f32 %v142, %v143
    %v145 = vsel %vm119, %v116, 0.0
    %v146 = vadd.f32 %v144, %v145
    %v147 = vsel %vm119, %v117, 0.0
    %v148 = vadd.f32 %v146, %v147
    %v149 = vsel %vm119, %v118, 0.0
    %v150 = vadd.f32 %v148, %v149
    %v151 = vmul.f32 %v150, 0.0625
    %152 = vst.msk [vmem:[#allocation4] sm:$0x3] %vm119, %v151
    %v153 = vpack.c.bf16 %v151, %v151
    %v154 = vld [vmem:[%s3] sm:$0xf]
    %v155 = vld [vmem:[%s3 + $0x4] sm:$0xf]
    %v156 = vld [vmem:[%s3 + $0x8] sm:$0xf]
    %v157 = vld [vmem:[%s3 + $0xc] sm:$0xf]
    %v158 = vld [vmem:[%s4] sm:$0x1]
    %v160 = vlaneseq
    %v161 = vshrl.u32 %v160, 7
    %v162 = vsub.s32 0, %v161
    %v163 = vrot.slane %v158, %v162
    %v169 = vunpack.c.l.b16 %v154
    %v170 = vunpack.c.l.b16 %v155
    %v171 = vunpack.c.l.b16 %v156
    %v172 = vunpack.c.l.b16 %v157
    %v173 = vpack.c.b16 %v170, %v169
    %v174 = vpack.c.b16 %v172, %v171
    %vm177 = vcmask 261120
    %v179 = vsel %vm177, %v153, 0
    %181 = vmatprep.subr.bf16.mxu0 0
    %182 = vmatpush1.bf16.msra.mxu0 %v173
    %183 = vmatprep.subr.bf16.mxu0 0
    %184 = vmatpush1.bf16.msra.mxu0 %v174
    %185 = vmatprep.subr.bf16.mxu0 0
    %186 = vmatpush1.bf16.msra.mxu0 0
    %187 = vmatprep.subr.bf16.mxu0 0
    %188 = vmatpush1.bf16.msra.mxu0 0
    %189 = vmatprep.subr.bf16.mxu0 0
    %190 = vmatpush1.bf16.msra.mxu0 0
    %191 = vmatprep.subr.bf16.mxu0 0
    %192 = vmatpush1.bf16.msra.mxu0 0
    %193 = vmatprep.subr.bf16.mxu0 0
    %194 = vmatpush1.bf16.msra.mxu0 0
    %195 = vmatprep.subr.bf16.mxu0 0
    %196 = vmatpush1.bf16.msra.mxu0 0
    %197 = vmatprep.subr.bf16.mxu0 0
    %198 = vmatpush1.bf16.msra.mxu0 0
    %199 = vmatprep.subr.bf16.mxu0 0
    %200 = vmatpush1.bf16.msra.mxu0 0
    %201 = vmatprep.subr.bf16.mxu0 0
    %202 = vmatpush1.bf16.msra.mxu0 0
    %203 = vmatprep.subr.bf16.mxu0 0
    %204 = vmatpush1.bf16.msra.mxu0 0
    %205 = vmatprep.subr.bf16.mxu0 0
    %206 = vmatpush1.bf16.msra.mxu0 0
    %207 = vmatprep.subr.bf16.mxu0 0
    %208 = vmatpush1.bf16.msra.mxu0 0
    %209 = vmatprep.subr.bf16.mxu0 0
    %210 = vmatpush1.bf16.msra.mxu0 0
    %211 = vmatprep.subr.bf16.mxu0 0
    %212 = vmatpush1.bf16.msra.mxu0 0
    %213 = vmatprep.mubr.bf16.mxu0 0
    %214 = vmatmul.mubr.bf16.gmra.mrb[0].mxu0 %v179
    %v215 = vpop.f32.mrb[0].mxu0
    %v216 = vadd.f32 %v163, %v215
    %v217 = vpop.f32.mrb[0].mxu0
    %v218 = vpop.f32.mrb[0].mxu0
    %v219 = vpop.f32.mrb[0].mxu0
    %220 = vdwg.mxu0
    %221 = vst [vmem:[#allocation2] sm:$0x3] %v216
    // Predicated region
    $region22: #{forward.25} parent=1 // pred_check
      _
    $region23: #{forward.25} parent=1 // pred_check_branch
      %223 = sbr.rel (0) target = $region25
    $region24: #{forward.25} parent=1 // pred_region
      %s225 = ssub.s32 32, 32
      %226 = vsyncadd [#allocation3], %s225
      %s228 = sshll.u32 [#allocation2], 4
      %s229 = int_to_ptr.vmem [resolvable:$true] %s228
      %231 = dma.vmem_to_hbm [thread:$0]  %s229, 32, %s5, [#allocation3]
    $region25: #{forward.25} parent=1 // pred_fallthru
      _
    // Predicated region
    $region26: #{forward.25} parent=1 // pred_check
      _
    $region27: #{forward.25} parent=1 // pred_check_branch
      %233 = sbr.rel (0) target = $region29
    $region28: #{forward.25} parent=1 // pred_region
      %s235 = ssub.s32 32, 32
      %236 = vsyncadd [#allocation5], %s235
      %s238 = sshll.u32 [#allocation4], 4
      %s239 = int_to_ptr.vmem [resolvable:$true] %s238
      %241 = dma.vmem_to_hbm [thread:$0]  %s239, 32, %s6, [#allocation5]
    $region29: #{forward.25} parent=1 // pred_fallthru
      _
    // Predicated region
    $region30: #{forward.25} parent=1 // pred_check
      _
    $region31: #{forward.25} parent=1 // pred_check_branch
      %243 = sbr.rel (0) target = $region33
    $region32: #{forward.25} parent=1 // pred_region
      %244 = dma.done [#allocation3], 32
    $region33: #{forward.25} parent=1 // pred_fallthru
      _
    // Predicated region
    $region34: #{forward.25} parent=1 // pred_check
      _
    $region35: #{forward.25} parent=1 // pred_check_branch
      %246 = sbr.rel (0) target = $region37
    $region36: #{forward.25} parent=1 // pred_region
      %247 = dma.done [#allocation5], 32
    $region37: #{forward.25} parent=1 // pred_fallthru
      _
    %248 = vsyncpa [#allocation3], 1
    %249 = vsyncpa [#allocation5], 1

// kernel: forward.23
$region0: #{forward.23}
  #allocation0 [shape = 'u32[]', space=smem, size = 0x4, offset = 0x4, fixed_abs, tag = 'smem constant byte address 0x4 - core index']
  #allocation1 [shape = 'u32[144,128]{1,0:T(1,128)}', space=vmem, size = 0x12000, scoped, tag = 'internal scratch']
  %s0 = inlined_call_operand.vmem [shape: bf16[32,24], index: 0, kind: input, shape index: {}]
  %s1 = inlined_call_operand.vmem [shape: bf16[24,128], index: 1, kind: input, shape index: {}]
  %s2 = inlined_call_operand.vmem [shape: f32[1,24], index: 2, kind: input, shape index: {}]
  %s3 = inlined_call_operand.vmem [shape: f32[1,24], index: 3, kind: input, shape index: {}]
  %s4 = inlined_call_operand.vmem [shape: f32[1,128], index: 4, kind: input, shape index: {}]
  %s5 = inlined_call_operand.vmem [shape: f32[1,128], index: 5, kind: input, shape index: {}]
  %s6 = inlined_call_operand.vmem [shape: f32[32,128], index: 6, kind: output, shape index: {}]
  %s7 = sld [smem:[#allocation0]]
  $region46: #{forward.23} parent=0
    _
  %s9 = ssub.s32 1, %s7
  %s10 = scalar_select 0, %s9, %s7
  // Predicated region
  $region2: #{forward.23} parent=0 // pred_check
    _
  $region3: #{forward.23} parent=0 // pred_check_branch
    %12 = sbr.rel (0) target = $region5
  $region4: #{forward.23} parent=0 // pred_region
    _
  $region5: #{forward.23} parent=0 // pred_fallthru
    _
  // Predicated region
  $region6: #{forward.23} parent=0 // pred_check
    _
  $region7: #{forward.23} parent=0 // pred_check_branch
    %14 = sbr.rel (0) target = $region9
  $region8: #{forward.23} parent=0 // pred_region
    _
  $region9: #{forward.23} parent=0 // pred_fallthru
    _
  // Predicated region
  $region10: #{forward.23} parent=0 // pred_check
    _
  $region11: #{forward.23} parent=0 // pred_check_branch
    %16 = sbr.rel (0) target = $region13
  $region12: #{forward.23} parent=0 // pred_region
    _
  $region13: #{forward.23} parent=0 // pred_fallthru
    _
  // Predicated region
  $region14: #{forward.23} parent=0 // pred_check
    _
  $region15: #{forward.23} parent=0 // pred_check_branch
    %18 = sbr.rel (0) target = $region17
  $region16: #{forward.23} parent=0 // pred_region
    _
  $region17: #{forward.23} parent=0 // pred_fallthru
    _
  // Predicated region
  $region18: #{forward.23} parent=0 // pred_check
    _
  $region19: #{forward.23} parent=0 // pred_check_branch
    %20 = sbr.rel (0) target = $region21
  $region20: #{forward.23} parent=0 // pred_region
    _
  $region21: #{forward.23} parent=0 // pred_fallthru
    _
  // Predicated region
  $region22: #{forward.23} parent=0 // pred_check
    _
  $region23: #{forward.23} parent=0 // pred_check_branch
    %22 = sbr.rel (0) target = $region25
  $region24: #{forward.23} parent=0 // pred_region
    _
  $region25: #{forward.23} parent=0 // pred_fallthru
    _
  %v24 = vld [vmem:[%s0] sm:$0xf]
  %v25 = vld [vmem:[%s0 + $0x4] sm:$0xf]
  %v26 = vld [vmem:[%s0 + $0x8] sm:$0xf]
  %v27 = vld [vmem:[%s0 + $0xc] sm:$0xf]
  %v28 = vunpack.c.l.bf16 %v24
  %v29 = vunpack.c.l.bf16 %v25
  %v30 = vunpack.c.l.bf16 %v26
  %v31 = vunpack.c.l.bf16 %v27
  %v32 = vld [vmem:[%s2] sm:$0x1]
  %v34 = vlaneseq
  %v35 = vshrl.u32 %v34, 7
  %v36 = vsub.s32 0, %v35
  %v37 = vrot.slane %v32, %v36
  %v39 = vmul.f32 %v28, %v37
  %v40 = vmul.f32 %v29, %v37
  %v41 = vmul.f32 %v30, %v37
  %v42 = vmul.f32 %v31, %v37
  %v43 = vld [vmem:[%s3] sm:$0x1]
  %v45 = vlaneseq
  %v46 = vshrl.u32 %v45, 7
  %v47 = vsub.s32 0, %v46
  %v48 = vrot.slane %v43, %v47
  %v50 = vadd.f32 %v39, %v48
  %v51 = vadd.f32 %v40, %v48
  %v52 = vadd.f32 %v41, %v48
  %v53 = vadd.f32 %v42, %v48
  %v54 = vmax.f32 %v50, 0.0
  %v55 = vmax.f32 %v51, 0.0
  %v56 = vmax.f32 %v52, 0.0
  %v57 = vmax.f32 %v53, 0.0
  %v58 = vpack.c.bf16 %v55, %v54
  %v59 = vpack.c.bf16 %v57, %v56
  %v60 = vld [vmem:[%s1] sm:$0xf]
  %v61 = vld [vmem:[%s1 + $0x4] sm:$0xf]
  %v62 = vld [vmem:[%s1 + $0x8] sm:$0xf]
  %v66 = vunpack.c.l.b16 %v60
  %v67 = vunpack.c.l.b16 %v61
  %v68 = vunpack.c.l.b16 %v62
  %v69 = vpack.c.b16 %v67, %v66
  %v70 = vpack.c.b16 %v68, %v68
  %vm72 = vcmask 195584
  %v74 = vsel %vm72, %v58, 0
  %v77 = vsel %vm72, %v59, 0
  %vm79 = vcmask 1043456
  %v81 = vsel %vm79, %v70, 0
  %83 = vmatprep.subr.bf16.mxu0 0
  %84 = vmatpush1.bf16.msra.mxu0 %v69
  %85 = vmatprep.subr.bf16.mxu0 0
  %86 = vmatpush1.bf16.msra.mxu0 %v81
  %87 = vmatprep.subr.bf16.mxu0 0
  %88 = vmatpush1.bf16.msra.mxu0 0
  %89 = vmatprep.subr.bf16.mxu0 0
  %90 = vmatpush1.bf16.msra.mxu0 0
  %91 = vmatprep.subr.bf16.mxu0 0
  %92 = vmatpush1.bf16.msra.mxu0 0
  %93 = vmatprep.subr.bf16.mxu0 0
  %94 = vmatpush1.bf16.msra.mxu0 0
  %95 = vmatprep.subr.bf16.mxu0 0
  %96 = vmatpush1.bf16.msra.mxu0 0
  %97 = vmatprep.subr.bf16.mxu0 0
  %98 = vmatpush1.bf16.msra.mxu0 0
  %99 = vmatprep.subr.bf16.mxu0 0
  %100 = vmatpush1.bf16.msra.mxu0 0
  %101 = vmatprep.subr.bf16.mxu0 0
  %102 = vmatpush1.bf16.msra.mxu0 0
  %103 = vmatprep.subr.bf16.mxu0 0
  %104 = vmatpush1.bf16.msra.mxu0 0
  %105 = vmatprep.subr.bf16.mxu0 0
  %106 = vmatpush1.bf16.msra.mxu0 0
  %107 = vmatprep.subr.bf16.mxu0 0
  %108 = vmatpush1.bf16.msra.mxu0 0
  %109 = vmatprep.subr.bf16.mxu0 0
  %110 = vmatpush1.bf16.msra.mxu0 0
  %111 = vmatprep.subr.bf16.mxu0 0
  %112 = vmatpush1.bf16.msra.mxu0 0
  %113 = vmatprep.subr.bf16.mxu0 0
  %114 = vmatpush1.bf16.msra.mxu0 0
  %115 = vmatprep.mubr.bf16.mxu0 0
  %116 = vmatmul.mubr.bf16.gmra.mrb[0].mxu0 %v74
  %v117 = vpop.f32.mrb[0].mxu0
  %v118 = vadd.f32 0.0, %v117
  %v119 = vpop.f32.mrb[0].mxu0
  %v120 = vpop.f32.mrb[0].mxu0
  %v121 = vadd.f32 0.0, %v120
  %v122 = vpop.f32.mrb[0].mxu0
  %123 = vmatprep.mubr.bf16.mxu0 0
  %124 = vmatmul.mubr.bf16.gmra.mrb[0].mxu0 %v77
  %v125 = vpop.f32.mrb[0].mxu0
  %v126 = vadd.f32 0.0, %v125
  %v127 = vpop.f32.mrb[0].mxu0
  %v128 = vpop.f32.mrb[0].mxu0
  %v129 = vadd.f32 0.0, %v128
  %v130 = vpop.f32.mrb[0].mxu0
  %131 = vdwg.mxu0
  %p132 = scmp.eq.s32.totalorder 0, 0
  // Predicated region
  $region26: #{forward.23} parent=0 // pred_check
    %p133 = pneg %p132
  $region27: #{forward.23} parent=0 // pred_check_branch
    %135 = sbr.rel (%p133) target = $region29
  $region28: #{forward.23} parent=0 // pred_region
    %136 = vst [vmem:[%s6] sm:$0xff] %v118
    %137 = vst [vmem:[%s6 + $0x8] sm:$0xff] %v121
    %138 = vst [vmem:[%s6 + $0x10] sm:$0xff] %v126
    %139 = vst [vmem:[%s6 + $0x18] sm:$0xff] %v129
  $region29: #{forward.23} parent=0 // pred_fallthru
    _
  %p140 = scmp.gt.s32.totalorder 0, 0
  // Predicated region
  $region30: #{forward.23} parent=0 // pred_check
    %p141 = pneg %p140
  $region31: #{forward.23} parent=0 // pred_check_branch
    %143 = sbr.rel (%p141) target = $region33
  $region32: #{forward.23} parent=0 // pred_region
    %v144 = vld [vmem:[%s6] sm:$0xff]
    %v145 = vld [vmem:[%s6 + $0x8] sm:$0xff]
    %v146 = vld [vmem:[%s6 + $0x10] sm:$0xff]
    %v147 = vld [vmem:[%s6 + $0x18] sm:$0xff]
    %v148 = vadd.f32 %v144, %v118
    %v149 = vadd.f32 %v145, %v121
    %v150 = vadd.f32 %v146, %v126
    %v151 = vadd.f32 %v147, %v129
    %152 = vst [vmem:[%s6] sm:$0xff] %v148
    %153 = vst [vmem:[%s6 + $0x8] sm:$0xff] %v149
    %154 = vst [vmem:[%s6 + $0x10] sm:$0xff] %v150
    %155 = vst [vmem:[%s6 + $0x18] sm:$0xff] %v151
  $region33: #{forward.23} parent=0 // pred_fallthru
    _
  // Predicated region
  $region34: #{forward.23} parent=0 // pred_check
    %p156 = pneg %p132
  $region35: #{forward.23} parent=0 // pred_check_branch
    %158 = sbr.rel (%p156) target = $region37
  $region36: #{forward.23} parent=0 // pred_region
    %v159 = vld [vmem:[%s6] sm:$0xff]
    %v160 = vld [vmem:[%s6 + $0x8] sm:$0xff]
    %v161 = vld [vmem:[%s6 + $0x10] sm:$0xff]
    %v162 = vld [vmem:[%s6 + $0x18] sm:$0xff]
    %v163 = vld [vmem:[%s4] sm:$0x1]
    %v165 = vlaneseq
    %v166 = vshrl.u32 %v165, 7
    %v167 = vsub.s32 0, %v166
    %v168 = vrot.slane %v163, %v167
    %v170 = vmul.f32 %v159, %v168
    %v171 = vmul.f32 %v160, %v168
    %v172 = vmul.f32 %v161, %v168
    %v173 = vmul.f32 %v162, %v168
    %v174 = vld [vmem:[%s5] sm:$0x1]
    %v176 = vlaneseq
    %v177 = vshrl.u32 %v176, 7
    %v178 = vsub.s32 0, %v177
    %v179 = vrot.slane %v174, %v178
    %v181 = vadd.f32 %v170, %v179
    %v182 = vadd.f32 %v171, %v179
    %v183 = vadd.f32 %v172, %v179
    %v184 = vadd.f32 %v173, %v179
    %v185 = vmax.f32 %v181, 0.0
    %v186 = vmax.f32 %v182, 0.0
    %v187 = vmax.f32 %v183, 0.0
    %v188 = vmax.f32 %v184, 0.0
    %189 = vst [vmem:[%s6] sm:$0xff] %v185
    %190 = vst [vmem:[%s6 + $0x8] sm:$0xff] %v186
    %191 = vst [vmem:[%s6 + $0x10] sm:$0xff] %v187
    %192 = vst [vmem:[%s6 + $0x18] sm:$0xff] %v188
  $region37: #{forward.23} parent=0 // pred_fallthru
    _
  // Predicated region
  $region38: #{forward.23} parent=0 // pred_check
    _
  $region39: #{forward.23} parent=0 // pred_check_branch
    %194 = sbr.rel (0) target = $region41
  $region40: #{forward.23} parent=0 // pred_region
    _
  $region41: #{forward.23} parent=0 // pred_fallthru
    _
  // Predicated region
  $region42: #{forward.23} parent=0 // pred_check
    _
  $region43: #{forward.23} parent=0 // pred_check_branch
    %196 = sbr.rel (0) target = $region45
  $region44: #{forward.23} parent=0 // pred_region
    _
  $region45: #{forward.23} parent=0 // pred_fallthru
    _

</llo_original>
